<compile_context>
chip_gen: v6e
topology: v6e:2x2x1
jax: 0.10.0
libtpu: 0.0.40
codegen_flags: <defaults>
</compile_context>

<pallas_src>
import functools
import math

import jax
import jax.numpy as jnp
import numpy as np
from jax.experimental import pallas as pl
from jax.experimental.pallas import tpu as pltpu

SUBLANES = 8        # f32 sublane tile height
BF16_SUBLANES = 16  # bf16 sublane tile height
LANES = 128         # lane width


def _round_up(x, m):
    return ((x + m - 1) // m) * m


def _espcn_kernel(x_ref, mask_ref, w1_ref, b1_ref, w2_ref, b2_ref,
                  w3_ref, b3_ref, o_ref, patch_ref, *, Wc, L, in_rows):
    """Fused ESPCN forward for one (lane-folded) batch of images."""
    c1_rows, c2_rows, c3_rows = in_rows          # input rows per conv layer
    mask = mask_ref[...]                         # (1, L): 1.0 on HxW interior

    # Hoist mask broadcasts once (JAX does not CSE broadcast_in_dim).
    mask_b = {}
    for rows in (w1_ref.shape[0], w2_ref.shape[0]):
        if rows not in mask_b:
            mask_b[rows] = jnp.broadcast_to(mask, (rows, L))

    def conv_layer(x, w_ref, b_ref, ksize, pad, rows):
        # im2col via XLU lane rotations: lane q of tap (kh, kw) needs
        # canvas[q + (kh-pad)*Wc + (kw-pad)]; rolling by (-shift) mod L puts
        # that value at lane q.  Stores are bf16, 16-row (tile) aligned.
        t = 0
        for kh in range(ksize):
            for kw in range(ksize):
                shift = (kh - pad) * Wc + (kw - pad)
                tap = x if shift == 0 else pltpu.roll(x, (-shift) % L, axis=1)
                patch_ref[pl.ds(t * rows, rows), :] = tap.astype(jnp.bfloat16)
                t += 1
        k = ksize * ksize * rows
        y = jnp.dot(w_ref[...], patch_ref[pl.ds(0, k), :],
                    preferred_element_type=jnp.float32)   # one MXU contraction
        return y + b_ref[...]                              # f32 acc + bias

    x0 = x_ref[0]                                          # (Cin_p, L) f32
    # mask after tanh == the zero 'same' padding the next layer needs
    y1 = jnp.tanh(conv_layer(x0, w1_ref, b1_ref, 5, 2, c1_rows))
    y1 = y1 * mask_b[w1_ref.shape[0]]
    y2 = jnp.tanh(conv_layer(y1, w2_ref, b2_ref, 3, 1, c2_rows))
    y2 = y2 * mask_b[w2_ref.shape[0]]
    y3 = conv_layer(y2, w3_ref, b3_ref, 3, 1, c3_rows)
    o_ref[0] = jnp.clip(y3, 0.0, 1.0).astype(o_ref.dtype)  # fused clamp


def espcn_forward(params, x_nchw, upscale_factor, out_channels, batch_tile=None):
    """ESPCN forward. Input NCHW, output NCHW (like the PyTorch module)."""
    N, Cin, H, W = x_nchw.shape
    r = upscale_factor

    LAYER_PADS = (2, 1, 1)                 # conv1 / conv2 / conv3 'same' pads
    PAD = max(LAYER_PADS)                  # canvas ring
    assert all(PAD >= p for p in LAYER_PADS), "canvas ring must cover all pads"
    Hc, Wc = H + 2 * PAD, W + 2 * PAD
    NC = Hc * Wc
    NCp = _round_up(NC, LANES)             # lane-dense canvas length per image

    w1, b1 = params["conv1"]
    w2, b2 = params["conv2"]
    w3, b3 = params["conv3"]
    C1, C2, C3 = w1.shape[0], w2.shape[0], w3.shape[0]

    # Conv-input channel counts padded to the bf16 (16,128) patch tile; the
    # final output channel count padded to the f32 8-row sublane tile.
    Cin_p = _round_up(Cin, BF16_SUBLANES)
    C1_p = _round_up(C1, BF16_SUBLANES)
    C2_p = _round_up(C2, BF16_SUBLANES)
    C3_p = _round_up(C3, SUBLANES)

    # Grid / batch folding: keep (up to) 2 "parallel" grid steps so both v7x
    # TensorCores are fed; fold the rest of the batch into the lane axis.
    if batch_tile is None:
        grid_n = 2 if N >= 2 else 1
        batch_tile = (N + grid_n - 1) // grid_n
    grid_n = (N + batch_tile - 1) // batch_tile
    N_pad = grid_n * batch_tile
    L = batch_tile * NCp                   # lanes per grid step

    # im2col weight matrices; column order (kh, kw, cin) matches the tap order
    # in the kernel.  bf16 operands for the MXU (biases stay f32).
    def wmat(w, cin_p, cout_p):
        co, ci, kh, kw = w.shape
        w = jnp.pad(w, ((0, cout_p - co), (0, cin_p - ci), (0, 0), (0, 0)))
        return (jnp.transpose(w, (0, 2, 3, 1))
                .reshape(cout_p, kh * kw * cin_p).astype(jnp.bfloat16))

    def bcol(b, cout_p):
        return (jnp.pad(b, (0, cout_p - b.shape[0]))
                .reshape(cout_p, 1).astype(jnp.float32))

    w1m, b1c = wmat(w1, Cin_p, C1_p), bcol(b1, C1_p)
    w2m, b2c = wmat(w2, C1_p, C2_p), bcol(b2, C2_p)
    w3m, b3c = wmat(w3, C2_p, C3_p), bcol(b3, C3_p)
    K1, K2, K3 = 25 * Cin_p, 9 * C1_p, 9 * C2_p
    Kmax = max(K1, K2, K3)

    # Pad the input ONCE: spatial ring for conv1, channels -> 16 rows, canvas
    # -> multiple of 128 lanes, then fold batch_tile images into the lane axis.
    xc = jnp.pad(x_nchw.astype(jnp.float32),
                 ((0, N_pad - N), (0, Cin_p - Cin), (PAD, PAD), (PAD, PAD)))
    xc = jnp.pad(xc.reshape(N_pad, Cin_p, NC), ((0, 0), (0, 0), (0, NCp - NC)))
    xc = xc.reshape(grid_n, batch_tile, Cin_p, NCp)
    xc = jnp.transpose(xc, (0, 2, 1, 3)).reshape(grid_n, Cin_p, L)

    # Interior mask: 1 on each HxW image, 0 on the ring / lane-padding tail.
    hh = jnp.arange(NCp) // Wc
    ww = jnp.arange(NCp) % Wc
    mask1 = (((hh >= PAD) & (hh < PAD + H) & (ww >= PAD) & (ww < PAD + W))
             .astype(jnp.float32))
    mask = jnp.tile(mask1, batch_tile).reshape(1, L)

    kernel = functools.partial(_espcn_kernel, Wc=Wc, L=L,
                               in_rows=(Cin_p, C1_p, C2_p))

    flops = 2 * grid_n * L * (C1_p * K1 + C2_p * K2 + C3_p * K3)
    transc = grid_n * L * (C1_p + C2_p)
    bytes_acc = (4 * (grid_n * Cin_p * L + grid_n * C3_p * L + L)
                 + 2 * (w1m.size + w2m.size + w3m.size)
                 + 4 * (C1_p + C2_p + C3_p))

    y = pl.pallas_call(
        kernel,
        out_shape=jax.ShapeDtypeStruct((grid_n, C3_p, L), jnp.float32),
        grid=(grid_n,),
        in_specs=[
            pl.BlockSpec((1, Cin_p, L), lambda n: (n, 0, 0)),
            pl.BlockSpec((1, L), lambda n: (0, 0)),
            pl.BlockSpec((C1_p, K1), lambda n: (0, 0)),
            pl.BlockSpec((C1_p, 1), lambda n: (0, 0)),
            pl.BlockSpec((C2_p, K2), lambda n: (0, 0)),
            pl.BlockSpec((C2_p, 1), lambda n: (0, 0)),
            pl.BlockSpec((C3_p, K3), lambda n: (0, 0)),
            pl.BlockSpec((C3_p, 1), lambda n: (0, 0)),
        ],
        out_specs=pl.BlockSpec((1, C3_p, L), lambda n: (n, 0, 0)),
        scratch_shapes=[pltpu.VMEM((Kmax, L), jnp.bfloat16)],   # bf16 im2col patch
        compiler_params=pltpu.CompilerParams(
            dimension_semantics=("parallel",),        # batch across cores (v7x)
            vmem_limit_bytes=48 * 1024 * 1024),        # fits v7x's 64 MiB VMEM
        cost_estimate=pl.CostEstimate(flops=flops, transcendentals=transc,
                                      bytes_accessed=bytes_acc),
    )(xc, mask, w1m, b1c, w2m, b2c, w3m, b3c)

    # Unfold batch from lanes, crop the valid interior / real channels, then
    # PixelShuffle(r).  Output is lane-dense and only a few KB.
    y = y.reshape(grid_n, C3_p, batch_tile, NCp)
    y = jnp.transpose(y, (0, 2, 1, 3)).reshape(N_pad, C3_p, NCp)
    y = y[:N, :C3, :NC].reshape(N, C3, Hc, Wc)[:, :, PAD:PAD + H, PAD:PAD + W]
    y = y.reshape(N, out_channels, r, r, H, W)
    y = jnp.transpose(y, (0, 1, 4, 2, 5, 3))
    return y.reshape(N, out_channels, H * r, W * r)


def init_espcn_params(key, in_channels, out_channels, channels, upscale_factor):
    """Deterministic re-implementation of the PyTorch __init__ initialization."""
    hidden = channels // 2
    out_c = int(out_channels * upscale_factor ** 2)

    def conv_init(k, out_ch, in_ch, kh, kw):
        if in_ch == 32:
            std = 0.001
        else:
            std = math.sqrt(2.0 / (out_ch * kh * kw))
        w = std * jax.random.normal(k, (out_ch, in_ch, kh, kw), jnp.float32)
        b = jnp.zeros((out_ch,), jnp.float32)
        return w, b

    k1, k2, k3 = jax.random.split(key, 3)
    return {
        "conv1": conv_init(k1, channels, in_channels, 5, 5),
        "conv2": conv_init(k2, hidden, channels, 3, 3),
        "conv3": conv_init(k3, out_c, hidden, 3, 3),
    }


def espcn_reference(params, x_nchw, upscale_factor, out_channels):
    """Pure-JAX f32 reference (lax.conv) for verification."""
    def conv(x, w, b, pad):
        y = jax.lax.conv_general_dilated(
            x, w, window_strides=(1, 1), padding=[(pad, pad), (pad, pad)],
            dimension_numbers=("NCHW", "OIHW", "NCHW"))
        return y + b[None, :, None, None]

    w1, b1 = params["conv1"]
    w2, b2 = params["conv2"]
    w3, b3 = params["conv3"]

    x = jnp.tanh(conv(x_nchw, w1, b1, 2))
    x = jnp.tanh(conv(x, w2, b2, 1))
    x = conv(x, w3, b3, 1)

    N, _, H, W = x.shape
    r = upscale_factor
    x = x.reshape(N, out_channels, r, r, H, W)
    x = jnp.transpose(x, (0, 1, 4, 2, 5, 3))
    x = x.reshape(N, out_channels, H * r, W * r)
    return jnp.clip(x, 0.0, 1.0)


if __name__ == "__main__":
    in_channels, out_channels, channels, upscale = 1, 1, 8, 2
    N, H, W = 2, 16, 16

    key = jax.random.PRNGKey(0)
    kp, kx = jax.random.split(key)
    params = init_espcn_params(kp, in_channels, out_channels, channels, upscale)
    x = jax.random.uniform(kx, (N, in_channels, H, W), jnp.float32)

    y_ref = jax.block_until_ready(
        espcn_reference(params, x, upscale, out_channels))

    # Default path: 2 "parallel" grid steps (one image each) -> both v7x TCs.
    fwd = jax.jit(functools.partial(espcn_forward,
                                    upscale_factor=upscale,
                                    out_channels=out_channels))
    y = jax.block_until_ready(fwd(params, x))
    assert y.shape == (N, out_channels, H * upscale, W * upscale), y.shape

    # bf16 MXU operands -> agreement at the ~1e-2 level vs the f32 reference.
    np.testing.assert_allclose(np.asarray(y), np.asarray(y_ref),
                               atol=5e-2, rtol=0.0)
    assert float(jnp.mean(jnp.abs(y - y_ref))) < 1e-2

    # Lane-folded batch path: both images folded into one wide grid step.
    fwd_folded = jax.jit(functools.partial(espcn_forward,
                                           upscale_factor=upscale,
                                           out_channels=out_channels,
                                           batch_tile=2))
    y2 = jax.block_until_ready(fwd_folded(params, x))
    np.testing.assert_allclose(np.asarray(y2), np.asarray(y_ref),
                               atol=5e-2, rtol=0.0)

    print("KERNEL_OK")
</pallas_src>

<mosaic_0001>
module attributes {stable_mosaic.version = 11 : i64} {
  func.func @_espcn_kernel(%arg0: i32, %arg1: memref<1x16x512xf32, #tpu.memory_space<vmem>>, %arg2: memref<1x512xf32, #tpu.memory_space<vmem>>, %arg3: memref<16x400xbf16, #tpu.memory_space<vmem>>, %arg4: memref<16x1xf32, #tpu.memory_space<vmem>>, %arg5: memref<16x144xbf16, #tpu.memory_space<vmem>>, %arg6: memref<16x1xf32, #tpu.memory_space<vmem>>, %arg7: memref<8x144xbf16, #tpu.memory_space<vmem>>, %arg8: memref<8x1xf32, #tpu.memory_space<vmem>>, %arg9: memref<1x8x512xf32, #tpu.memory_space<vmem>>, %arg10: memref<400x512xbf16, #tpu.memory_space<vmem>>) attributes {dimension_semantics = [#tpu.dimension_semantics<parallel>], iteration_bounds = array<i64: 2>, scalar_prefetch = 0 : i64, scratch_operands = 1 : i64, tpu.core_type = #tpu.core_type<tc>, window_params = [{transform_indices = @transform_0, window_bounds = array<i64: 1, 16, 512>}, {pipeline_mode = #tpu.pipeline_mode<synchronous>, transform_indices = @transform_1, window_bounds = array<i64: 1, 512>}, {pipeline_mode = #tpu.pipeline_mode<synchronous>, transform_indices = @transform_2, window_bounds = array<i64: 16, 400>}, {pipeline_mode = #tpu.pipeline_mode<synchronous>, transform_indices = @transform_3, window_bounds = array<i64: 16, 1>}, {pipeline_mode = #tpu.pipeline_mode<synchronous>, transform_indices = @transform_4, window_bounds = array<i64: 16, 144>}, {pipeline_mode = #tpu.pipeline_mode<synchronous>, transform_indices = @transform_5, window_bounds = array<i64: 16, 1>}, {pipeline_mode = #tpu.pipeline_mode<synchronous>, transform_indices = @transform_6, window_bounds = array<i64: 8, 144>}, {pipeline_mode = #tpu.pipeline_mode<synchronous>, transform_indices = @transform_7, window_bounds = array<i64: 8, 1>}, {transform_indices = @transform_8, window_bounds = array<i64: 1, 8, 512>}]} {
    %c0 = arith.constant 0 : index
    %c0_0 = arith.constant 0 : index
    %0 = vector.load %arg2[%c0, %c0_0] : memref<1x512xf32, #tpu.memory_space<vmem>>, vector<1x512xf32>
    %1 = vector.shape_cast %0 : vector<1x512xf32> to vector<1x512xf32>
    %2 = vector.broadcast %1 : vector<1x512xf32> to vector<16x512xf32>
    %c0_1 = arith.constant 0 : index
    %c0_2 = arith.constant 0 : index
    %c0_3 = arith.constant 0 : index
    %3 = vector.load %arg1[%c0_1, %c0_2, %c0_3] : memref<1x16x512xf32, #tpu.memory_space<vmem>>, vector<1x16x512xf32>
    %4 = vector.shape_cast %3 : vector<1x16x512xf32> to vector<16x512xf32>
    %c42_i32 = arith.constant 42 : i32
    %5 = tpu.dynamic_rotate %4 by %c42_i32 dim 1 : vector<16x512xf32>, i32 -> vector<16x512xf32>
    %6 = arith.truncf %5 : vector<16x512xf32> to vector<16x512xbf16>
    %c0_4 = arith.constant 0 : index
    %c0_5 = arith.constant 0 : index
    %7 = vector.load %arg10[%c0_4, %c0_5] : memref<400x512xbf16, #tpu.memory_space<vmem>>, vector<16x512xbf16>
    tpu.vector_store %arg10[%c0_4, %c0_5], %6 {strides = array<i32>} : memref<400x512xbf16, #tpu.memory_space<vmem>>, vector<16x512xbf16>,
    %c41_i32 = arith.constant 41 : i32
    %8 = tpu.dynamic_rotate %4 by %c41_i32 dim 1 : vector<16x512xf32>, i32 -> vector<16x512xf32>
    %9 = arith.truncf %8 : vector<16x512xf32> to vector<16x512xbf16>
    %c16 = arith.constant 16 : index
    %c0_6 = arith.constant 0 : index
    %10 = vector.load %arg10[%c16, %c0_6] : memref<400x512xbf16, #tpu.memory_space<vmem>>, vector<16x512xbf16>
    tpu.vector_store %arg10[%c16, %c0_6], %9 {strides = array<i32>} : memref<400x512xbf16, #tpu.memory_space<vmem>>, vector<16x512xbf16>,
    %c40_i32 = arith.constant 40 : i32
    %11 = tpu.dynamic_rotate %4 by %c40_i32 dim 1 : vector<16x512xf32>, i32 -> vector<16x512xf32>
    %12 = arith.truncf %11 : vector<16x512xf32> to vector<16x512xbf16>
    %c32 = arith.constant 32 : index
    %c0_7 = arith.constant 0 : index
    %13 = vector.load %arg10[%c32, %c0_7] : memref<400x512xbf16, #tpu.memory_space<vmem>>, vector<16x512xbf16>
    tpu.vector_store %arg10[%c32, %c0_7], %12 {strides = array<i32>} : memref<400x512xbf16, #tpu.memory_space<vmem>>, vector<16x512xbf16>,
    %c39_i32 = arith.constant 39 : i32
    %14 = tpu.dynamic_rotate %4 by %c39_i32 dim 1 : vector<16x512xf32>, i32 -> vector<16x512xf32>
    %15 = arith.truncf %14 : vector<16x512xf32> to vector<16x512xbf16>
    %c48 = arith.constant 48 : index
    %c0_8 = arith.constant 0 : index
    %16 = vector.load %arg10[%c48, %c0_8] : memref<400x512xbf16, #tpu.memory_space<vmem>>, vector<16x512xbf16>
    tpu.vector_store %arg10[%c48, %c0_8], %15 {strides = array<i32>} : memref<400x512xbf16, #tpu.memory_space<vmem>>, vector<16x512xbf16>,
    %c38_i32 = arith.constant 38 : i32
    %17 = tpu.dynamic_rotate %4 by %c38_i32 dim 1 : vector<16x512xf32>, i32 -> vector<16x512xf32>
    %18 = arith.truncf %17 : vector<16x512xf32> to vector<16x512xbf16>
    %c64 = arith.constant 64 : index
    %c0_9 = arith.constant 0 : index
    %19 = vector.load %arg10[%c64, %c0_9] : memref<400x512xbf16, #tpu.memory_space<vmem>>, vector<16x512xbf16>
    tpu.vector_store %arg10[%c64, %c0_9], %18 {strides = array<i32>} : memref<400x512xbf16, #tpu.memory_space<vmem>>, vector<16x512xbf16>,
    %c22_i32 = arith.constant 22 : i32
    %20 = tpu.dynamic_rotate %4 by %c22_i32 dim 1 : vector<16x512xf32>, i32 -> vector<16x512xf32>
    %21 = arith.truncf %20 : vector<16x512xf32> to vector<16x512xbf16>
    %c80 = arith.constant 80 : index
    %c0_10 = arith.constant 0 : index
    %22 = vector.load %arg10[%c80, %c0_10] : memref<400x512xbf16, #tpu.memory_space<vmem>>, vector<16x512xbf16>
    tpu.vector_store %arg10[%c80, %c0_10], %21 {strides = array<i32>} : memref<400x512xbf16, #tpu.memory_space<vmem>>, vector<16x512xbf16>,
    %c21_i32 = arith.constant 21 : i32
    %23 = tpu.dynamic_rotate %4 by %c21_i32 dim 1 : vector<16x512xf32>, i32 -> vector<16x512xf32>
    %24 = arith.truncf %23 : vector<16x512xf32> to vector<16x512xbf16>
    %c96 = arith.constant 96 : index
    %c0_11 = arith.constant 0 : index
    %25 = vector.load %arg10[%c96, %c0_11] : memref<400x512xbf16, #tpu.memory_space<vmem>>, vector<16x512xbf16>
    tpu.vector_store %arg10[%c96, %c0_11], %24 {strides = array<i32>} : memref<400x512xbf16, #tpu.memory_space<vmem>>, vector<16x512xbf16>,
    %c20_i32 = arith.constant 20 : i32
    %26 = tpu.dynamic_rotate %4 by %c20_i32 dim 1 : vector<16x512xf32>, i32 -> vector<16x512xf32>
    %27 = arith.truncf %26 : vector<16x512xf32> to vector<16x512xbf16>
    %c112 = arith.constant 112 : index
    %c0_12 = arith.constant 0 : index
    %28 = vector.load %arg10[%c112, %c0_12] : memref<400x512xbf16, #tpu.memory_space<vmem>>, vector<16x512xbf16>
    tpu.vector_store %arg10[%c112, %c0_12], %27 {strides = array<i32>} : memref<400x512xbf16, #tpu.memory_space<vmem>>, vector<16x512xbf16>,
    %c19_i32 = arith.constant 19 : i32
    %29 = tpu.dynamic_rotate %4 by %c19_i32 dim 1 : vector<16x512xf32>, i32 -> vector<16x512xf32>
    %30 = arith.truncf %29 : vector<16x512xf32> to vector<16x512xbf16>
    %c128 = arith.constant 128 : index
    %c0_13 = arith.constant 0 : index
    %31 = vector.load %arg10[%c128, %c0_13] : memref<400x512xbf16, #tpu.memory_space<vmem>>, vector<16x512xbf16>
    tpu.vector_store %arg10[%c128, %c0_13], %30 {strides = array<i32>} : memref<400x512xbf16, #tpu.memory_space<vmem>>, vector<16x512xbf16>,
    %c18_i32 = arith.constant 18 : i32
    %32 = tpu.dynamic_rotate %4 by %c18_i32 dim 1 : vector<16x512xf32>, i32 -> vector<16x512xf32>
    %33 = arith.truncf %32 : vector<16x512xf32> to vector<16x512xbf16>
    %c144 = arith.constant 144 : index
    %c0_14 = arith.constant 0 : index
    %34 = vector.load %arg10[%c144, %c0_14] : memref<400x512xbf16, #tpu.memory_space<vmem>>, vector<16x512xbf16>
    tpu.vector_store %arg10[%c144, %c0_14], %33 {strides = array<i32>} : memref<400x512xbf16, #tpu.memory_space<vmem>>, vector<16x512xbf16>,
    %c2_i32 = arith.constant 2 : i32
    %35 = tpu.dynamic_rotate %4 by %c2_i32 dim 1 : vector<16x512xf32>, i32 -> vector<16x512xf32>
    %36 = arith.truncf %35 : vector<16x512xf32> to vector<16x512xbf16>
    %c160 = arith.constant 160 : index
    %c0_15 = arith.constant 0 : index
    %37 = vector.load %arg10[%c160, %c0_15] : memref<400x512xbf16, #tpu.memory_space<vmem>>, vector<16x512xbf16>
    tpu.vector_store %arg10[%c160, %c0_15], %36 {strides = array<i32>} : memref<400x512xbf16, #tpu.memory_space<vmem>>, vector<16x512xbf16>,
    %c1_i32 = arith.constant 1 : i32
    %38 = tpu.dynamic_rotate %4 by %c1_i32 dim 1 : vector<16x512xf32>, i32 -> vector<16x512xf32>
    %39 = arith.truncf %38 : vector<16x512xf32> to vector<16x512xbf16>
    %c176 = arith.constant 176 : index
    %c0_16 = arith.constant 0 : index
    %40 = vector.load %arg10[%c176, %c0_16] : memref<400x512xbf16, #tpu.memory_space<vmem>>, vector<16x512xbf16>
    tpu.vector_store %arg10[%c176, %c0_16], %39 {strides = array<i32>} : memref<400x512xbf16, #tpu.memory_space<vmem>>, vector<16x512xbf16>,
    %41 = arith.truncf %4 : vector<16x512xf32> to vector<16x512xbf16>
    %c192 = arith.constant 192 : index
    %c0_17 = arith.constant 0 : index
    %42 = vector.load %arg10[%c192, %c0_17] : memref<400x512xbf16, #tpu.memory_space<vmem>>, vector<16x512xbf16>
    tpu.vector_store %arg10[%c192, %c0_17], %41 {strides = array<i32>} : memref<400x512xbf16, #tpu.memory_space<vmem>>, vector<16x512xbf16>,
    %c511_i32 = arith.constant 511 : i32
    %43 = tpu.dynamic_rotate %4 by %c511_i32 dim 1 : vector<16x512xf32>, i32 -> vector<16x512xf32>
    %44 = arith.truncf %43 : vector<16x512xf32> to vector<16x512xbf16>
    %c208 = arith.constant 208 : index
    %c0_18 = arith.constant 0 : index
    %45 = vector.load %arg10[%c208, %c0_18] : memref<400x512xbf16, #tpu.memory_space<vmem>>, vector<16x512xbf16>
    tpu.vector_store %arg10[%c208, %c0_18], %44 {strides = array<i32>} : memref<400x512xbf16, #tpu.memory_space<vmem>>, vector<16x512xbf16>,
    %c510_i32 = arith.constant 510 : i32
    %46 = tpu.dynamic_rotate %4 by %c510_i32 dim 1 : vector<16x512xf32>, i32 -> vector<16x512xf32>
    %47 = arith.truncf %46 : vector<16x512xf32> to vector<16x512xbf16>
    %c224 = arith.constant 224 : index
    %c0_19 = arith.constant 0 : index
    %48 = vector.load %arg10[%c224, %c0_19] : memref<400x512xbf16, #tpu.memory_space<vmem>>, vector<16x512xbf16>
    tpu.vector_store %arg10[%c224, %c0_19], %47 {strides = array<i32>} : memref<400x512xbf16, #tpu.memory_space<vmem>>, vector<16x512xbf16>,
    %c494_i32 = arith.constant 494 : i32
    %49 = tpu.dynamic_rotate %4 by %c494_i32 dim 1 : vector<16x512xf32>, i32 -> vector<16x512xf32>
    %50 = arith.truncf %49 : vector<16x512xf32> to vector<16x512xbf16>
    %c240 = arith.constant 240 : index
    %c0_20 = arith.constant 0 : index
    %51 = vector.load %arg10[%c240, %c0_20] : memref<400x512xbf16, #tpu.memory_space<vmem>>, vector<16x512xbf16>
    tpu.vector_store %arg10[%c240, %c0_20], %50 {strides = array<i32>} : memref<400x512xbf16, #tpu.memory_space<vmem>>, vector<16x512xbf16>,
    %c493_i32 = arith.constant 493 : i32
    %52 = tpu.dynamic_rotate %4 by %c493_i32 dim 1 : vector<16x512xf32>, i32 -> vector<16x512xf32>
    %53 = arith.truncf %52 : vector<16x512xf32> to vector<16x512xbf16>
    %c256 = arith.constant 256 : index
    %c0_21 = arith.constant 0 : index
    %54 = vector.load %arg10[%c256, %c0_21] : memref<400x512xbf16, #tpu.memory_space<vmem>>, vector<16x512xbf16>
    tpu.vector_store %arg10[%c256, %c0_21], %53 {strides = array<i32>} : memref<400x512xbf16, #tpu.memory_space<vmem>>, vector<16x512xbf16>,
    %c492_i32 = arith.constant 492 : i32
    %55 = tpu.dynamic_rotate %4 by %c492_i32 dim 1 : vector<16x512xf32>, i32 -> vector<16x512xf32>
    %56 = arith.truncf %55 : vector<16x512xf32> to vector<16x512xbf16>
    %c272 = arith.constant 272 : index
    %c0_22 = arith.constant 0 : index
    %57 = vector.load %arg10[%c272, %c0_22] : memref<400x512xbf16, #tpu.memory_space<vmem>>, vector<16x512xbf16>
    tpu.vector_store %arg10[%c272, %c0_22], %56 {strides = array<i32>} : memref<400x512xbf16, #tpu.memory_space<vmem>>, vector<16x512xbf16>,
    %c491_i32 = arith.constant 491 : i32
    %58 = tpu.dynamic_rotate %4 by %c491_i32 dim 1 : vector<16x512xf32>, i32 -> vector<16x512xf32>
    %59 = arith.truncf %58 : vector<16x512xf32> to vector<16x512xbf16>
    %c288 = arith.constant 288 : index
    %c0_23 = arith.constant 0 : index
    %60 = vector.load %arg10[%c288, %c0_23] : memref<400x512xbf16, #tpu.memory_space<vmem>>, vector<16x512xbf16>
    tpu.vector_store %arg10[%c288, %c0_23], %59 {strides = array<i32>} : memref<400x512xbf16, #tpu.memory_space<vmem>>, vector<16x512xbf16>,
    %c490_i32 = arith.constant 490 : i32
    %61 = tpu.dynamic_rotate %4 by %c490_i32 dim 1 : vector<16x512xf32>, i32 -> vector<16x512xf32>
    %62 = arith.truncf %61 : vector<16x512xf32> to vector<16x512xbf16>
    %c304 = arith.constant 304 : index
    %c0_24 = arith.constant 0 : index
    %63 = vector.load %arg10[%c304, %c0_24] : memref<400x512xbf16, #tpu.memory_space<vmem>>, vector<16x512xbf16>
    tpu.vector_store %arg10[%c304, %c0_24], %62 {strides = array<i32>} : memref<400x512xbf16, #tpu.memory_space<vmem>>, vector<16x512xbf16>,
    %c474_i32 = arith.constant 474 : i32
    %64 = tpu.dynamic_rotate %4 by %c474_i32 dim 1 : vector<16x512xf32>, i32 -> vector<16x512xf32>
    %65 = arith.truncf %64 : vector<16x512xf32> to vector<16x512xbf16>
    %c320 = arith.constant 320 : index
    %c0_25 = arith.constant 0 : index
    %66 = vector.load %arg10[%c320, %c0_25] : memref<400x512xbf16, #tpu.memory_space<vmem>>, vector<16x512xbf16>
    tpu.vector_store %arg10[%c320, %c0_25], %65 {strides = array<i32>} : memref<400x512xbf16, #tpu.memory_space<vmem>>, vector<16x512xbf16>,
    %c473_i32 = arith.constant 473 : i32
    %67 = tpu.dynamic_rotate %4 by %c473_i32 dim 1 : vector<16x512xf32>, i32 -> vector<16x512xf32>
    %68 = arith.truncf %67 : vector<16x512xf32> to vector<16x512xbf16>
    %c336 = arith.constant 336 : index
    %c0_26 = arith.constant 0 : index
    %69 = vector.load %arg10[%c336, %c0_26] : memref<400x512xbf16, #tpu.memory_space<vmem>>, vector<16x512xbf16>
    tpu.vector_store %arg10[%c336, %c0_26], %68 {strides = array<i32>} : memref<400x512xbf16, #tpu.memory_space<vmem>>, vector<16x512xbf16>,
    %c472_i32 = arith.constant 472 : i32
    %70 = tpu.dynamic_rotate %4 by %c472_i32 dim 1 : vector<16x512xf32>, i32 -> vector<16x512xf32>
    %71 = arith.truncf %70 : vector<16x512xf32> to vector<16x512xbf16>
    %c352 = arith.constant 352 : index
    %c0_27 = arith.constant 0 : index
    %72 = vector.load %arg10[%c352, %c0_27] : memref<400x512xbf16, #tpu.memory_space<vmem>>, vector<16x512xbf16>
    tpu.vector_store %arg10[%c352, %c0_27], %71 {strides = array<i32>} : memref<400x512xbf16, #tpu.memory_space<vmem>>, vector<16x512xbf16>,
    %c471_i32 = arith.constant 471 : i32
    %73 = tpu.dynamic_rotate %4 by %c471_i32 dim 1 : vector<16x512xf32>, i32 -> vector<16x512xf32>
    %74 = arith.truncf %73 : vector<16x512xf32> to vector<16x512xbf16>
    %c368 = arith.constant 368 : index
    %c0_28 = arith.constant 0 : index
    %75 = vector.load %arg10[%c368, %c0_28] : memref<400x512xbf16, #tpu.memory_space<vmem>>, vector<16x512xbf16>
    tpu.vector_store %arg10[%c368, %c0_28], %74 {strides = array<i32>} : memref<400x512xbf16, #tpu.memory_space<vmem>>, vector<16x512xbf16>,
    %c470_i32 = arith.constant 470 : i32
    %76 = tpu.dynamic_rotate %4 by %c470_i32 dim 1 : vector<16x512xf32>, i32 -> vector<16x512xf32>
    %77 = arith.truncf %76 : vector<16x512xf32> to vector<16x512xbf16>
    %c384 = arith.constant 384 : index
    %c0_29 = arith.constant 0 : index
    %78 = vector.load %arg10[%c384, %c0_29] : memref<400x512xbf16, #tpu.memory_space<vmem>>, vector<16x512xbf16>
    tpu.vector_store %arg10[%c384, %c0_29], %77 {strides = array<i32>} : memref<400x512xbf16, #tpu.memory_space<vmem>>, vector<16x512xbf16>,
    %c0_30 = arith.constant 0 : index
    %c0_31 = arith.constant 0 : index
    %79 = vector.load %arg3[%c0_30, %c0_31] : memref<16x400xbf16, #tpu.memory_space<vmem>>, vector<16x400xbf16>
    %c0_32 = arith.constant 0 : index
    %c0_33 = arith.constant 0 : index
    %80 = vector.load %arg10[%c0_32, %c0_33] : memref<400x512xbf16, #tpu.memory_space<vmem>>, vector<400x512xbf16>
    %cst = arith.constant dense<0.000000e+00> : vector<16x512xf32>
    %81 = tpu.matmul %79, %80, %cst {dimension_numbers = #tpu.dot_dimension_numbers<[1], [0], [0], [1], [0, 0, 1, 1], [], []>} : vector<16x400xbf16>, vector<400x512xbf16>, vector<16x512xf32> -> vector<16x512xf32>
    %c0_34 = arith.constant 0 : index
    %c0_35 = arith.constant 0 : index
    %82 = vector.load %arg4[%c0_34, %c0_35] : memref<16x1xf32, #tpu.memory_space<vmem>>, vector<16x1xf32>
    %83 = vector.broadcast %82 : vector<16x1xf32> to vector<16x512xf32>
    %84 = arith.addf %81, %83 : vector<16x512xf32>
    %85 = math.tanh %84 : vector<16x512xf32>
    %86 = arith.mulf %85, %2 : vector<16x512xf32>
    %c21_i32_36 = arith.constant 21 : i32
    %87 = tpu.dynamic_rotate %86 by %c21_i32_36 dim 1 : vector<16x512xf32>, i32 -> vector<16x512xf32>
    %88 = arith.truncf %87 : vector<16x512xf32> to vector<16x512xbf16>
    %c0_37 = arith.constant 0 : index
    %c0_38 = arith.constant 0 : index
    %89 = vector.load %arg10[%c0_37, %c0_38] : memref<400x512xbf16, #tpu.memory_space<vmem>>, vector<16x512xbf16>
    tpu.vector_store %arg10[%c0_37, %c0_38], %88 {strides = array<i32>} : memref<400x512xbf16, #tpu.memory_space<vmem>>, vector<16x512xbf16>,
    %c20_i32_39 = arith.constant 20 : i32
    %90 = tpu.dynamic_rotate %86 by %c20_i32_39 dim 1 : vector<16x512xf32>, i32 -> vector<16x512xf32>
    %91 = arith.truncf %90 : vector<16x512xf32> to vector<16x512xbf16>
    %c16_40 = arith.constant 16 : index
    %c0_41 = arith.constant 0 : index
    %92 = vector.load %arg10[%c16_40, %c0_41] : memref<400x512xbf16, #tpu.memory_space<vmem>>, vector<16x512xbf16>
    tpu.vector_store %arg10[%c16_40, %c0_41], %91 {strides = array<i32>} : memref<400x512xbf16, #tpu.memory_space<vmem>>, vector<16x512xbf16>,
    %c19_i32_42 = arith.constant 19 : i32
    %93 = tpu.dynamic_rotate %86 by %c19_i32_42 dim 1 : vector<16x512xf32>, i32 -> vector<16x512xf32>
    %94 = arith.truncf %93 : vector<16x512xf32> to vector<16x512xbf16>
    %c32_43 = arith.constant 32 : index
    %c0_44 = arith.constant 0 : index
    %95 = vector.load %arg10[%c32_43, %c0_44] : memref<400x512xbf16, #tpu.memory_space<vmem>>, vector<16x512xbf16>
    tpu.vector_store %arg10[%c32_43, %c0_44], %94 {strides = array<i32>} : memref<400x512xbf16, #tpu.memory_space<vmem>>, vector<16x512xbf16>,
    %c1_i32_45 = arith.constant 1 : i32
    %96 = tpu.dynamic_rotate %86 by %c1_i32_45 dim 1 : vector<16x512xf32>, i32 -> vector<16x512xf32>
    %97 = arith.truncf %96 : vector<16x512xf32> to vector<16x512xbf16>
    %c48_46 = arith.constant 48 : index
    %c0_47 = arith.constant 0 : index
    %98 = vector.load %arg10[%c48_46, %c0_47] : memref<400x512xbf16, #tpu.memory_space<vmem>>, vector<16x512xbf16>
    tpu.vector_store %arg10[%c48_46, %c0_47], %97 {strides = array<i32>} : memref<400x512xbf16, #tpu.memory_space<vmem>>, vector<16x512xbf16>,
    %99 = arith.truncf %86 : vector<16x512xf32> to vector<16x512xbf16>
    %c64_48 = arith.constant 64 : index
    %c0_49 = arith.constant 0 : index
    %100 = vector.load %arg10[%c64_48, %c0_49] : memref<400x512xbf16, #tpu.memory_space<vmem>>, vector<16x512xbf16>
    tpu.vector_store %arg10[%c64_48, %c0_49], %99 {strides = array<i32>} : memref<400x512xbf16, #tpu.memory_space<vmem>>, vector<16x512xbf16>,
    %c511_i32_50 = arith.constant 511 : i32
    %101 = tpu.dynamic_rotate %86 by %c511_i32_50 dim 1 : vector<16x512xf32>, i32 -> vector<16x512xf32>
    %102 = arith.truncf %101 : vector<16x512xf32> to vector<16x512xbf16>
    %c80_51 = arith.constant 80 : index
    %c0_52 = arith.constant 0 : index
    %103 = vector.load %arg10[%c80_51, %c0_52] : memref<400x512xbf16, #tpu.memory_space<vmem>>, vector<16x512xbf16>
    tpu.vector_store %arg10[%c80_51, %c0_52], %102 {strides = array<i32>} : memref<400x512xbf16, #tpu.memory_space<vmem>>, vector<16x512xbf16>,
    %c493_i32_53 = arith.constant 493 : i32
    %104 = tpu.dynamic_rotate %86 by %c493_i32_53 dim 1 : vector<16x512xf32>, i32 -> vector<16x512xf32>
    %105 = arith.truncf %104 : vector<16x512xf32> to vector<16x512xbf16>
    %c96_54 = arith.constant 96 : index
    %c0_55 = arith.constant 0 : index
    %106 = vector.load %arg10[%c96_54, %c0_55] : memref<400x512xbf16, #tpu.memory_space<vmem>>, vector<16x512xbf16>
    tpu.vector_store %arg10[%c96_54, %c0_55], %105 {strides = array<i32>} : memref<400x512xbf16, #tpu.memory_space<vmem>>, vector<16x512xbf16>,
    %c492_i32_56 = arith.constant 492 : i32
    %107 = tpu.dynamic_rotate %86 by %c492_i32_56 dim 1 : vector<16x512xf32>, i32 -> vector<16x512xf32>
    %108 = arith.truncf %107 : vector<16x512xf32> to vector<16x512xbf16>
    %c112_57 = arith.constant 112 : index
    %c0_58 = arith.constant 0 : index
    %109 = vector.load %arg10[%c112_57, %c0_58] : memref<400x512xbf16, #tpu.memory_space<vmem>>, vector<16x512xbf16>
    tpu.vector_store %arg10[%c112_57, %c0_58], %108 {strides = array<i32>} : memref<400x512xbf16, #tpu.memory_space<vmem>>, vector<16x512xbf16>,
    %c491_i32_59 = arith.constant 491 : i32
    %110 = tpu.dynamic_rotate %86 by %c491_i32_59 dim 1 : vector<16x512xf32>, i32 -> vector<16x512xf32>
    %111 = arith.truncf %110 : vector<16x512xf32> to vector<16x512xbf16>
    %c128_60 = arith.constant 128 : index
    %c0_61 = arith.constant 0 : index
    %112 = vector.load %arg10[%c128_60, %c0_61] : memref<400x512xbf16, #tpu.memory_space<vmem>>, vector<16x512xbf16>
    tpu.vector_store %arg10[%c128_60, %c0_61], %111 {strides = array<i32>} : memref<400x512xbf16, #tpu.memory_space<vmem>>, vector<16x512xbf16>,
    %c0_62 = arith.constant 0 : index
    %c0_63 = arith.constant 0 : index
    %113 = vector.load %arg5[%c0_62, %c0_63] : memref<16x144xbf16, #tpu.memory_space<vmem>>, vector<16x144xbf16>
    %c0_64 = arith.constant 0 : index
    %c0_65 = arith.constant 0 : index
    %114 = vector.load %arg10[%c0_64, %c0_65] : memref<400x512xbf16, #tpu.memory_space<vmem>>, vector<144x512xbf16>
    %cst_66 = arith.constant dense<0.000000e+00> : vector<16x512xf32>
    %115 = tpu.matmul %113, %114, %cst_66 {dimension_numbers = #tpu.dot_dimension_numbers<[1], [0], [0], [1], [0, 0, 1, 1], [], []>} : vector<16x144xbf16>, vector<144x512xbf16>, vector<16x512xf32> -> vector<16x512xf32>
    %c0_67 = arith.constant 0 : index
    %c0_68 = arith.constant 0 : index
    %116 = vector.load %arg6[%c0_67, %c0_68] : memref<16x1xf32, #tpu.memory_space<vmem>>, vector<16x1xf32>
    %117 = vector.broadcast %116 : vector<16x1xf32> to vector<16x512xf32>
    %118 = arith.addf %115, %117 : vector<16x512xf32>
    %119 = math.tanh %118 : vector<16x512xf32>
    %120 = arith.mulf %119, %2 : vector<16x512xf32>
    %c21_i32_69 = arith.constant 21 : i32
    %121 = tpu.dynamic_rotate %120 by %c21_i32_69 dim 1 : vector<16x512xf32>, i32 -> vector<16x512xf32>
    %122 = arith.truncf %121 : vector<16x512xf32> to vector<16x512xbf16>
    %c0_70 = arith.constant 0 : index
    %c0_71 = arith.constant 0 : index
    %123 = vector.load %arg10[%c0_70, %c0_71] : memref<400x512xbf16, #tpu.memory_space<vmem>>, vector<16x512xbf16>
    tpu.vector_store %arg10[%c0_70, %c0_71], %122 {strides = array<i32>} : memref<400x512xbf16, #tpu.memory_space<vmem>>, vector<16x512xbf16>,
    %c20_i32_72 = arith.constant 20 : i32
    %124 = tpu.dynamic_rotate %120 by %c20_i32_72 dim 1 : vector<16x512xf32>, i32 -> vector<16x512xf32>
    %125 = arith.truncf %124 : vector<16x512xf32> to vector<16x512xbf16>
    %c16_73 = arith.constant 16 : index
    %c0_74 = arith.constant 0 : index
    %126 = vector.load %arg10[%c16_73, %c0_74] : memref<400x512xbf16, #tpu.memory_space<vmem>>, vector<16x512xbf16>
    tpu.vector_store %arg10[%c16_73, %c0_74], %125 {strides = array<i32>} : memref<400x512xbf16, #tpu.memory_space<vmem>>, vector<16x512xbf16>,
    %c19_i32_75 = arith.constant 19 : i32
    %127 = tpu.dynamic_rotate %120 by %c19_i32_75 dim 1 : vector<16x512xf32>, i32 -> vector<16x512xf32>
    %128 = arith.truncf %127 : vector<16x512xf32> to vector<16x512xbf16>
    %c32_76 = arith.constant 32 : index
    %c0_77 = arith.constant 0 : index
    %129 = vector.load %arg10[%c32_76, %c0_77] : memref<400x512xbf16, #tpu.memory_space<vmem>>, vector<16x512xbf16>
    tpu.vector_store %arg10[%c32_76, %c0_77], %128 {strides = array<i32>} : memref<400x512xbf16, #tpu.memory_space<vmem>>, vector<16x512xbf16>,
    %c1_i32_78 = arith.constant 1 : i32
    %130 = tpu.dynamic_rotate %120 by %c1_i32_78 dim 1 : vector<16x512xf32>, i32 -> vector<16x512xf32>
    %131 = arith.truncf %130 : vector<16x512xf32> to vector<16x512xbf16>
    %c48_79 = arith.constant 48 : index
    %c0_80 = arith.constant 0 : index
    %132 = vector.load %arg10[%c48_79, %c0_80] : memref<400x512xbf16, #tpu.memory_space<vmem>>, vector<16x512xbf16>
    tpu.vector_store %arg10[%c48_79, %c0_80], %131 {strides = array<i32>} : memref<400x512xbf16, #tpu.memory_space<vmem>>, vector<16x512xbf16>,
    %133 = arith.truncf %120 : vector<16x512xf32> to vector<16x512xbf16>
    %c64_81 = arith.constant 64 : index
    %c0_82 = arith.constant 0 : index
    %134 = vector.load %arg10[%c64_81, %c0_82] : memref<400x512xbf16, #tpu.memory_space<vmem>>, vector<16x512xbf16>
    tpu.vector_store %arg10[%c64_81, %c0_82], %133 {strides = array<i32>} : memref<400x512xbf16, #tpu.memory_space<vmem>>, vector<16x512xbf16>,
    %c511_i32_83 = arith.constant 511 : i32
    %135 = tpu.dynamic_rotate %120 by %c511_i32_83 dim 1 : vector<16x512xf32>, i32 -> vector<16x512xf32>
    %136 = arith.truncf %135 : vector<16x512xf32> to vector<16x512xbf16>
    %c80_84 = arith.constant 80 : index
    %c0_85 = arith.constant 0 : index
    %137 = vector.load %arg10[%c80_84, %c0_85] : memref<400x512xbf16, #tpu.memory_space<vmem>>, vector<16x512xbf16>
    tpu.vector_store %arg10[%c80_84, %c0_85], %136 {strides = array<i32>} : memref<400x512xbf16, #tpu.memory_space<vmem>>, vector<16x512xbf16>,
    %c493_i32_86 = arith.constant 493 : i32
    %138 = tpu.dynamic_rotate %120 by %c493_i32_86 dim 1 : vector<16x512xf32>, i32 -> vector<16x512xf32>
    %139 = arith.truncf %138 : vector<16x512xf32> to vector<16x512xbf16>
    %c96_87 = arith.constant 96 : index
    %c0_88 = arith.constant 0 : index
    %140 = vector.load %arg10[%c96_87, %c0_88] : memref<400x512xbf16, #tpu.memory_space<vmem>>, vector<16x512xbf16>
    tpu.vector_store %arg10[%c96_87, %c0_88], %139 {strides = array<i32>} : memref<400x512xbf16, #tpu.memory_space<vmem>>, vector<16x512xbf16>,
    %c492_i32_89 = arith.constant 492 : i32
    %141 = tpu.dynamic_rotate %120 by %c492_i32_89 dim 1 : vector<16x512xf32>, i32 -> vector<16x512xf32>
    %142 = arith.truncf %141 : vector<16x512xf32> to vector<16x512xbf16>
    %c112_90 = arith.constant 112 : index
    %c0_91 = arith.constant 0 : index
    %143 = vector.load %arg10[%c112_90, %c0_91] : memref<400x512xbf16, #tpu.memory_space<vmem>>, vector<16x512xbf16>
    tpu.vector_store %arg10[%c112_90, %c0_91], %142 {strides = array<i32>} : memref<400x512xbf16, #tpu.memory_space<vmem>>, vector<16x512xbf16>,
    %c491_i32_92 = arith.constant 491 : i32
    %144 = tpu.dynamic_rotate %120 by %c491_i32_92 dim 1 : vector<16x512xf32>, i32 -> vector<16x512xf32>
    %145 = arith.truncf %144 : vector<16x512xf32> to vector<16x512xbf16>
    %c128_93 = arith.constant 128 : index
    %c0_94 = arith.constant 0 : index
    %146 = vector.load %arg10[%c128_93, %c0_94] : memref<400x512xbf16, #tpu.memory_space<vmem>>, vector<16x512xbf16>
    tpu.vector_store %arg10[%c128_93, %c0_94], %145 {strides = array<i32>} : memref<400x512xbf16, #tpu.memory_space<vmem>>, vector<16x512xbf16>,
    %c0_95 = arith.constant 0 : index
    %c0_96 = arith.constant 0 : index
    %147 = vector.load %arg7[%c0_95, %c0_96] : memref<8x144xbf16, #tpu.memory_space<vmem>>, vector<8x144xbf16>
    %c0_97 = arith.constant 0 : index
    %c0_98 = arith.constant 0 : index
    %148 = vector.load %arg10[%c0_97, %c0_98] : memref<400x512xbf16, #tpu.memory_space<vmem>>, vector<144x512xbf16>
    %cst_99 = arith.constant dense<0.000000e+00> : vector<8x512xf32>
    %149 = tpu.matmul %147, %148, %cst_99 {dimension_numbers = #tpu.dot_dimension_numbers<[1], [0], [0], [1], [0, 0, 1, 1], [], []>} : vector<8x144xbf16>, vector<144x512xbf16>, vector<8x512xf32> -> vector<8x512xf32>
    %c0_100 = arith.constant 0 : index
    %c0_101 = arith.constant 0 : index
    %150 = vector.load %arg8[%c0_100, %c0_101] : memref<8x1xf32, #tpu.memory_space<vmem>>, vector<8x1xf32>
    %151 = vector.broadcast %150 : vector<8x1xf32> to vector<8x512xf32>
    %152 = arith.addf %149, %151 : vector<8x512xf32>
    %cst_102 = arith.constant 0.000000e+00 : f32
    %cst_103 = arith.constant 1.000000e+00 : f32
    %153 = vector.broadcast %cst_102 : f32 to vector<8x512xf32>
    %154 = arith.maximumf %153, %152 : vector<8x512xf32>
    %155 = vector.broadcast %cst_103 : f32 to vector<8x512xf32>
    %156 = arith.minimumf %155, %154 : vector<8x512xf32>
    %c0_104 = arith.constant 0 : index
    %c0_105 = arith.constant 0 : index
    %c0_106 = arith.constant 0 : index
    %157 = vector.load %arg9[%c0_104, %c0_105, %c0_106] : memref<1x8x512xf32, #tpu.memory_space<vmem>>, vector<1x8x512xf32>
    %158 = vector.shape_cast %157 : vector<1x8x512xf32> to vector<8x512xf32>
    %159 = vector.shape_cast %156 : vector<8x512xf32> to vector<1x8x512xf32>
    tpu.vector_store %arg9[%c0_104, %c0_105, %c0_106], %159 {strides = array<i32>} : memref<1x8x512xf32, #tpu.memory_space<vmem>>, vector<1x8x512xf32>,
    return
  }
  func.func @transform_0(%arg0: i32) -> (i32, i32, i32) {
    %c0_i32 = arith.constant 0 : i32
    %c0_i32_0 = arith.constant 0 : i32
    %c0_i32_1 = arith.constant 0 : i32
    return %arg0, %c0_i32, %c0_i32_0 : i32, i32, i32
  }
  func.func @transform_1(%arg0: i32) -> (i32, i32) {
    %c0_i32 = arith.constant 0 : i32
    %c0_i32_0 = arith.constant 0 : i32
    %c0_i32_1 = arith.constant 0 : i32
    return %c0_i32, %c0_i32_0 : i32, i32
  }
  func.func @transform_2(%arg0: i32) -> (i32, i32) {
    %c0_i32 = arith.constant 0 : i32
    %c0_i32_0 = arith.constant 0 : i32
    %c0_i32_1 = arith.constant 0 : i32
    return %c0_i32, %c0_i32_0 : i32, i32
  }
  func.func @transform_3(%arg0: i32) -> (i32, i32) {
    %c0_i32 = arith.constant 0 : i32
    %c0_i32_0 = arith.constant 0 : i32
    %c0_i32_1 = arith.constant 0 : i32
    return %c0_i32, %c0_i32_0 : i32, i32
  }
  func.func @transform_4(%arg0: i32) -> (i32, i32) {
    %c0_i32 = arith.constant 0 : i32
    %c0_i32_0 = arith.constant 0 : i32
    %c0_i32_1 = arith.constant 0 : i32
    return %c0_i32, %c0_i32_0 : i32, i32
  }
  func.func @transform_5(%arg0: i32) -> (i32, i32) {
    %c0_i32 = arith.constant 0 : i32
    %c0_i32_0 = arith.constant 0 : i32
    %c0_i32_1 = arith.constant 0 : i32
    return %c0_i32, %c0_i32_0 : i32, i32
  }
  func.func @transform_6(%arg0: i32) -> (i32, i32) {
    %c0_i32 = arith.constant 0 : i32
    %c0_i32_0 = arith.constant 0 : i32
    %c0_i32_1 = arith.constant 0 : i32
    return %c0_i32, %c0_i32_0 : i32, i32
  }
  func.func @transform_7(%arg0: i32) -> (i32, i32) {
    %c0_i32 = arith.constant 0 : i32
    %c0_i32_0 = arith.constant 0 : i32
    %c0_i32_1 = arith.constant 0 : i32
    return %c0_i32, %c0_i32_0 : i32, i32
  }
  func.func @transform_8(%arg0: i32) -> (i32, i32, i32) {
    %c0_i32 = arith.constant 0 : i32
    %c0_i32_0 = arith.constant 0 : i32
    %c0_i32_1 = arith.constant 0 : i32
    return %arg0, %c0_i32, %c0_i32_0 : i32, i32, i32
  }
}

</mosaic_0001>

<llo_original>
// kernel: espcn_forward.1
$region0: #{espcn_forward.1}
  #allocation0 [shape = 'u32[]', space=smem, size = 0x4, offset = 0x4, fixed_abs, tag = 'smem constant byte address 0x4 - core index']
  #allocation1 [shape = 'u32[144,128]{1,0:T(1,128)}', space=vmem, size = 0x12000, scoped, tag = 'internal scratch']
  #allocation2 [shape = 'bf16[400,512]{1,0:T(8,128)(2,1)}', space=vmem, size = 0x64000, scoped, tag = 'scratch operand']
  %s0 = inlined_call_operand.vmem [shape: f32[2,16,512], index: 0, kind: input, shape index: {}]
  %s1 = inlined_call_operand.vmem [shape: f32[1,512], index: 1, kind: input, shape index: {}]
  %s2 = inlined_call_operand.vmem [shape: bf16[16,400], index: 2, kind: input, shape index: {}]
  %s3 = inlined_call_operand.vmem [shape: f32[16,1], index: 3, kind: input, shape index: {}]
  %s4 = inlined_call_operand.vmem [shape: bf16[16,144], index: 4, kind: input, shape index: {}]
  %s5 = inlined_call_operand.vmem [shape: f32[16,1], index: 5, kind: input, shape index: {}]
  %s6 = inlined_call_operand.vmem [shape: bf16[8,144], index: 6, kind: input, shape index: {}]
  %s7 = inlined_call_operand.vmem [shape: f32[8,1], index: 7, kind: input, shape index: {}]
  %s8 = inlined_call_operand.vmem [shape: f32[2,8,512], index: 8, kind: output, shape index: {}]
  %s9 = sld [smem:[#allocation0]]
  $region65: #{espcn_forward.1} parent=0
    _
  %s11 = ssub.s32 1, %s9
  %s12 = scalar_select 0, %s11, %s9
  loop: start=0, step=1, limit=4
  $region2: #{espcn_forward.1} parent=0 // loop_pre_header
    _
  $region3: #{espcn_forward.1} parent=0 // loop_header
    %s14 = sphi 0, %s18
    %p15 = scmp.ge.s32.totalorder %s14, 4
    %s24 = sphi 0, %s26
    %s27 = sphi 0, %s24
    %s28 = sphi 0, %s27
    %s44 = sphi 0, %s28
    %s48 = sphi 0, %s48
    %s50 = sphi 0, %s48
    %s51 = sphi 0, %s50
    %s65 = sphi 0, %s51
    %s69 = sphi 0, %s69
    %s71 = sphi 0, %s69
    %s72 = sphi 0, %s71
    %s86 = sphi 0, %s72
    %s90 = sphi 0, %s90
    %s92 = sphi 0, %s90
    %s93 = sphi 0, %s92
    %s107 = sphi 0, %s93
    %s111 = sphi 0, %s111
    %s113 = sphi 0, %s111
    %s114 = sphi 0, %s113
    %s128 = sphi 0, %s114
    %s132 = sphi 0, %s132
    %s134 = sphi 0, %s132
    %s135 = sphi 0, %s134
    %s149 = sphi 0, %s135
    %s153 = sphi 0, %s153
    %s155 = sphi 0, %s153
    %s156 = sphi 0, %s155
    %s170 = sphi 0, %s156
    %s174 = sphi 0, %s174
    %s176 = sphi 0, %s174
    %s177 = sphi 0, %s176
    %s191 = sphi 0, %s177
    %s197 = sphi 0, %s199
    %s200 = sphi 0, %s197
    %s201 = sphi 0, %s200
    %s217 = sphi 0, %s201
  $region4: #{espcn_forward.1} parent=0 // loop_header_branch
    %17 = sbr.rel (%p15) target = $region8
  $region5: #{espcn_forward.1} parent=0 // loop_body
    %s19 = ssub.s32 %s14, 1
    %s20 = ssub.s32 %s14, 2
    %s21 = sadd.s32 %s14, 1
    %s22 = ssub.s32 %s14, %s21
    %p23 = scmp.eq.s32.totalorder %s22, 0
    %s25 = sadd.s32 %s24, 1
    %s26 = scalar_select %p23, %s24, %s25
    %p29 = pneg %p23
    %p30 = scmp.eq.s32.totalorder %s14, 1
    %p31 = por %p29, %p30
    %p32 = scmp.ne.s32.totalorder %s24, %s27
    %p33 = scmp.eq.s32.totalorder %s14, 0
    %p34 = por %p32, %p33
    %p35 = scmp.ne.s32.totalorder %s24, %s27
    %p36 = scmp.eq.s32.totalorder %s19, 1
    %p37 = por %p35, %p36
    %p38 = scmp.ne.s32.totalorder %s27, %s28
    %p39 = scmp.eq.s32.totalorder %s19, 0
    %p40 = por %p38, %p39
    %p41 = scmp.ne.s32.totalorder %s27, %s28
    %p42 = scmp.eq.s32.totalorder %s20, 1
    %p43 = por %p41, %p42
    %p45 = scmp.ne.s32.totalorder %s28, %s44
    %p46 = scmp.eq.s32.totalorder %s20, 0
    %p47 = por %p45, %p46
    %s49 = sadd.s32 %s48, 1
    %p52 = scmp.eq.s32.totalorder %s14, 1
    %p53 = scmp.ne.s32.totalorder %s48, %s50
    %p54 = scmp.eq.s32.totalorder %s14, 0
    %p55 = por %p53, %p54
    %p56 = scmp.ne.s32.totalorder %s48, %s50
    %p57 = scmp.eq.s32.totalorder %s19, 1
    %p58 = por %p56, %p57
    %p59 = scmp.ne.s32.totalorder %s50, %s51
    %p60 = scmp.eq.s32.totalorder %s19, 0
    %p61 = por %p59, %p60
    %p62 = scmp.ne.s32.totalorder %s50, %s51
    %p63 = scmp.eq.s32.totalorder %s20, 1
    %p64 = por %p62, %p63
    %p66 = scmp.ne.s32.totalorder %s51, %s65
    %p67 = scmp.eq.s32.totalorder %s20, 0
    %p68 = por %p66, %p67
    %s70 = sadd.s32 %s69, 1
    %p73 = scmp.eq.s32.totalorder %s14, 1
    %p74 = scmp.ne.s32.totalorder %s69, %s71
    %p75 = scmp.eq.s32.totalorder %s14, 0
    %p76 = por %p74, %p75
    %p77 = scmp.ne.s32.totalorder %s69, %s71
    %p78 = scmp.eq.s32.totalorder %s19, 1
    %p79 = por %p77, %p78
    %p80 = scmp.ne.s32.totalorder %s71, %s72
    %p81 = scmp.eq.s32.totalorder %s19, 0
    %p82 = por %p80, %p81
    %p83 = scmp.ne.s32.totalorder %s71, %s72
    %p84 = scmp.eq.s32.totalorder %s20, 1
    %p85 = por %p83, %p84
    %p87 = scmp.ne.s32.totalorder %s72, %s86
    %p88 = scmp.eq.s32.totalorder %s20, 0
    %p89 = por %p87, %p88
    %s91 = sadd.s32 %s90, 1
    %p94 = scmp.eq.s32.totalorder %s14, 1
    %p95 = scmp.ne.s32.totalorder %s90, %s92
    %p96 = scmp.eq.s32.totalorder %s14, 0
    %p97 = por %p95, %p96
    %p98 = scmp.ne.s32.totalorder %s90, %s92
    %p99 = scmp.eq.s32.totalorder %s19, 1
    %p100 = por %p98, %p99
    %p101 = scmp.ne.s32.totalorder %s92, %s93
    %p102 = scmp.eq.s32.totalorder %s19, 0
    %p103 = por %p101, %p102
    %p104 = scmp.ne.s32.totalorder %s92, %s93
    %p105 = scmp.eq.s32.totalorder %s20, 1
    %p106 = por %p104, %p105
    %p108 = scmp.ne.s32.totalorder %s93, %s107
    %p109 = scmp.eq.s32.totalorder %s20, 0
    %p110 = por %p108, %p109
    %s112 = sadd.s32 %s111, 1
    %p115 = scmp.eq.s32.totalorder %s14, 1
    %p116 = scmp.ne.s32.totalorder %s111, %s113
    %p117 = scmp.eq.s32.totalorder %s14, 0
    %p118 = por %p116, %p117
    %p119 = scmp.ne.s32.totalorder %s111, %s113
    %p120 = scmp.eq.s32.totalorder %s19, 1
    %p121 = por %p119, %p120
    %p122 = scmp.ne.s32.totalorder %s113, %s114
    %p123 = scmp.eq.s32.totalorder %s19, 0
    %p124 = por %p122, %p123
    %p125 = scmp.ne.s32.totalorder %s113, %s114
    %p126 = scmp.eq.s32.totalorder %s20, 1
    %p127 = por %p125, %p126
    %p129 = scmp.ne.s32.totalorder %s114, %s128
    %p130 = scmp.eq.s32.totalorder %s20, 0
    %p131 = por %p129, %p130
    %s133 = sadd.s32 %s132, 1
    %p136 = scmp.eq.s32.totalorder %s14, 1
    %p137 = scmp.ne.s32.totalorder %s132, %s134
    %p138 = scmp.eq.s32.totalorder %s14, 0
    %p139 = por %p137, %p138
    %p140 = scmp.ne.s32.totalorder %s132, %s134
    %p141 = scmp.eq.s32.totalorder %s19, 1
    %p142 = por %p140, %p141
    %p143 = scmp.ne.s32.totalorder %s134, %s135
    %p144 = scmp.eq.s32.totalorder %s19, 0
    %p145 = por %p143, %p144
    %p146 = scmp.ne.s32.totalorder %s134, %s135
    %p147 = scmp.eq.s32.totalorder %s20, 1
    %p148 = por %p146, %p147
    %p150 = scmp.ne.s32.totalorder %s135, %s149
    %p151 = scmp.eq.s32.totalorder %s20, 0
    %p152 = por %p150, %p151
    %s154 = sadd.s32 %s153, 1
    %p157 = scmp.eq.s32.totalorder %s14, 1
    %p158 = scmp.ne.s32.totalorder %s153, %s155
    %p159 = scmp.eq.s32.totalorder %s14, 0
    %p160 = por %p158, %p159
    %p161 = scmp.ne.s32.totalorder %s153, %s155
    %p162 = scmp.eq.s32.totalorder %s19, 1
    %p163 = por %p161, %p162
    %p164 = scmp.ne.s32.totalorder %s155, %s156
    %p165 = scmp.eq.s32.totalorder %s19, 0
    %p166 = por %p164, %p165
    %p167 = scmp.ne.s32.totalorder %s155, %s156
    %p168 = scmp.eq.s32.totalorder %s20, 1
    %p169 = por %p167, %p168
    %p171 = scmp.ne.s32.totalorder %s156, %s170
    %p172 = scmp.eq.s32.totalorder %s20, 0
    %p173 = por %p171, %p172
    %s175 = sadd.s32 %s174, 1
    %p178 = scmp.eq.s32.totalorder %s14, 1
    %p179 = scmp.ne.s32.totalorder %s174, %s176
    %p180 = scmp.eq.s32.totalorder %s14, 0
    %p181 = por %p179, %p180
    %p182 = scmp.ne.s32.totalorder %s174, %s176
    %p183 = scmp.eq.s32.totalorder %s19, 1
    %p184 = por %p182, %p183
    %p185 = scmp.ne.s32.totalorder %s176, %s177
    %p186 = scmp.eq.s32.totalorder %s19, 0
    %p187 = por %p185, %p186
    %p188 = scmp.ne.s32.totalorder %s176, %s177
    %p189 = scmp.eq.s32.totalorder %s20, 1
    %p190 = por %p188, %p189
    %p192 = scmp.ne.s32.totalorder %s177, %s191
    %p193 = scmp.eq.s32.totalorder %s20, 0
    %p194 = por %p192, %p193
    %s195 = ssub.s32 %s14, %s21
    %p196 = scmp.eq.s32.totalorder %s195, 0
    %s198 = sadd.s32 %s197, 1
    %s199 = scalar_select %p196, %s197, %s198
    %p202 = pneg %p196
    %p203 = scmp.eq.s32.totalorder %s14, 1
    %p204 = por %p202, %p203
    %p205 = scmp.ne.s32.totalorder %s197, %s200
    %p206 = scmp.eq.s32.totalorder %s14, 0
    %p207 = por %p205, %p206
    %p208 = scmp.ne.s32.totalorder %s197, %s200
    %p209 = scmp.eq.s32.totalorder %s19, 1
    %p210 = por %p208, %p209
    %p211 = scmp.ne.s32.totalorder %s200, %s201
    %p212 = scmp.eq.s32.totalorder %s19, 0
    %p213 = por %p211, %p212
    %p214 = scmp.ne.s32.totalorder %s200, %s201
    %p215 = scmp.eq.s32.totalorder %s20, 1
    %p216 = por %p214, %p215
    %p218 = scmp.ne.s32.totalorder %s201, %s217
    %p219 = scmp.eq.s32.totalorder %s20, 0
    %p220 = por %p218, %p219
    %p221 = scmp.le.s32.totalorder 1, %s14
    %p222 = scmp.lt.s32.totalorder %s14, 3
    %p223 = pnand %p221, %p222
    %p224 = pneg %p223
    // Predicated region
    $region9: #{espcn_forward.1} parent=5 // pred_check
      _
    $region10: #{espcn_forward.1} parent=5 // pred_check_branch
      %226 = sbr.rel (%p223) target = $region12
    $region11: #{espcn_forward.1} parent=5 // pred_region
      %s227 = ssub.s32 %s14, 1
      // Predicated region
      $region13: #{espcn_forward.1} parent=11 // pred_check
        %p228 = pneg %p61
      $region14: #{espcn_forward.1} parent=11 // pred_check_branch
        %230 = sbr.rel (%p228) target = $region16
      $region15: #{espcn_forward.1} parent=11 // pred_region
        _
      $region16: #{espcn_forward.1} parent=11 // pred_fallthru
        _
      // Predicated region
      $region17: #{espcn_forward.1} parent=11 // pred_check
        %p231 = pneg %p82
      $region18: #{espcn_forward.1} parent=11 // pred_check_branch
        %233 = sbr.rel (%p231) target = $region20
      $region19: #{espcn_forward.1} parent=11 // pred_region
        _
      $region20: #{espcn_forward.1} parent=11 // pred_fallthru
        _
      // Predicated region
      $region21: #{espcn_forward.1} parent=11 // pred_check
        %p234 = pneg %p103
      $region22: #{espcn_forward.1} parent=11 // pred_check_branch
        %236 = sbr.rel (%p234) target = $region24
      $region23: #{espcn_forward.1} parent=11 // pred_region
        _
      $region24: #{espcn_forward.1} parent=11 // pred_fallthru
        _
      // Predicated region
      $region25: #{espcn_forward.1} parent=11 // pred_check
        %p237 = pneg %p124
      $region26: #{espcn_forward.1} parent=11 // pred_check_branch
        %239 = sbr.rel (%p237) target = $region28
      $region27: #{espcn_forward.1} parent=11 // pred_region
        _
      $region28: #{espcn_forward.1} parent=11 // pred_fallthru
        _
      // Predicated region
      $region29: #{espcn_forward.1} parent=11 // pred_check
        %p240 = pneg %p145
      $region30: #{espcn_forward.1} parent=11 // pred_check_branch
        %242 = sbr.rel (%p240) target = $region32
      $region31: #{espcn_forward.1} parent=11 // pred_region
        _
      $region32: #{espcn_forward.1} parent=11 // pred_fallthru
        _
      // Predicated region
      $region33: #{espcn_forward.1} parent=11 // pred_check
        %p243 = pneg %p166
      $region34: #{espcn_forward.1} parent=11 // pred_check_branch
        %245 = sbr.rel (%p243) target = $region36
      $region35: #{espcn_forward.1} parent=11 // pred_region
        _
      $region36: #{espcn_forward.1} parent=11 // pred_fallthru
        _
      // Predicated region
      $region37: #{espcn_forward.1} parent=11 // pred_check
        %p246 = pneg %p187
      $region38: #{espcn_forward.1} parent=11 // pred_check_branch
        %248 = sbr.rel (%p246) target = $region40
      $region39: #{espcn_forward.1} parent=11 // pred_region
        _
      $region40: #{espcn_forward.1} parent=11 // pred_fallthru
        _
    $region12: #{espcn_forward.1} parent=5 // pred_fallthru
      _
    %p249 = scmp.lt.s32.totalorder %s14, 2
    // Predicated region
    $region41: #{espcn_forward.1} parent=5 // pred_check
      %p250 = pneg %p249
    $region42: #{espcn_forward.1} parent=5 // pred_check_branch
      %252 = sbr.rel (%p250) target = $region44
    $region43: #{espcn_forward.1} parent=5 // pred_region
      // Predicated region
      $region45: #{espcn_forward.1} parent=43 // pred_check
        %p253 = pneg %p34
      $region46: #{espcn_forward.1} parent=43 // pred_check_branch
        %255 = sbr.rel (%p253) target = $region48
      $region47: #{espcn_forward.1} parent=43 // pred_region
        %p256 = scmp.lt.s32.totalorder %s14, 1
        %s257 = scalar_select %p256, %s14, 1
        %s258 = smul.addr %s257, 8
        %s259 = smul.addr %s258, 8
        %s260 = scalar_lea.vmem %s0, %s259
      $region48: #{espcn_forward.1} parent=43 // pred_fallthru
        _
    $region44: #{espcn_forward.1} parent=5 // pred_fallthru
      _
    %p261 = scmp.le.s32.totalorder 1, %s14
    %p262 = scmp.lt.s32.totalorder %s14, 3
    %p263 = pnand %p261, %p262
    %p264 = pneg %p263
    // Predicated region
    $region49: #{espcn_forward.1} parent=5 // pred_check
      _
    $region50: #{espcn_forward.1} parent=5 // pred_check_branch
      %266 = sbr.rel (%p263) target = $region52
    $region51: #{espcn_forward.1} parent=5 // pred_region
      %s267 = ssub.s32 %s14, 1
      %p268 = scmp.lt.s32.totalorder %s19, 1
      %s269 = scalar_select %p268, %s19, 1
      %s270 = smul.addr %s269, 8
      %s271 = smul.addr %s270, 8
      %s272 = scalar_lea.vmem %s0, %s271
      %p273 = pneg %p40
      %p274 = pneg %p37
      %p275 = pneg %p61
      %p276 = pneg %p58
      %p277 = pneg %p82
      %p278 = pneg %p79
      %p279 = pneg %p103
      %p280 = pneg %p100
      %p281 = pneg %p124
      %p282 = pneg %p121
      %p283 = pneg %p145
      %p284 = pneg %p142
      %p285 = pneg %p166
      %p286 = pneg %p163
      %p287 = pneg %p187
      %p288 = pneg %p184
      %p289 = pneg %p213
      %p290 = pneg %p210
      %p291 = scmp.lt.s32.totalorder %s19, 1
      %s292 = scalar_select %p291, %s19, 1
      %s293 = smul.addr %s292, 4
      %s294 = smul.addr %s293, 8
      %s295 = scalar_lea.vmem %s8, %s294
      %p296 = scmp.lt.s32.totalorder %s19, 1
      %s297 = scalar_select %p296, %s19, 1
      %s298 = smul.addr %s297, 8
      %s299 = smul.addr %s298, 8
      %s300 = scalar_lea.vmem %s0, %s299
      %p301 = scmp.lt.s32.totalorder %s19, 1
      %s302 = scalar_select %p301, %s19, 1
      %s303 = smul.addr %s302, 4
      %s304 = smul.addr %s303, 8
      %s305 = scalar_lea.vmem %s8, %s304
      %v307 = vld [vmem:[%s1] sm:$0xf]
      %v309 = vlaneseq
      %v310 = vshrl.u32 %v309, 7
      %v311 = vsub.s32 0, %v310
      %v312 = vrot.slane %v307, %v311
      %v313 = vlaneseq
      %v314 = vshrl.u32 %v313, 7
      %v315 = vsub.s32 1, %v314
      %v316 = vrot.slane %v307, %v315
      %v317 = vlaneseq
      %v318 = vshrl.u32 %v317, 7
      %v319 = vsub.s32 2, %v318
      %v320 = vrot.slane %v307, %v319
      %v321 = vlaneseq
      %v322 = vshrl.u32 %v321, 7
      %v323 = vsub.s32 3, %v322
      %v324 = vrot.slane %v307, %v323
      %v329 = vld [vmem:[%s300] sm:$0xff]
      %v330 = vld [vmem:[%s300 + $0x8] sm:$0xff]
      %v331 = vld [vmem:[%s300 + $0x10] sm:$0xff]
      %v332 = vld [vmem:[%s300 + $0x18] sm:$0xff]
      %v333 = vld [vmem:[%s300 + $0x20] sm:$0xff]
      %v334 = vld [vmem:[%s300 + $0x28] sm:$0xff]
      %v335 = vld [vmem:[%s300 + $0x30] sm:$0xff]
      %v336 = vld [vmem:[%s300 + $0x38] sm:$0xff]
      %337 = vrot.lane.b32.xlu0 %v329, 42
      %v338 = vpop.permute.xlu0 %337
      %339 = vrot.lane.b32.xlu0 %v333, 42
      %v340 = vpop.permute.xlu0 %339
      %341 = vrot.lane.b32.xlu0 %v330, 42
      %v342 = vpop.permute.xlu0 %341
      %343 = vrot.lane.b32.xlu0 %v334, 42
      %v344 = vpop.permute.xlu0 %343
      %345 = vrot.lane.b32.xlu0 %v331, 42
      %v346 = vpop.permute.xlu0 %345
      %347 = vrot.lane.b32.xlu0 %v335, 42
      %v348 = vpop.permute.xlu0 %347
      %349 = vrot.lane.b32.xlu0 %v332, 42
      %v350 = vpop.permute.xlu0 %349
      %351 = vrot.lane.b32.xlu0 %v336, 42
      %v352 = vpop.permute.xlu0 %351
      %v353 = vlaneseq
      %v354 = vand.u32 %v353, 127
      %vm355 = vcmp.lt.s32.totalorder %v354, 42
      %v356 = vsel %vm355, %v346, %v350
      %v357 = vsel %vm355, %v348, %v352
      %v358 = vsel %vm355, %v342, %v346
      %v359 = vsel %vm355, %v344, %v348
      %v360 = vsel %vm355, %v338, %v342
      %v361 = vsel %vm355, %v340, %v344
      %v362 = vsel %vm355, %v350, %v338
      %v363 = vsel %vm355, %v352, %v340
      %v364 = vpack.c.bf16 %v363, %v362
      %v365 = vpack.c.bf16 %v361, %v360
      %v366 = vpack.c.bf16 %v359, %v358
      %v367 = vpack.c.bf16 %v357, %v356
      %v372 = vunpack.c.l.b16 %v364
      %v373 = vunpack.c.l.b16 %v365
      %v374 = vunpack.c.l.b16 %v366
      %v375 = vunpack.c.l.b16 %v367
      %v376 = vunpack.c.h.b16 %v364
      %v377 = vunpack.c.h.b16 %v365
      %v378 = vunpack.c.h.b16 %v366
      %v379 = vunpack.c.h.b16 %v367
      %v380 = vpack.c.b16 %v373, %v372
      %v381 = vpack.c.b16 %v375, %v374
      %v382 = vpack.c.b16 %v377, %v376
      %v383 = vpack.c.b16 %v379, %v378
      %388 = vst [vmem:[#allocation2] sm:$0xff] %v380
      %389 = vst [vmem:[#allocation2 + $0x8] sm:$0xff] %v381
      %390 = vst [vmem:[#allocation2 + $0x10] sm:$0xff] %v382
      %391 = vst [vmem:[#allocation2 + $0x18] sm:$0xff] %v383
      %392 = vrot.lane.b32.xlu0 %v329, 41
      %v393 = vpop.permute.xlu0 %392
      %394 = vrot.lane.b32.xlu0 %v333, 41
      %v395 = vpop.permute.xlu0 %394
      %396 = vrot.lane.b32.xlu0 %v330, 41
      %v397 = vpop.permute.xlu0 %396
      %398 = vrot.lane.b32.xlu0 %v334, 41
      %v399 = vpop.permute.xlu0 %398
      %400 = vrot.lane.b32.xlu0 %v331, 41
      %v401 = vpop.permute.xlu0 %400
      %402 = vrot.lane.b32.xlu0 %v335, 41
      %v403 = vpop.permute.xlu0 %402
      %404 = vrot.lane.b32.xlu0 %v332, 41
      %v405 = vpop.permute.xlu0 %404
      %406 = vrot.lane.b32.xlu0 %v336, 41
      %v407 = vpop.permute.xlu0 %406
      %vm408 = vcmp.lt.s32.totalorder %v354, 41
      %v409 = vsel %vm408, %v401, %v405
      %v410 = vsel %vm408, %v403, %v407
      %v411 = vsel %vm408, %v397, %v401
      %v412 = vsel %vm408, %v399, %v403
      %v413 = vsel %vm408, %v393, %v397
      %v414 = vsel %vm408, %v395, %v399
      %v415 = vsel %vm408, %v405, %v393
      %v416 = vsel %vm408, %v407, %v395
      %v417 = vpack.c.bf16 %v416, %v415
      %v418 = vpack.c.bf16 %v414, %v413
      %v419 = vpack.c.bf16 %v412, %v411
      %v420 = vpack.c.bf16 %v410, %v409
      %v425 = vunpack.c.l.b16 %v417
      %v426 = vunpack.c.l.b16 %v418
      %v427 = vunpack.c.l.b16 %v419
      %v428 = vunpack.c.l.b16 %v420
      %v429 = vunpack.c.h.b16 %v417
      %v430 = vunpack.c.h.b16 %v418
      %v431 = vunpack.c.h.b16 %v419
      %v432 = vunpack.c.h.b16 %v420
      %v433 = vpack.c.b16 %v426, %v425
      %v434 = vpack.c.b16 %v428, %v427
      %v435 = vpack.c.b16 %v430, %v429
      %v436 = vpack.c.b16 %v432, %v431
      %441 = vst [vmem:[#allocation2 + $0x20] sm:$0xff] %v433
      %442 = vst [vmem:[#allocation2 + $0x28] sm:$0xff] %v434
      %443 = vst [vmem:[#allocation2 + $0x30] sm:$0xff] %v435
      %444 = vst [vmem:[#allocation2 + $0x38] sm:$0xff] %v436
      %445 = vrot.lane.b32.xlu0 %v329, 40
      %v446 = vpop.permute.xlu0 %445
      %447 = vrot.lane.b32.xlu0 %v333, 40
      %v448 = vpop.permute.xlu0 %447
      %449 = vrot.lane.b32.xlu0 %v330, 40
      %v450 = vpop.permute.xlu0 %449
      %451 = vrot.lane.b32.xlu0 %v334, 40
      %v452 = vpop.permute.xlu0 %451
      %453 = vrot.lane.b32.xlu0 %v331, 40
      %v454 = vpop.permute.xlu0 %453
      %455 = vrot.lane.b32.xlu0 %v335, 40
      %v456 = vpop.permute.xlu0 %455
      %457 = vrot.lane.b32.xlu0 %v332, 40
      %v458 = vpop.permute.xlu0 %457
      %459 = vrot.lane.b32.xlu0 %v336, 40
      %v460 = vpop.permute.xlu0 %459
      %vm461 = vcmp.lt.s32.totalorder %v354, 40
      %v462 = vsel %vm461, %v454, %v458
      %v463 = vsel %vm461, %v456, %v460
      %v464 = vsel %vm461, %v450, %v454
      %v465 = vsel %vm461, %v452, %v456
      %v466 = vsel %vm461, %v446, %v450
      %v467 = vsel %vm461, %v448, %v452
      %v468 = vsel %vm461, %v458, %v446
      %v469 = vsel %vm461, %v460, %v448
      %v470 = vpack.c.bf16 %v469, %v468
      %v471 = vpack.c.bf16 %v467, %v466
      %v472 = vpack.c.bf16 %v465, %v464
      %v473 = vpack.c.bf16 %v463, %v462
      %v478 = vunpack.c.l.b16 %v470
      %v479 = vunpack.c.l.b16 %v471
      %v480 = vunpack.c.l.b16 %v472
      %v481 = vunpack.c.l.b16 %v473
      %v482 = vunpack.c.h.b16 %v470
      %v483 = vunpack.c.h.b16 %v471
      %v484 = vunpack.c.h.b16 %v472
      %v485 = vunpack.c.h.b16 %v473
      %v486 = vpack.c.b16 %v479, %v478
      %v487 = vpack.c.b16 %v481, %v480
      %v488 = vpack.c.b16 %v483, %v482
      %v489 = vpack.c.b16 %v485, %v484
      %494 = vst [vmem:[#allocation2 + $0x40] sm:$0xff] %v486
      %495 = vst [vmem:[#allocation2 + $0x48] sm:$0xff] %v487
      %496 = vst [vmem:[#allocation2 + $0x50] sm:$0xff] %v488
      %497 = vst [vmem:[#allocation2 + $0x58] sm:$0xff] %v489
      %498 = vrot.lane.b32.xlu0 %v329, 39
      %v499 = vpop.permute.xlu0 %498
      %500 = vrot.lane.b32.xlu0 %v333, 39
      %v501 = vpop.permute.xlu0 %500
      %502 = vrot.lane.b32.xlu0 %v330, 39
      %v503 = vpop.permute.xlu0 %502
      %504 = vrot.lane.b32.xlu0 %v334, 39
      %v505 = vpop.permute.xlu0 %504
      %506 = vrot.lane.b32.xlu0 %v331, 39
      %v507 = vpop.permute.xlu0 %506
      %508 = vrot.lane.b32.xlu0 %v335, 39
      %v509 = vpop.permute.xlu0 %508
      %510 = vrot.lane.b32.xlu0 %v332, 39
      %v511 = vpop.permute.xlu0 %510
      %512 = vrot.lane.b32.xlu0 %v336, 39
      %v513 = vpop.permute.xlu0 %512
      %vm514 = vcmp.lt.s32.totalorder %v354, 39
      %v515 = vsel %vm514, %v507, %v511
      %v516 = vsel %vm514, %v509, %v513
      %v517 = vsel %vm514, %v503, %v507
      %v518 = vsel %vm514, %v505, %v509
      %v519 = vsel %vm514, %v499, %v503
      %v520 = vsel %vm514, %v501, %v505
      %v521 = vsel %vm514, %v511, %v499
      %v522 = vsel %vm514, %v513, %v501
      %v523 = vpack.c.bf16 %v522, %v521
      %v524 = vpack.c.bf16 %v520, %v519
      %v525 = vpack.c.bf16 %v518, %v517
      %v526 = vpack.c.bf16 %v516, %v515
      %v531 = vunpack.c.l.b16 %v523
      %v532 = vunpack.c.l.b16 %v524
      %v533 = vunpack.c.l.b16 %v525
      %v534 = vunpack.c.l.b16 %v526
      %v535 = vunpack.c.h.b16 %v523
      %v536 = vunpack.c.h.b16 %v524
      %v537 = vunpack.c.h.b16 %v525
      %v538 = vunpack.c.h.b16 %v526
      %v539 = vpack.c.b16 %v532, %v531
      %v540 = vpack.c.b16 %v534, %v533
      %v541 = vpack.c.b16 %v536, %v535
      %v542 = vpack.c.b16 %v538, %v537
      %547 = vst [vmem:[#allocation2 + $0x60] sm:$0xff] %v539
      %548 = vst [vmem:[#allocation2 + $0x68] sm:$0xff] %v540
      %549 = vst [vmem:[#allocation2 + $0x70] sm:$0xff] %v541
      %550 = vst [vmem:[#allocation2 + $0x78] sm:$0xff] %v542
      %551 = vrot.lane.b32.xlu0 %v329, 38
      %v552 = vpop.permute.xlu0 %551
      %553 = vrot.lane.b32.xlu0 %v333, 38
      %v554 = vpop.permute.xlu0 %553
      %555 = vrot.lane.b32.xlu0 %v330, 38
      %v556 = vpop.permute.xlu0 %555
      %557 = vrot.lane.b32.xlu0 %v334, 38
      %v558 = vpop.permute.xlu0 %557
      %559 = vrot.lane.b32.xlu0 %v331, 38
      %v560 = vpop.permute.xlu0 %559
      %561 = vrot.lane.b32.xlu0 %v335, 38
      %v562 = vpop.permute.xlu0 %561
      %563 = vrot.lane.b32.xlu0 %v332, 38
      %v564 = vpop.permute.xlu0 %563
      %565 = vrot.lane.b32.xlu0 %v336, 38
      %v566 = vpop.permute.xlu0 %565
      %vm567 = vcmp.lt.s32.totalorder %v354, 38
      %v568 = vsel %vm567, %v560, %v564
      %v569 = vsel %vm567, %v562, %v566
      %v570 = vsel %vm567, %v556, %v560
      %v571 = vsel %vm567, %v558, %v562
      %v572 = vsel %vm567, %v552, %v556
      %v573 = vsel %vm567, %v554, %v558
      %v574 = vsel %vm567, %v564, %v552
      %v575 = vsel %vm567, %v566, %v554
      %v576 = vpack.c.bf16 %v575, %v574
      %v577 = vpack.c.bf16 %v573, %v572
      %v578 = vpack.c.bf16 %v571, %v570
      %v579 = vpack.c.bf16 %v569, %v568
      %v584 = vunpack.c.l.b16 %v576
      %v585 = vunpack.c.l.b16 %v577
      %v586 = vunpack.c.l.b16 %v578
      %v587 = vunpack.c.l.b16 %v579
      %v588 = vunpack.c.h.b16 %v576
      %v589 = vunpack.c.h.b16 %v577
      %v590 = vunpack.c.h.b16 %v578
      %v591 = vunpack.c.h.b16 %v579
      %v592 = vpack.c.b16 %v585, %v584
      %v593 = vpack.c.b16 %v587, %v586
      %v594 = vpack.c.b16 %v589, %v588
      %v595 = vpack.c.b16 %v591, %v590
      %600 = vst [vmem:[#allocation2 + $0x80] sm:$0xff] %v592
      %601 = vst [vmem:[#allocation2 + $0x88] sm:$0xff] %v593
      %602 = vst [vmem:[#allocation2 + $0x90] sm:$0xff] %v594
      %603 = vst [vmem:[#allocation2 + $0x98] sm:$0xff] %v595
      %604 = vrot.lane.b32.xlu0 %v329, 22
      %v605 = vpop.permute.xlu0 %604
      %606 = vrot.lane.b32.xlu0 %v333, 22
      %v607 = vpop.permute.xlu0 %606
      %608 = vrot.lane.b32.xlu0 %v330, 22
      %v609 = vpop.permute.xlu0 %608
      %610 = vrot.lane.b32.xlu0 %v334, 22
      %v611 = vpop.permute.xlu0 %610
      %612 = vrot.lane.b32.xlu0 %v331, 22
      %v613 = vpop.permute.xlu0 %612
      %614 = vrot.lane.b32.xlu0 %v335, 22
      %v615 = vpop.permute.xlu0 %614
      %616 = vrot.lane.b32.xlu0 %v332, 22
      %v617 = vpop.permute.xlu0 %616
      %618 = vrot.lane.b32.xlu0 %v336, 22
      %v619 = vpop.permute.xlu0 %618
      %vm620 = vcmp.lt.s32.totalorder %v354, 22
      %v621 = vsel %vm620, %v613, %v617
      %v622 = vsel %vm620, %v615, %v619
      %v623 = vsel %vm620, %v609, %v613
      %v624 = vsel %vm620, %v611, %v615
      %v625 = vsel %vm620, %v605, %v609
      %v626 = vsel %vm620, %v607, %v611
      %v627 = vsel %vm620, %v617, %v605
      %v628 = vsel %vm620, %v619, %v607
      %v629 = vpack.c.bf16 %v628, %v627
      %v630 = vpack.c.bf16 %v626, %v625
      %v631 = vpack.c.bf16 %v624, %v623
      %v632 = vpack.c.bf16 %v622, %v621
      %v637 = vunpack.c.l.b16 %v629
      %v638 = vunpack.c.l.b16 %v630
      %v639 = vunpack.c.l.b16 %v631
      %v640 = vunpack.c.l.b16 %v632
      %v641 = vunpack.c.h.b16 %v629
      %v642 = vunpack.c.h.b16 %v630
      %v643 = vunpack.c.h.b16 %v631
      %v644 = vunpack.c.h.b16 %v632
      %v645 = vpack.c.b16 %v638, %v637
      %v646 = vpack.c.b16 %v640, %v639
      %v647 = vpack.c.b16 %v642, %v641
      %v648 = vpack.c.b16 %v644, %v643
      %653 = vst [vmem:[#allocation2 + $0xa0] sm:$0xff] %v645
      %654 = vst [vmem:[#allocation2 + $0xa8] sm:$0xff] %v646
      %655 = vst [vmem:[#allocation2 + $0xb0] sm:$0xff] %v647
      %656 = vst [vmem:[#allocation2 + $0xb8] sm:$0xff] %v648
      %657 = vrot.lane.b32.xlu0 %v329, 21
      %v658 = vpop.permute.xlu0 %657
      %659 = vrot.lane.b32.xlu0 %v333, 21
      %v660 = vpop.permute.xlu0 %659
      %661 = vrot.lane.b32.xlu0 %v330, 21
      %v662 = vpop.permute.xlu0 %661
      %663 = vrot.lane.b32.xlu0 %v334, 21
      %v664 = vpop.permute.xlu0 %663
      %665 = vrot.lane.b32.xlu0 %v331, 21
      %v666 = vpop.permute.xlu0 %665
      %667 = vrot.lane.b32.xlu0 %v335, 21
      %v668 = vpop.permute.xlu0 %667
      %669 = vrot.lane.b32.xlu0 %v332, 21
      %v670 = vpop.permute.xlu0 %669
      %671 = vrot.lane.b32.xlu0 %v336, 21
      %v672 = vpop.permute.xlu0 %671
      %vm673 = vcmp.lt.s32.totalorder %v354, 21
      %v674 = vsel %vm673, %v666, %v670
      %v675 = vsel %vm673, %v668, %v672
      %v676 = vsel %vm673, %v662, %v666
      %v677 = vsel %vm673, %v664, %v668
      %v678 = vsel %vm673, %v658, %v662
      %v679 = vsel %vm673, %v660, %v664
      %v680 = vsel %vm673, %v670, %v658
      %v681 = vsel %vm673, %v672, %v660
      %v682 = vpack.c.bf16 %v681, %v680
      %v683 = vpack.c.bf16 %v679, %v678
      %v684 = vpack.c.bf16 %v677, %v676
      %v685 = vpack.c.bf16 %v675, %v674
      %v690 = vunpack.c.l.b16 %v682
      %v691 = vunpack.c.l.b16 %v683
      %v692 = vunpack.c.l.b16 %v684
      %v693 = vunpack.c.l.b16 %v685
      %v694 = vunpack.c.h.b16 %v682
      %v695 = vunpack.c.h.b16 %v683
      %v696 = vunpack.c.h.b16 %v684
      %v697 = vunpack.c.h.b16 %v685
      %v698 = vpack.c.b16 %v691, %v690
      %v699 = vpack.c.b16 %v693, %v692
      %v700 = vpack.c.b16 %v695, %v694
      %v701 = vpack.c.b16 %v697, %v696
      %706 = vst [vmem:[#allocation2 + $0xc0] sm:$0xff] %v698
      %707 = vst [vmem:[#allocation2 + $0xc8] sm:$0xff] %v699
      %708 = vst [vmem:[#allocation2 + $0xd0] sm:$0xff] %v700
      %709 = vst [vmem:[#allocation2 + $0xd8] sm:$0xff] %v701
      %710 = vrot.lane.b32.xlu0 %v329, 20
      %v711 = vpop.permute.xlu0 %710
      %712 = vrot.lane.b32.xlu0 %v333, 20
      %v713 = vpop.permute.xlu0 %712
      %714 = vrot.lane.b32.xlu0 %v330, 20
      %v715 = vpop.permute.xlu0 %714
      %716 = vrot.lane.b32.xlu0 %v334, 20
      %v717 = vpop.permute.xlu0 %716
      %718 = vrot.lane.b32.xlu0 %v331, 20
      %v719 = vpop.permute.xlu0 %718
      %720 = vrot.lane.b32.xlu0 %v335, 20
      %v721 = vpop.permute.xlu0 %720
      %722 = vrot.lane.b32.xlu0 %v332, 20
      %v723 = vpop.permute.xlu0 %722
      %724 = vrot.lane.b32.xlu0 %v336, 20
      %v725 = vpop.permute.xlu0 %724
      %vm726 = vcmp.lt.s32.totalorder %v354, 20
      %v727 = vsel %vm726, %v719, %v723
      %v728 = vsel %vm726, %v721, %v725
      %v729 = vsel %vm726, %v715, %v719
      %v730 = vsel %vm726, %v717, %v721
      %v731 = vsel %vm726, %v711, %v715
      %v732 = vsel %vm726, %v713, %v717
      %v733 = vsel %vm726, %v723, %v711
      %v734 = vsel %vm726, %v725, %v713
      %v735 = vpack.c.bf16 %v734, %v733
      %v736 = vpack.c.bf16 %v732, %v731
      %v737 = vpack.c.bf16 %v730, %v729
      %v738 = vpack.c.bf16 %v728, %v727
      %v743 = vunpack.c.l.b16 %v735
      %v744 = vunpack.c.l.b16 %v736
      %v745 = vunpack.c.l.b16 %v737
      %v746 = vunpack.c.l.b16 %v738
      %v747 = vunpack.c.h.b16 %v735
      %v748 = vunpack.c.h.b16 %v736
      %v749 = vunpack.c.h.b16 %v737
      %v750 = vunpack.c.h.b16 %v738
      %v751 = vpack.c.b16 %v744, %v743
      %v752 = vpack.c.b16 %v746, %v745
      %v753 = vpack.c.b16 %v748, %v747
      %v754 = vpack.c.b16 %v750, %v749
      %759 = vst [vmem:[#allocation2 + $0xe0] sm:$0xff] %v751
      %760 = vst [vmem:[#allocation2 + $0xe8] sm:$0xff] %v752
      %761 = vst [vmem:[#allocation2 + $0xf0] sm:$0xff] %v753
      %762 = vst [vmem:[#allocation2 + $0xf8] sm:$0xff] %v754
      %763 = vrot.lane.b32.xlu0 %v329, 19
      %v764 = vpop.permute.xlu0 %763
      %765 = vrot.lane.b32.xlu0 %v333, 19
      %v766 = vpop.permute.xlu0 %765
      %767 = vrot.lane.b32.xlu0 %v330, 19
      %v768 = vpop.permute.xlu0 %767
      %769 = vrot.lane.b32.xlu0 %v334, 19
      %v770 = vpop.permute.xlu0 %769
      %771 = vrot.lane.b32.xlu0 %v331, 19
      %v772 = vpop.permute.xlu0 %771
      %773 = vrot.lane.b32.xlu0 %v335, 19
      %v774 = vpop.permute.xlu0 %773
      %775 = vrot.lane.b32.xlu0 %v332, 19
      %v776 = vpop.permute.xlu0 %775
      %777 = vrot.lane.b32.xlu0 %v336, 19
      %v778 = vpop.permute.xlu0 %777
      %vm779 = vcmp.lt.s32.totalorder %v354, 19
      %v780 = vsel %vm779, %v772, %v776
      %v781 = vsel %vm779, %v774, %v778
      %v782 = vsel %vm779, %v768, %v772
      %v783 = vsel %vm779, %v770, %v774
      %v784 = vsel %vm779, %v764, %v768
      %v785 = vsel %vm779, %v766, %v770
      %v786 = vsel %vm779, %v776, %v764
      %v787 = vsel %vm779, %v778, %v766
      %v788 = vpack.c.bf16 %v787, %v786
      %v789 = vpack.c.bf16 %v785, %v784
      %v790 = vpack.c.bf16 %v783, %v782
      %v791 = vpack.c.bf16 %v781, %v780
      %v796 = vunpack.c.l.b16 %v788
      %v797 = vunpack.c.l.b16 %v789
      %v798 = vunpack.c.l.b16 %v790
      %v799 = vunpack.c.l.b16 %v791
      %v800 = vunpack.c.h.b16 %v788
      %v801 = vunpack.c.h.b16 %v789
      %v802 = vunpack.c.h.b16 %v790
      %v803 = vunpack.c.h.b16 %v791
      %v804 = vpack.c.b16 %v797, %v796
      %v805 = vpack.c.b16 %v799, %v798
      %v806 = vpack.c.b16 %v801, %v800
      %v807 = vpack.c.b16 %v803, %v802
      %812 = vst [vmem:[#allocation2 + $0x100] sm:$0xff] %v804
      %813 = vst [vmem:[#allocation2 + $0x108] sm:$0xff] %v805
      %814 = vst [vmem:[#allocation2 + $0x110] sm:$0xff] %v806
      %815 = vst [vmem:[#allocation2 + $0x118] sm:$0xff] %v807
      %816 = vrot.lane.b32.xlu0 %v329, 18
      %v817 = vpop.permute.xlu0 %816
      %818 = vrot.lane.b32.xlu0 %v333, 18
      %v819 = vpop.permute.xlu0 %818
      %820 = vrot.lane.b32.xlu0 %v330, 18
      %v821 = vpop.permute.xlu0 %820
      %822 = vrot.lane.b32.xlu0 %v334, 18
      %v823 = vpop.permute.xlu0 %822
      %824 = vrot.lane.b32.xlu0 %v331, 18
      %v825 = vpop.permute.xlu0 %824
      %826 = vrot.lane.b32.xlu0 %v335, 18
      %v827 = vpop.permute.xlu0 %826
      %828 = vrot.lane.b32.xlu0 %v332, 18
      %v829 = vpop.permute.xlu0 %828
      %830 = vrot.lane.b32.xlu0 %v336, 18
      %v831 = vpop.permute.xlu0 %830
      %vm832 = vcmp.lt.s32.totalorder %v354, 18
      %v833 = vsel %vm832, %v825, %v829
      %v834 = vsel %vm832, %v827, %v831
      %v835 = vsel %vm832, %v821, %v825
      %v836 = vsel %vm832, %v823, %v827
      %v837 = vsel %vm832, %v817, %v821
      %v838 = vsel %vm832, %v819, %v823
      %v839 = vsel %vm832, %v829, %v817
      %v840 = vsel %vm832, %v831, %v819
      %v841 = vpack.c.bf16 %v840, %v839
      %v842 = vpack.c.bf16 %v838, %v837
      %v843 = vpack.c.bf16 %v836, %v835
      %v844 = vpack.c.bf16 %v834, %v833
      %v849 = vunpack.c.l.b16 %v841
      %v850 = vunpack.c.l.b16 %v842
      %v851 = vunpack.c.l.b16 %v843
      %v852 = vunpack.c.l.b16 %v844
      %v853 = vunpack.c.h.b16 %v841
      %v854 = vunpack.c.h.b16 %v842
      %v855 = vunpack.c.h.b16 %v843
      %v856 = vunpack.c.h.b16 %v844
      %v857 = vpack.c.b16 %v850, %v849
      %v858 = vpack.c.b16 %v852, %v851
      %v859 = vpack.c.b16 %v854, %v853
      %v860 = vpack.c.b16 %v856, %v855
      %865 = vst [vmem:[#allocation2 + $0x120] sm:$0xff] %v857
      %866 = vst [vmem:[#allocation2 + $0x128] sm:$0xff] %v858
      %867 = vst [vmem:[#allocation2 + $0x130] sm:$0xff] %v859
      %868 = vst [vmem:[#allocation2 + $0x138] sm:$0xff] %v860
      %869 = vrot.lane.b32.xlu0 %v329, 2
      %v870 = vpop.permute.xlu0 %869
      %871 = vrot.lane.b32.xlu0 %v333, 2
      %v872 = vpop.permute.xlu0 %871
      %873 = vrot.lane.b32.xlu0 %v330, 2
      %v874 = vpop.permute.xlu0 %873
      %875 = vrot.lane.b32.xlu0 %v334, 2
      %v876 = vpop.permute.xlu0 %875
      %877 = vrot.lane.b32.xlu0 %v331, 2
      %v878 = vpop.permute.xlu0 %877
      %879 = vrot.lane.b32.xlu0 %v335, 2
      %v880 = vpop.permute.xlu0 %879
      %881 = vrot.lane.b32.xlu0 %v332, 2
      %v882 = vpop.permute.xlu0 %881
      %883 = vrot.lane.b32.xlu0 %v336, 2
      %v884 = vpop.permute.xlu0 %883
      %vm885 = vcmp.lt.s32.totalorder %v354, 2
      %v886 = vsel %vm885, %v878, %v882
      %v887 = vsel %vm885, %v880, %v884
      %v888 = vsel %vm885, %v874, %v878
      %v889 = vsel %vm885, %v876, %v880
      %v890 = vsel %vm885, %v870, %v874
      %v891 = vsel %vm885, %v872, %v876
      %v892 = vsel %vm885, %v882, %v870
      %v893 = vsel %vm885, %v884, %v872
      %v894 = vpack.c.bf16 %v893, %v892
      %v895 = vpack.c.bf16 %v891, %v890
      %v896 = vpack.c.bf16 %v889, %v888
      %v897 = vpack.c.bf16 %v887, %v886
      %v902 = vunpack.c.l.b16 %v894
      %v903 = vunpack.c.l.b16 %v895
      %v904 = vunpack.c.l.b16 %v896
      %v905 = vunpack.c.l.b16 %v897
      %v906 = vunpack.c.h.b16 %v894
      %v907 = vunpack.c.h.b16 %v895
      %v908 = vunpack.c.h.b16 %v896
      %v909 = vunpack.c.h.b16 %v897
      %v910 = vpack.c.b16 %v903, %v902
      %v911 = vpack.c.b16 %v905, %v904
      %v912 = vpack.c.b16 %v907, %v906
      %v913 = vpack.c.b16 %v909, %v908
      %918 = vst [vmem:[#allocation2 + $0x140] sm:$0xff] %v910
      %919 = vst [vmem:[#allocation2 + $0x148] sm:$0xff] %v911
      %920 = vst [vmem:[#allocation2 + $0x150] sm:$0xff] %v912
      %921 = vst [vmem:[#allocation2 + $0x158] sm:$0xff] %v913
      %922 = vrot.lane.b32.xlu0 %v329, 1
      %v923 = vpop.permute.xlu0 %922
      %924 = vrot.lane.b32.xlu0 %v333, 1
      %v925 = vpop.permute.xlu0 %924
      %926 = vrot.lane.b32.xlu0 %v330, 1
      %v927 = vpop.permute.xlu0 %926
      %928 = vrot.lane.b32.xlu0 %v334, 1
      %v929 = vpop.permute.xlu0 %928
      %930 = vrot.lane.b32.xlu0 %v331, 1
      %v931 = vpop.permute.xlu0 %930
      %932 = vrot.lane.b32.xlu0 %v335, 1
      %v933 = vpop.permute.xlu0 %932
      %934 = vrot.lane.b32.xlu0 %v332, 1
      %v935 = vpop.permute.xlu0 %934
      %936 = vrot.lane.b32.xlu0 %v336, 1
      %v937 = vpop.permute.xlu0 %936
      %vm938 = vcmp.lt.s32.totalorder %v354, 1
      %v939 = vsel %vm938, %v931, %v935
      %v940 = vsel %vm938, %v933, %v937
      %v941 = vsel %vm938, %v927, %v931
      %v942 = vsel %vm938, %v929, %v933
      %v943 = vsel %vm938, %v923, %v927
      %v944 = vsel %vm938, %v925, %v929
      %v945 = vsel %vm938, %v935, %v923
      %v946 = vsel %vm938, %v937, %v925
      %v947 = vpack.c.bf16 %v946, %v945
      %v948 = vpack.c.bf16 %v944, %v943
      %v949 = vpack.c.bf16 %v942, %v941
      %v950 = vpack.c.bf16 %v940, %v939
      %v955 = vunpack.c.l.b16 %v947
      %v956 = vunpack.c.l.b16 %v948
      %v957 = vunpack.c.l.b16 %v949
      %v958 = vunpack.c.l.b16 %v950
      %v959 = vunpack.c.h.b16 %v947
      %v960 = vunpack.c.h.b16 %v948
      %v961 = vunpack.c.h.b16 %v949
      %v962 = vunpack.c.h.b16 %v950
      %v963 = vpack.c.b16 %v956, %v955
      %v964 = vpack.c.b16 %v958, %v957
      %v965 = vpack.c.b16 %v960, %v959
      %v966 = vpack.c.b16 %v962, %v961
      %971 = vst [vmem:[#allocation2 + $0x160] sm:$0xff] %v963
      %972 = vst [vmem:[#allocation2 + $0x168] sm:$0xff] %v964
      %973 = vst [vmem:[#allocation2 + $0x170] sm:$0xff] %v965
      %974 = vst [vmem:[#allocation2 + $0x178] sm:$0xff] %v966
      %v975 = vpack.c.bf16 %v333, %v329
      %v976 = vpack.c.bf16 %v334, %v330
      %v977 = vpack.c.bf16 %v335, %v331
      %v978 = vpack.c.bf16 %v336, %v332
      %v983 = vunpack.c.l.b16 %v975
      %v984 = vunpack.c.l.b16 %v976
      %v985 = vunpack.c.l.b16 %v977
      %v986 = vunpack.c.l.b16 %v978
      %v987 = vunpack.c.h.b16 %v975
      %v988 = vunpack.c.h.b16 %v976
      %v989 = vunpack.c.h.b16 %v977
      %v990 = vunpack.c.h.b16 %v978
      %v991 = vpack.c.b16 %v984, %v983
      %v992 = vpack.c.b16 %v986, %v985
      %v993 = vpack.c.b16 %v988, %v987
      %v994 = vpack.c.b16 %v990, %v989
      %999 = vst [vmem:[#allocation2 + $0x180] sm:$0xff] %v991
      %1000 = vst [vmem:[#allocation2 + $0x188] sm:$0xff] %v992
      %1001 = vst [vmem:[#allocation2 + $0x190] sm:$0xff] %v993
      %1002 = vst [vmem:[#allocation2 + $0x198] sm:$0xff] %v994
      %1003 = vrot.lane.b32.xlu0 %v329, 127
      %v1004 = vpop.permute.xlu0 %1003
      %1005 = vrot.lane.b32.xlu0 %v333, 127
      %v1006 = vpop.permute.xlu0 %1005
      %1007 = vrot.lane.b32.xlu0 %v330, 127
      %v1008 = vpop.permute.xlu0 %1007
      %1009 = vrot.lane.b32.xlu0 %v334, 127
      %v1010 = vpop.permute.xlu0 %1009
      %1011 = vrot.lane.b32.xlu0 %v331, 127
      %v1012 = vpop.permute.xlu0 %1011
      %1013 = vrot.lane.b32.xlu0 %v335, 127
      %v1014 = vpop.permute.xlu0 %1013
      %1015 = vrot.lane.b32.xlu0 %v332, 127
      %v1016 = vpop.permute.xlu0 %1015
      %1017 = vrot.lane.b32.xlu0 %v336, 127
      %v1018 = vpop.permute.xlu0 %1017
      %vm1019 = vcmp.lt.s32.totalorder %v354, 127
      %v1020 = vsel %vm1019, %v1012, %v1016
      %v1021 = vsel %vm1019, %v1014, %v1018
      %v1022 = vsel %vm1019, %v1008, %v1012
      %v1023 = vsel %vm1019, %v1010, %v1014
      %v1024 = vsel %vm1019, %v1004, %v1008
      %v1025 = vsel %vm1019, %v1006, %v1010
      %v1026 = vsel %vm1019, %v1016, %v1004
      %v1027 = vsel %vm1019, %v1018, %v1006
      %v1028 = vpack.c.bf16 %v1025, %v1024
      %v1029 = vpack.c.bf16 %v1023, %v1022
      %v1030 = vpack.c.bf16 %v1021, %v1020
      %v1031 = vpack.c.bf16 %v1027, %v1026
      %v1036 = vunpack.c.l.b16 %v1028
      %v1037 = vunpack.c.l.b16 %v1029
      %v1038 = vunpack.c.l.b16 %v1030
      %v1039 = vunpack.c.l.b16 %v1031
      %v1040 = vunpack.c.h.b16 %v1028
      %v1041 = vunpack.c.h.b16 %v1029
      %v1042 = vunpack.c.h.b16 %v1030
      %v1043 = vunpack.c.h.b16 %v1031
      %v1044 = vpack.c.b16 %v1037, %v1036
      %v1045 = vpack.c.b16 %v1039, %v1038
      %v1046 = vpack.c.b16 %v1041, %v1040
      %v1047 = vpack.c.b16 %v1043, %v1042
      %1052 = vst [vmem:[#allocation2 + $0x1a0] sm:$0xff] %v1044
      %1053 = vst [vmem:[#allocation2 + $0x1a8] sm:$0xff] %v1045
      %1054 = vst [vmem:[#allocation2 + $0x1b0] sm:$0xff] %v1046
      %1055 = vst [vmem:[#allocation2 + $0x1b8] sm:$0xff] %v1047
      %1056 = vrot.lane.b32.xlu0 %v329, 126
      %v1057 = vpop.permute.xlu0 %1056
      %1058 = vrot.lane.b32.xlu0 %v333, 126
      %v1059 = vpop.permute.xlu0 %1058
      %1060 = vrot.lane.b32.xlu0 %v330, 126
      %v1061 = vpop.permute.xlu0 %1060
      %1062 = vrot.lane.b32.xlu0 %v334, 126
      %v1063 = vpop.permute.xlu0 %1062
      %1064 = vrot.lane.b32.xlu0 %v331, 126
      %v1065 = vpop.permute.xlu0 %1064
      %1066 = vrot.lane.b32.xlu0 %v335, 126
      %v1067 = vpop.permute.xlu0 %1066
      %1068 = vrot.lane.b32.xlu0 %v332, 126
      %v1069 = vpop.permute.xlu0 %1068
      %1070 = vrot.lane.b32.xlu0 %v336, 126
      %v1071 = vpop.permute.xlu0 %1070
      %vm1072 = vcmp.lt.s32.totalorder %v354, 126
      %v1073 = vsel %vm1072, %v1065, %v1069
      %v1074 = vsel %vm1072, %v1067, %v1071
      %v1075 = vsel %vm1072, %v1061, %v1065
      %v1076 = vsel %vm1072, %v1063, %v1067
      %v1077 = vsel %vm1072, %v1057, %v1061
      %v1078 = vsel %vm1072, %v1059, %v1063
      %v1079 = vsel %vm1072, %v1069, %v1057
      %v1080 = vsel %vm1072, %v1071, %v1059
      %v1081 = vpack.c.bf16 %v1078, %v1077
      %v1082 = vpack.c.bf16 %v1076, %v1075
      %v1083 = vpack.c.bf16 %v1074, %v1073
      %v1084 = vpack.c.bf16 %v1080, %v1079
      %v1089 = vunpack.c.l.b16 %v1081
      %v1090 = vunpack.c.l.b16 %v1082
      %v1091 = vunpack.c.l.b16 %v1083
      %v1092 = vunpack.c.l.b16 %v1084
      %v1093 = vunpack.c.h.b16 %v1081
      %v1094 = vunpack.c.h.b16 %v1082
      %v1095 = vunpack.c.h.b16 %v1083
      %v1096 = vunpack.c.h.b16 %v1084
      %v1097 = vpack.c.b16 %v1090, %v1089
      %v1098 = vpack.c.b16 %v1092, %v1091
      %v1099 = vpack.c.b16 %v1094, %v1093
      %v1100 = vpack.c.b16 %v1096, %v1095
      %1105 = vst [vmem:[#allocation2 + $0x1c0] sm:$0xff] %v1097
      %1106 = vst [vmem:[#allocation2 + $0x1c8] sm:$0xff] %v1098
      %1107 = vst [vmem:[#allocation2 + $0x1d0] sm:$0xff] %v1099
      %1108 = vst [vmem:[#allocation2 + $0x1d8] sm:$0xff] %v1100
      %1109 = vrot.lane.b32.xlu0 %v329, 110
      %v1110 = vpop.permute.xlu0 %1109
      %1111 = vrot.lane.b32.xlu0 %v333, 110
      %v1112 = vpop.permute.xlu0 %1111
      %1113 = vrot.lane.b32.xlu0 %v330, 110
      %v1114 = vpop.permute.xlu0 %1113
      %1115 = vrot.lane.b32.xlu0 %v334, 110
      %v1116 = vpop.permute.xlu0 %1115
      %1117 = vrot.lane.b32.xlu0 %v331, 110
      %v1118 = vpop.permute.xlu0 %1117
      %1119 = vrot.lane.b32.xlu0 %v335, 110
      %v1120 = vpop.permute.xlu0 %1119
      %1121 = vrot.lane.b32.xlu0 %v332, 110
      %v1122 = vpop.permute.xlu0 %1121
      %1123 = vrot.lane.b32.xlu0 %v336, 110
      %v1124 = vpop.permute.xlu0 %1123
      %vm1125 = vcmp.lt.s32.totalorder %v354, 110
      %v1126 = vsel %vm1125, %v1118, %v1122
      %v1127 = vsel %vm1125, %v1120, %v1124
      %v1128 = vsel %vm1125, %v1114, %v1118
      %v1129 = vsel %vm1125, %v1116, %v1120
      %v1130 = vsel %vm1125, %v1110, %v1114
      %v1131 = vsel %vm1125, %v1112, %v1116
      %v1132 = vsel %vm1125, %v1122, %v1110
      %v1133 = vsel %vm1125, %v1124, %v1112
      %v1134 = vpack.c.bf16 %v1131, %v1130
      %v1135 = vpack.c.bf16 %v1129, %v1128
      %v1136 = vpack.c.bf16 %v1127, %v1126
      %v1137 = vpack.c.bf16 %v1133, %v1132
      %v1142 = vunpack.c.l.b16 %v1134
      %v1143 = vunpack.c.l.b16 %v1135
      %v1144 = vunpack.c.l.b16 %v1136
      %v1145 = vunpack.c.l.b16 %v1137
      %v1146 = vunpack.c.h.b16 %v1134
      %v1147 = vunpack.c.h.b16 %v1135
      %v1148 = vunpack.c.h.b16 %v1136
      %v1149 = vunpack.c.h.b16 %v1137
      %v1150 = vpack.c.b16 %v1143, %v1142
      %v1151 = vpack.c.b16 %v1145, %v1144
      %v1152 = vpack.c.b16 %v1147, %v1146
      %v1153 = vpack.c.b16 %v1149, %v1148
      %1158 = vst [vmem:[#allocation2 + $0x1e0] sm:$0xff] %v1150
      %1159 = vst [vmem:[#allocation2 + $0x1e8] sm:$0xff] %v1151
      %1160 = vst [vmem:[#allocation2 + $0x1f0] sm:$0xff] %v1152
      %1161 = vst [vmem:[#allocation2 + $0x1f8] sm:$0xff] %v1153
      %1162 = vrot.lane.b32.xlu0 %v329, 109
      %v1163 = vpop.permute.xlu0 %1162
      %1164 = vrot.lane.b32.xlu0 %v333, 109
      %v1165 = vpop.permute.xlu0 %1164
      %1166 = vrot.lane.b32.xlu0 %v330, 109
      %v1167 = vpop.permute.xlu0 %1166
      %1168 = vrot.lane.b32.xlu0 %v334, 109
      %v1169 = vpop.permute.xlu0 %1168
      %1170 = vrot.lane.b32.xlu0 %v331, 109
      %v1171 = vpop.permute.xlu0 %1170
      %1172 = vrot.lane.b32.xlu0 %v335, 109
      %v1173 = vpop.permute.xlu0 %1172
      %1174 = vrot.lane.b32.xlu0 %v332, 109
      %v1175 = vpop.permute.xlu0 %1174
      %1176 = vrot.lane.b32.xlu0 %v336, 109
      %v1177 = vpop.permute.xlu0 %1176
      %vm1178 = vcmp.lt.s32.totalorder %v354, 109
      %v1179 = vsel %vm1178, %v1171, %v1175
      %v1180 = vsel %vm1178, %v1173, %v1177
      %v1181 = vsel %vm1178, %v1167, %v1171
      %v1182 = vsel %vm1178, %v1169, %v1173
      %v1183 = vsel %vm1178, %v1163, %v1167
      %v1184 = vsel %vm1178, %v1165, %v1169
      %v1185 = vsel %vm1178, %v1175, %v1163
      %v1186 = vsel %vm1178, %v1177, %v1165
      %v1187 = vpack.c.bf16 %v1184, %v1183
      %v1188 = vpack.c.bf16 %v1182, %v1181
      %v1189 = vpack.c.bf16 %v1180, %v1179
      %v1190 = vpack.c.bf16 %v1186, %v1185
      %v1195 = vunpack.c.l.b16 %v1187
      %v1196 = vunpack.c.l.b16 %v1188
      %v1197 = vunpack.c.l.b16 %v1189
      %v1198 = vunpack.c.l.b16 %v1190
      %v1199 = vunpack.c.h.b16 %v1187
      %v1200 = vunpack.c.h.b16 %v1188
      %v1201 = vunpack.c.h.b16 %v1189
      %v1202 = vunpack.c.h.b16 %v1190
      %v1203 = vpack.c.b16 %v1196, %v1195
      %v1204 = vpack.c.b16 %v1198, %v1197
      %v1205 = vpack.c.b16 %v1200, %v1199
      %v1206 = vpack.c.b16 %v1202, %v1201
      %1211 = vst [vmem:[#allocation2 + $0x200] sm:$0xff] %v1203
      %1212 = vst [vmem:[#allocation2 + $0x208] sm:$0xff] %v1204
      %1213 = vst [vmem:[#allocation2 + $0x210] sm:$0xff] %v1205
      %1214 = vst [vmem:[#allocation2 + $0x218] sm:$0xff] %v1206
      %1215 = vrot.lane.b32.xlu0 %v329, 108
      %v1216 = vpop.permute.xlu0 %1215
      %1217 = vrot.lane.b32.xlu0 %v333, 108
      %v1218 = vpop.permute.xlu0 %1217
      %1219 = vrot.lane.b32.xlu0 %v330, 108
      %v1220 = vpop.permute.xlu0 %1219
      %1221 = vrot.lane.b32.xlu0 %v334, 108
      %v1222 = vpop.permute.xlu0 %1221
      %1223 = vrot.lane.b32.xlu0 %v331, 108
      %v1224 = vpop.permute.xlu0 %1223
      %1225 = vrot.lane.b32.xlu0 %v335, 108
      %v1226 = vpop.permute.xlu0 %1225
      %1227 = vrot.lane.b32.xlu0 %v332, 108
      %v1228 = vpop.permute.xlu0 %1227
      %1229 = vrot.lane.b32.xlu0 %v336, 108
      %v1230 = vpop.permute.xlu0 %1229
      %vm1231 = vcmp.lt.s32.totalorder %v354, 108
      %v1232 = vsel %vm1231, %v1224, %v1228
      %v1233 = vsel %vm1231, %v1226, %v1230
      %v1234 = vsel %vm1231, %v1220, %v1224
      %v1235 = vsel %vm1231, %v1222, %v1226
      %v1236 = vsel %vm1231, %v1216, %v1220
      %v1237 = vsel %vm1231, %v1218, %v1222
      %v1238 = vsel %vm1231, %v1228, %v1216
      %v1239 = vsel %vm1231, %v1230, %v1218
      %v1240 = vpack.c.bf16 %v1237, %v1236
      %v1241 = vpack.c.bf16 %v1235, %v1234
      %v1242 = vpack.c.bf16 %v1233, %v1232
      %v1243 = vpack.c.bf16 %v1239, %v1238
      %v1248 = vunpack.c.l.b16 %v1240
      %v1249 = vunpack.c.l.b16 %v1241
      %v1250 = vunpack.c.l.b16 %v1242
      %v1251 = vunpack.c.l.b16 %v1243
      %v1252 = vunpack.c.h.b16 %v1240
      %v1253 = vunpack.c.h.b16 %v1241
      %v1254 = vunpack.c.h.b16 %v1242
      %v1255 = vunpack.c.h.b16 %v1243
      %v1256 = vpack.c.b16 %v1249, %v1248
      %v1257 = vpack.c.b16 %v1251, %v1250
      %v1258 = vpack.c.b16 %v1253, %v1252
      %v1259 = vpack.c.b16 %v1255, %v1254
      %1264 = vst [vmem:[#allocation2 + $0x220] sm:$0xff] %v1256
      %1265 = vst [vmem:[#allocation2 + $0x228] sm:$0xff] %v1257
      %1266 = vst [vmem:[#allocation2 + $0x230] sm:$0xff] %v1258
      %1267 = vst [vmem:[#allocation2 + $0x238] sm:$0xff] %v1259
      %1268 = vrot.lane.b32.xlu0 %v329, 107
      %v1269 = vpop.permute.xlu0 %1268
      %1270 = vrot.lane.b32.xlu0 %v333, 107
      %v1271 = vpop.permute.xlu0 %1270
      %1272 = vrot.lane.b32.xlu0 %v330, 107
      %v1273 = vpop.permute.xlu0 %1272
      %1274 = vrot.lane.b32.xlu0 %v334, 107
      %v1275 = vpop.permute.xlu0 %1274
      %1276 = vrot.lane.b32.xlu0 %v331, 107
      %v1277 = vpop.permute.xlu0 %1276
      %1278 = vrot.lane.b32.xlu0 %v335, 107
      %v1279 = vpop.permute.xlu0 %1278
      %1280 = vrot.lane.b32.xlu0 %v332, 107
      %v1281 = vpop.permute.xlu0 %1280
      %1282 = vrot.lane.b32.xlu0 %v336, 107
      %v1283 = vpop.permute.xlu0 %1282
      %vm1284 = vcmp.lt.s32.totalorder %v354, 107
      %v1285 = vsel %vm1284, %v1277, %v1281
      %v1286 = vsel %vm1284, %v1279, %v1283
      %v1287 = vsel %vm1284, %v1273, %v1277
      %v1288 = vsel %vm1284, %v1275, %v1279
      %v1289 = vsel %vm1284, %v1269, %v1273
      %v1290 = vsel %vm1284, %v1271, %v1275
      %v1291 = vsel %vm1284, %v1281, %v1269
      %v1292 = vsel %vm1284, %v1283, %v1271
      %v1293 = vpack.c.bf16 %v1290, %v1289
      %v1294 = vpack.c.bf16 %v1288, %v1287
      %v1295 = vpack.c.bf16 %v1286, %v1285
      %v1296 = vpack.c.bf16 %v1292, %v1291
      %v1301 = vunpack.c.l.b16 %v1293
      %v1302 = vunpack.c.l.b16 %v1294
      %v1303 = vunpack.c.l.b16 %v1295
      %v1304 = vunpack.c.l.b16 %v1296
      %v1305 = vunpack.c.h.b16 %v1293
      %v1306 = vunpack.c.h.b16 %v1294
      %v1307 = vunpack.c.h.b16 %v1295
      %v1308 = vunpack.c.h.b16 %v1296
      %v1309 = vpack.c.b16 %v1302, %v1301
      %v1310 = vpack.c.b16 %v1304, %v1303
      %v1311 = vpack.c.b16 %v1306, %v1305
      %v1312 = vpack.c.b16 %v1308, %v1307
      %1317 = vst [vmem:[#allocation2 + $0x240] sm:$0xff] %v1309
      %1318 = vst [vmem:[#allocation2 + $0x248] sm:$0xff] %v1310
      %1319 = vst [vmem:[#allocation2 + $0x250] sm:$0xff] %v1311
      %1320 = vst [vmem:[#allocation2 + $0x258] sm:$0xff] %v1312
      %1321 = vrot.lane.b32.xlu0 %v329, 106
      %v1322 = vpop.permute.xlu0 %1321
      %1323 = vrot.lane.b32.xlu0 %v333, 106
      %v1324 = vpop.permute.xlu0 %1323
      %1325 = vrot.lane.b32.xlu0 %v330, 106
      %v1326 = vpop.permute.xlu0 %1325
      %1327 = vrot.lane.b32.xlu0 %v334, 106
      %v1328 = vpop.permute.xlu0 %1327
      %1329 = vrot.lane.b32.xlu0 %v331, 106
      %v1330 = vpop.permute.xlu0 %1329
      %1331 = vrot.lane.b32.xlu0 %v335, 106
      %v1332 = vpop.permute.xlu0 %1331
      %1333 = vrot.lane.b32.xlu0 %v332, 106
      %v1334 = vpop.permute.xlu0 %1333
      %1335 = vrot.lane.b32.xlu0 %v336, 106
      %v1336 = vpop.permute.xlu0 %1335
      %vm1337 = vcmp.lt.s32.totalorder %v354, 106
      %v1338 = vsel %vm1337, %v1330, %v1334
      %v1339 = vsel %vm1337, %v1332, %v1336
      %v1340 = vsel %vm1337, %v1326, %v1330
      %v1341 = vsel %vm1337, %v1328, %v1332
      %v1342 = vsel %vm1337, %v1322, %v1326
      %v1343 = vsel %vm1337, %v1324, %v1328
      %v1344 = vsel %vm1337, %v1334, %v1322
      %v1345 = vsel %vm1337, %v1336, %v1324
      %v1346 = vpack.c.bf16 %v1343, %v1342
      %v1347 = vpack.c.bf16 %v1341, %v1340
      %v1348 = vpack.c.bf16 %v1339, %v1338
      %v1349 = vpack.c.bf16 %v1345, %v1344
      %v1354 = vunpack.c.l.b16 %v1346
      %v1355 = vunpack.c.l.b16 %v1347
      %v1356 = vunpack.c.l.b16 %v1348
      %v1357 = vunpack.c.l.b16 %v1349
      %v1358 = vunpack.c.h.b16 %v1346
      %v1359 = vunpack.c.h.b16 %v1347
      %v1360 = vunpack.c.h.b16 %v1348
      %v1361 = vunpack.c.h.b16 %v1349
      %v1362 = vpack.c.b16 %v1355, %v1354
      %v1363 = vpack.c.b16 %v1357, %v1356
      %v1364 = vpack.c.b16 %v1359, %v1358
      %v1365 = vpack.c.b16 %v1361, %v1360
      %1370 = vst [vmem:[#allocation2 + $0x260] sm:$0xff] %v1362
      %1371 = vst [vmem:[#allocation2 + $0x268] sm:$0xff] %v1363
      %1372 = vst [vmem:[#allocation2 + $0x270] sm:$0xff] %v1364
      %1373 = vst [vmem:[#allocation2 + $0x278] sm:$0xff] %v1365
      %1374 = vrot.lane.b32.xlu0 %v329, 90
      %v1375 = vpop.permute.xlu0 %1374
      %1376 = vrot.lane.b32.xlu0 %v333, 90
      %v1377 = vpop.permute.xlu0 %1376
      %1378 = vrot.lane.b32.xlu0 %v330, 90
      %v1379 = vpop.permute.xlu0 %1378
      %1380 = vrot.lane.b32.xlu0 %v334, 90
      %v1381 = vpop.permute.xlu0 %1380
      %1382 = vrot.lane.b32.xlu0 %v331, 90
      %v1383 = vpop.permute.xlu0 %1382
      %1384 = vrot.lane.b32.xlu0 %v335, 90
      %v1385 = vpop.permute.xlu0 %1384
      %1386 = vrot.lane.b32.xlu0 %v332, 90
      %v1387 = vpop.permute.xlu0 %1386
      %1388 = vrot.lane.b32.xlu0 %v336, 90
      %v1389 = vpop.permute.xlu0 %1388
      %vm1390 = vcmp.lt.s32.totalorder %v354, 90
      %v1391 = vsel %vm1390, %v1383, %v1387
      %v1392 = vsel %vm1390, %v1385, %v1389
      %v1393 = vsel %vm1390, %v1379, %v1383
      %v1394 = vsel %vm1390, %v1381, %v1385
      %v1395 = vsel %vm1390, %v1375, %v1379
      %v1396 = vsel %vm1390, %v1377, %v1381
      %v1397 = vsel %vm1390, %v1387, %v1375
      %v1398 = vsel %vm1390, %v1389, %v1377
      %v1399 = vpack.c.bf16 %v1396, %v1395
      %v1400 = vpack.c.bf16 %v1394, %v1393
      %v1401 = vpack.c.bf16 %v1392, %v1391
      %v1402 = vpack.c.bf16 %v1398, %v1397
      %v1407 = vunpack.c.l.b16 %v1399
      %v1408 = vunpack.c.l.b16 %v1400
      %v1409 = vunpack.c.l.b16 %v1401
      %v1410 = vunpack.c.l.b16 %v1402
      %v1411 = vunpack.c.h.b16 %v1399
      %v1412 = vunpack.c.h.b16 %v1400
      %v1413 = vunpack.c.h.b16 %v1401
      %v1414 = vunpack.c.h.b16 %v1402
      %v1415 = vpack.c.b16 %v1408, %v1407
      %v1416 = vpack.c.b16 %v1410, %v1409
      %v1417 = vpack.c.b16 %v1412, %v1411
      %v1418 = vpack.c.b16 %v1414, %v1413
      %1423 = vst [vmem:[#allocation2 + $0x280] sm:$0xff] %v1415
      %1424 = vst [vmem:[#allocation2 + $0x288] sm:$0xff] %v1416
      %1425 = vst [vmem:[#allocation2 + $0x290] sm:$0xff] %v1417
      %1426 = vst [vmem:[#allocation2 + $0x298] sm:$0xff] %v1418
      %1427 = vrot.lane.b32.xlu0 %v329, 89
      %v1428 = vpop.permute.xlu0 %1427
      %1429 = vrot.lane.b32.xlu0 %v333, 89
      %v1430 = vpop.permute.xlu0 %1429
      %1431 = vrot.lane.b32.xlu0 %v330, 89
      %v1432 = vpop.permute.xlu0 %1431
      %1433 = vrot.lane.b32.xlu0 %v334, 89
      %v1434 = vpop.permute.xlu0 %1433
      %1435 = vrot.lane.b32.xlu0 %v331, 89
      %v1436 = vpop.permute.xlu0 %1435
      %1437 = vrot.lane.b32.xlu0 %v335, 89
      %v1438 = vpop.permute.xlu0 %1437
      %1439 = vrot.lane.b32.xlu0 %v332, 89
      %v1440 = vpop.permute.xlu0 %1439
      %1441 = vrot.lane.b32.xlu0 %v336, 89
      %v1442 = vpop.permute.xlu0 %1441
      %vm1443 = vcmp.lt.s32.totalorder %v354, 89
      %v1444 = vsel %vm1443, %v1436, %v1440
      %v1445 = vsel %vm1443, %v1438, %v1442
      %v1446 = vsel %vm1443, %v1432, %v1436
      %v1447 = vsel %vm1443, %v1434, %v1438
      %v1448 = vsel %vm1443, %v1428, %v1432
      %v1449 = vsel %vm1443, %v1430, %v1434
      %v1450 = vsel %vm1443, %v1440, %v1428
      %v1451 = vsel %vm1443, %v1442, %v1430
      %v1452 = vpack.c.bf16 %v1449, %v1448
      %v1453 = vpack.c.bf16 %v1447, %v1446
      %v1454 = vpack.c.bf16 %v1445, %v1444
      %v1455 = vpack.c.bf16 %v1451, %v1450
      %v1460 = vunpack.c.l.b16 %v1452
      %v1461 = vunpack.c.l.b16 %v1453
      %v1462 = vunpack.c.l.b16 %v1454
      %v1463 = vunpack.c.l.b16 %v1455
      %v1464 = vunpack.c.h.b16 %v1452
      %v1465 = vunpack.c.h.b16 %v1453
      %v1466 = vunpack.c.h.b16 %v1454
      %v1467 = vunpack.c.h.b16 %v1455
      %v1468 = vpack.c.b16 %v1461, %v1460
      %v1469 = vpack.c.b16 %v1463, %v1462
      %v1470 = vpack.c.b16 %v1465, %v1464
      %v1471 = vpack.c.b16 %v1467, %v1466
      %1476 = vst [vmem:[#allocation2 + $0x2a0] sm:$0xff] %v1468
      %1477 = vst [vmem:[#allocation2 + $0x2a8] sm:$0xff] %v1469
      %1478 = vst [vmem:[#allocation2 + $0x2b0] sm:$0xff] %v1470
      %1479 = vst [vmem:[#allocation2 + $0x2b8] sm:$0xff] %v1471
      %1480 = vrot.lane.b32.xlu0 %v329, 88
      %v1481 = vpop.permute.xlu0 %1480
      %1482 = vrot.lane.b32.xlu0 %v333, 88
      %v1483 = vpop.permute.xlu0 %1482
      %1484 = vrot.lane.b32.xlu0 %v330, 88
      %v1485 = vpop.permute.xlu0 %1484
      %1486 = vrot.lane.b32.xlu0 %v334, 88
      %v1487 = vpop.permute.xlu0 %1486
      %1488 = vrot.lane.b32.xlu0 %v331, 88
      %v1489 = vpop.permute.xlu0 %1488
      %1490 = vrot.lane.b32.xlu0 %v335, 88
      %v1491 = vpop.permute.xlu0 %1490
      %1492 = vrot.lane.b32.xlu0 %v332, 88
      %v1493 = vpop.permute.xlu0 %1492
      %1494 = vrot.lane.b32.xlu0 %v336, 88
      %v1495 = vpop.permute.xlu0 %1494
      %vm1496 = vcmp.lt.s32.totalorder %v354, 88
      %v1497 = vsel %vm1496, %v1489, %v1493
      %v1498 = vsel %vm1496, %v1491, %v1495
      %v1499 = vsel %vm1496, %v1485, %v1489
      %v1500 = vsel %vm1496, %v1487, %v1491
      %v1501 = vsel %vm1496, %v1481, %v1485
      %v1502 = vsel %vm1496, %v1483, %v1487
      %v1503 = vsel %vm1496, %v1493, %v1481
      %v1504 = vsel %vm1496, %v1495, %v1483
      %v1505 = vpack.c.bf16 %v1502, %v1501
      %v1506 = vpack.c.bf16 %v1500, %v1499
      %v1507 = vpack.c.bf16 %v1498, %v1497
      %v1508 = vpack.c.bf16 %v1504, %v1503
      %v1513 = vunpack.c.l.b16 %v1505
      %v1514 = vunpack.c.l.b16 %v1506
      %v1515 = vunpack.c.l.b16 %v1507
      %v1516 = vunpack.c.l.b16 %v1508
      %v1517 = vunpack.c.h.b16 %v1505
      %v1518 = vunpack.c.h.b16 %v1506
      %v1519 = vunpack.c.h.b16 %v1507
      %v1520 = vunpack.c.h.b16 %v1508
      %v1521 = vpack.c.b16 %v1514, %v1513
      %v1522 = vpack.c.b16 %v1516, %v1515
      %v1523 = vpack.c.b16 %v1518, %v1517
      %v1524 = vpack.c.b16 %v1520, %v1519
      %1529 = vst [vmem:[#allocation2 + $0x2c0] sm:$0xff] %v1521
      %1530 = vst [vmem:[#allocation2 + $0x2c8] sm:$0xff] %v1522
      %1531 = vst [vmem:[#allocation2 + $0x2d0] sm:$0xff] %v1523
      %1532 = vst [vmem:[#allocation2 + $0x2d8] sm:$0xff] %v1524
      %1533 = vrot.lane.b32.xlu0 %v329, 87
      %v1534 = vpop.permute.xlu0 %1533
      %1535 = vrot.lane.b32.xlu0 %v333, 87
      %v1536 = vpop.permute.xlu0 %1535
      %1537 = vrot.lane.b32.xlu0 %v330, 87
      %v1538 = vpop.permute.xlu0 %1537
      %1539 = vrot.lane.b32.xlu0 %v334, 87
      %v1540 = vpop.permute.xlu0 %1539
      %1541 = vrot.lane.b32.xlu0 %v331, 87
      %v1542 = vpop.permute.xlu0 %1541
      %1543 = vrot.lane.b32.xlu0 %v335, 87
      %v1544 = vpop.permute.xlu0 %1543
      %1545 = vrot.lane.b32.xlu0 %v332, 87
      %v1546 = vpop.permute.xlu0 %1545
      %1547 = vrot.lane.b32.xlu0 %v336, 87
      %v1548 = vpop.permute.xlu0 %1547
      %vm1549 = vcmp.lt.s32.totalorder %v354, 87
      %v1550 = vsel %vm1549, %v1542, %v1546
      %v1551 = vsel %vm1549, %v1544, %v1548
      %v1552 = vsel %vm1549, %v1538, %v1542
      %v1553 = vsel %vm1549, %v1540, %v1544
      %v1554 = vsel %vm1549, %v1534, %v1538
      %v1555 = vsel %vm1549, %v1536, %v1540
      %v1556 = vsel %vm1549, %v1546, %v1534
      %v1557 = vsel %vm1549, %v1548, %v1536
      %v1558 = vpack.c.bf16 %v1555, %v1554
      %v1559 = vpack.c.bf16 %v1553, %v1552
      %v1560 = vpack.c.bf16 %v1551, %v1550
      %v1561 = vpack.c.bf16 %v1557, %v1556
      %v1566 = vunpack.c.l.b16 %v1558
      %v1567 = vunpack.c.l.b16 %v1559
      %v1568 = vunpack.c.l.b16 %v1560
      %v1569 = vunpack.c.l.b16 %v1561
      %v1570 = vunpack.c.h.b16 %v1558
      %v1571 = vunpack.c.h.b16 %v1559
      %v1572 = vunpack.c.h.b16 %v1560
      %v1573 = vunpack.c.h.b16 %v1561
      %v1574 = vpack.c.b16 %v1567, %v1566
      %v1575 = vpack.c.b16 %v1569, %v1568
      %v1576 = vpack.c.b16 %v1571, %v1570
      %v1577 = vpack.c.b16 %v1573, %v1572
      %1582 = vst [vmem:[#allocation2 + $0x2e0] sm:$0xff] %v1574
      %1583 = vst [vmem:[#allocation2 + $0x2e8] sm:$0xff] %v1575
      %1584 = vst [vmem:[#allocation2 + $0x2f0] sm:$0xff] %v1576
      %1585 = vst [vmem:[#allocation2 + $0x2f8] sm:$0xff] %v1577
      %1586 = vrot.lane.b32.xlu0 %v329, 86
      %v1587 = vpop.permute.xlu0 %1586
      %1588 = vrot.lane.b32.xlu0 %v333, 86
      %v1589 = vpop.permute.xlu0 %1588
      %1590 = vrot.lane.b32.xlu0 %v330, 86
      %v1591 = vpop.permute.xlu0 %1590
      %1592 = vrot.lane.b32.xlu0 %v334, 86
      %v1593 = vpop.permute.xlu0 %1592
      %1594 = vrot.lane.b32.xlu0 %v331, 86
      %v1595 = vpop.permute.xlu0 %1594
      %1596 = vrot.lane.b32.xlu0 %v335, 86
      %v1597 = vpop.permute.xlu0 %1596
      %1598 = vrot.lane.b32.xlu0 %v332, 86
      %v1599 = vpop.permute.xlu0 %1598
      %1600 = vrot.lane.b32.xlu0 %v336, 86
      %v1601 = vpop.permute.xlu0 %1600
      %vm1602 = vcmp.lt.s32.totalorder %v354, 86
      %v1603 = vsel %vm1602, %v1595, %v1599
      %v1604 = vsel %vm1602, %v1597, %v1601
      %v1605 = vsel %vm1602, %v1591, %v1595
      %v1606 = vsel %vm1602, %v1593, %v1597
      %v1607 = vsel %vm1602, %v1587, %v1591
      %v1608 = vsel %vm1602, %v1589, %v1593
      %v1609 = vsel %vm1602, %v1599, %v1587
      %v1610 = vsel %vm1602, %v1601, %v1589
      %v1611 = vpack.c.bf16 %v1608, %v1607
      %v1612 = vpack.c.bf16 %v1606, %v1605
      %v1613 = vpack.c.bf16 %v1604, %v1603
      %v1614 = vpack.c.bf16 %v1610, %v1609
      %v1619 = vunpack.c.l.b16 %v1611
      %v1620 = vunpack.c.l.b16 %v1612
      %v1621 = vunpack.c.l.b16 %v1613
      %v1622 = vunpack.c.l.b16 %v1614
      %v1623 = vunpack.c.h.b16 %v1611
      %v1624 = vunpack.c.h.b16 %v1612
      %v1625 = vunpack.c.h.b16 %v1613
      %v1626 = vunpack.c.h.b16 %v1614
      %v1627 = vpack.c.b16 %v1620, %v1619
      %v1628 = vpack.c.b16 %v1622, %v1621
      %v1629 = vpack.c.b16 %v1624, %v1623
      %v1630 = vpack.c.b16 %v1626, %v1625
      %1635 = vst [vmem:[#allocation2 + $0x300] sm:$0xff] %v1627
      %1636 = vst [vmem:[#allocation2 + $0x308] sm:$0xff] %v1628
      %1637 = vst [vmem:[#allocation2 + $0x310] sm:$0xff] %v1629
      %1638 = vst [vmem:[#allocation2 + $0x318] sm:$0xff] %v1630
      %v1639 = vld [vmem:[%s2] sm:$0xff]
      %v1640 = vld [vmem:[%s2 + $0x8] sm:$0xff]
      %v1641 = vld [vmem:[%s2 + $0x10] sm:$0xff]
      %v1642 = vld [vmem:[%s2 + $0x18] sm:$0xff]
      %v1643 = vld [vmem:[#allocation2] sm:$0xff]
      %v1644 = vld [vmem:[#allocation2 + $0x8] sm:$0xff]
      %v1645 = vld [vmem:[#allocation2 + $0x10] sm:$0xff]
      %v1646 = vld [vmem:[#allocation2 + $0x18] sm:$0xff]
      %v1647 = vld [vmem:[#allocation2 + $0x20] sm:$0xff]
      %v1648 = vld [vmem:[#allocation2 + $0x28] sm:$0xff]
      %v1649 = vld [vmem:[#allocation2 + $0x30] sm:$0xff]
      %v1650 = vld [vmem:[#allocation2 + $0x38] sm:$0xff]
      %v1651 = vld [vmem:[#allocation2 + $0x40] sm:$0xff]
      %v1652 = vld [vmem:[#allocation2 + $0x48] sm:$0xff]
      %v1653 = vld [vmem:[#allocation2 + $0x50] sm:$0xff]
      %v1654 = vld [vmem:[#allocation2 + $0x58] sm:$0xff]
      %v1655 = vld [vmem:[#allocation2 + $0x60] sm:$0xff]
      %v1656 = vld [vmem:[#allocation2 + $0x68] sm:$0xff]
      %v1657 = vld [vmem:[#allocation2 + $0x70] sm:$0xff]
      %v1658 = vld [vmem:[#allocation2 + $0x78] sm:$0xff]
      %v1659 = vld [vmem:[#allocation2 + $0x80] sm:$0xff]
      %v1660 = vld [vmem:[#allocation2 + $0x88] sm:$0xff]
      %v1661 = vld [vmem:[#allocation2 + $0x90] sm:$0xff]
      %v1662 = vld [vmem:[#allocation2 + $0x98] sm:$0xff]
      %v1663 = vld [vmem:[#allocation2 + $0xa0] sm:$0xff]
      %v1664 = vld [vmem:[#allocation2 + $0xa8] sm:$0xff]
      %v1665 = vld [vmem:[#allocation2 + $0xb0] sm:$0xff]
      %v1666 = vld [vmem:[#allocation2 + $0xb8] sm:$0xff]
      %v1667 = vld [vmem:[#allocation2 + $0xc0] sm:$0xff]
      %v1668 = vld [vmem:[#allocation2 + $0xc8] sm:$0xff]
      %v1669 = vld [vmem:[#allocation2 + $0xd0] sm:$0xff]
      %v1670 = vld [vmem:[#allocation2 + $0xd8] sm:$0xff]
      %v1671 = vld [vmem:[#allocation2 + $0xe0] sm:$0xff]
      %v1672 = vld [vmem:[#allocation2 + $0xe8] sm:$0xff]
      %v1673 = vld [vmem:[#allocation2 + $0xf0] sm:$0xff]
      %v1674 = vld [vmem:[#allocation2 + $0xf8] sm:$0xff]
      %v1675 = vld [vmem:[#allocation2 + $0x100] sm:$0xff]
      %v1676 = vld [vmem:[#allocation2 + $0x108] sm:$0xff]
      %v1677 = vld [vmem:[#allocation2 + $0x110] sm:$0xff]
      %v1678 = vld [vmem:[#allocation2 + $0x118] sm:$0xff]
      %v1679 = vld [vmem:[#allocation2 + $0x120] sm:$0xff]
      %v1680 = vld [vmem:[#allocation2 + $0x128] sm:$0xff]
      %v1681 = vld [vmem:[#allocation2 + $0x130] sm:$0xff]
      %v1682 = vld [vmem:[#allocation2 + $0x138] sm:$0xff]
      %v1683 = vld [vmem:[#allocation2 + $0x140] sm:$0xff]
      %v1684 = vld [vmem:[#allocation2 + $0x148] sm:$0xff]
      %v1685 = vld [vmem:[#allocation2 + $0x150] sm:$0xff]
      %v1686 = vld [vmem:[#allocation2 + $0x158] sm:$0xff]
      %v1687 = vld [vmem:[#allocation2 + $0x160] sm:$0xff]
      %v1688 = vld [vmem:[#allocation2 + $0x168] sm:$0xff]
      %v1689 = vld [vmem:[#allocation2 + $0x170] sm:$0xff]
      %v1690 = vld [vmem:[#allocation2 + $0x178] sm:$0xff]
      %v1691 = vld [vmem:[#allocation2 + $0x180] sm:$0xff]
      %v1692 = vld [vmem:[#allocation2 + $0x188] sm:$0xff]
      %v1693 = vld [vmem:[#allocation2 + $0x190] sm:$0xff]
      %v1694 = vld [vmem:[#allocation2 + $0x198] sm:$0xff]
      %v1695 = vld [vmem:[#allocation2 + $0x1a0] sm:$0xff]
      %v1696 = vld [vmem:[#allocation2 + $0x1a8] sm:$0xff]
      %v1697 = vld [vmem:[#allocation2 + $0x1b0] sm:$0xff]
      %v1698 = vld [vmem:[#allocation2 + $0x1b8] sm:$0xff]
      %v1699 = vld [vmem:[#allocation2 + $0x1c0] sm:$0xff]
      %v1700 = vld [vmem:[#allocation2 + $0x1c8] sm:$0xff]
      %v1701 = vld [vmem:[#allocation2 + $0x1d0] sm:$0xff]
      %v1702 = vld [vmem:[#allocation2 + $0x1d8] sm:$0xff]
      %v1703 = vld [vmem:[#allocation2 + $0x1e0] sm:$0xff]
      %v1704 = vld [vmem:[#allocation2 + $0x1e8] sm:$0xff]
      %v1705 = vld [vmem:[#allocation2 + $0x1f0] sm:$0xff]
      %v1706 = vld [vmem:[#allocation2 + $0x1f8] sm:$0xff]
      %v1707 = vld [vmem:[#allocation2 + $0x200] sm:$0xff]
      %v1708 = vld [vmem:[#allocation2 + $0x208] sm:$0xff]
      %v1709 = vld [vmem:[#allocation2 + $0x210] sm:$0xff]
      %v1710 = vld [vmem:[#allocation2 + $0x218] sm:$0xff]
      %v1711 = vld [vmem:[#allocation2 + $0x220] sm:$0xff]
      %v1712 = vld [vmem:[#allocation2 + $0x228] sm:$0xff]
      %v1713 = vld [vmem:[#allocation2 + $0x230] sm:$0xff]
      %v1714 = vld [vmem:[#allocation2 + $0x238] sm:$0xff]
      %v1715 = vld [vmem:[#allocation2 + $0x240] sm:$0xff]
      %v1716 = vld [vmem:[#allocation2 + $0x248] sm:$0xff]
      %v1717 = vld [vmem:[#allocation2 + $0x250] sm:$0xff]
      %v1718 = vld [vmem:[#allocation2 + $0x258] sm:$0xff]
      %v1719 = vld [vmem:[#allocation2 + $0x260] sm:$0xff]
      %v1720 = vld [vmem:[#allocation2 + $0x268] sm:$0xff]
      %v1721 = vld [vmem:[#allocation2 + $0x270] sm:$0xff]
      %v1722 = vld [vmem:[#allocation2 + $0x278] sm:$0xff]
      %v1723 = vld [vmem:[#allocation2 + $0x280] sm:$0xff]
      %v1724 = vld [vmem:[#allocation2 + $0x288] sm:$0xff]
      %v1725 = vld [vmem:[#allocation2 + $0x290] sm:$0xff]
      %v1726 = vld [vmem:[#allocation2 + $0x298] sm:$0xff]
      %v1727 = vld [vmem:[#allocation2 + $0x2a0] sm:$0xff]
      %v1728 = vld [vmem:[#allocation2 + $0x2a8] sm:$0xff]
      %v1729 = vld [vmem:[#allocation2 + $0x2b0] sm:$0xff]
      %v1730 = vld [vmem:[#allocation2 + $0x2b8] sm:$0xff]
      %v1731 = vld [vmem:[#allocation2 + $0x2c0] sm:$0xff]
      %v1732 = vld [vmem:[#allocation2 + $0x2c8] sm:$0xff]
      %v1733 = vld [vmem:[#allocation2 + $0x2d0] sm:$0xff]
      %v1734 = vld [vmem:[#allocation2 + $0x2d8] sm:$0xff]
      %v1735 = vld [vmem:[#allocation2 + $0x2e0] sm:$0xff]
      %v1736 = vld [vmem:[#allocation2 + $0x2e8] sm:$0xff]
      %v1737 = vld [vmem:[#allocation2 + $0x2f0] sm:$0xff]
      %v1738 = vld [vmem:[#allocation2 + $0x2f8] sm:$0xff]
      %v1739 = vld [vmem:[#allocation2 + $0x300] sm:$0xff]
      %v1740 = vld [vmem:[#allocation2 + $0x308] sm:$0xff]
      %v1741 = vld [vmem:[#allocation2 + $0x310] sm:$0xff]
      %v1742 = vld [vmem:[#allocation2 + $0x318] sm:$0xff]
      %v1743 = vld [vmem:[%s3] sm:$0xff]
      %v1744 = vld [vmem:[%s3 + $0x8] sm:$0xff]
      %1746 = vset.pattern.permute.xlu0 0
      %1747 = vperm.xlu0 %1746, %v1743
      %v1748 = vpop.permute.xlu0 %1747
      %1751 = vset.pattern.permute.xlu0 0
      %1752 = vperm.xlu0 %1751, %v1744
      %v1753 = vpop.permute.xlu0 %1752
      %v1759 = vunpack.c.l.b16 %v1639
      %v1760 = vunpack.c.h.b16 %v1639
      %v1761 = vunpack.c.l.b16 %v1640
      %v1762 = vunpack.c.h.b16 %v1640
      %v1763 = vunpack.c.l.b16 %v1641
      %v1764 = vunpack.c.h.b16 %v1641
      %v1765 = vunpack.c.l.b16 %v1642
      %v1766 = vunpack.c.h.b16 %v1642
      %v1767 = vpack.c.b16 %v1763, %v1759
      %v1768 = vpack.c.b16 %v1764, %v1760
      %v1769 = vpack.c.b16 %v1765, %v1761
      %v1770 = vpack.c.b16 %v1766, %v1762
      %v1874 = vunpack.c.l.b16 %v1643
      %v1875 = vunpack.c.h.b16 %v1643
      %v1876 = vunpack.c.l.b16 %v1644
      %v1877 = vunpack.c.h.b16 %v1644
      %v1878 = vunpack.c.l.b16 %v1645
      %v1879 = vunpack.c.h.b16 %v1645
      %v1880 = vunpack.c.l.b16 %v1646
      %v1881 = vunpack.c.h.b16 %v1646
      %v1882 = vunpack.c.l.b16 %v1647
      %v1883 = vunpack.c.h.b16 %v1647
      %v1884 = vunpack.c.l.b16 %v1648
      %v1885 = vunpack.c.h.b16 %v1648
      %v1886 = vunpack.c.l.b16 %v1649
      %v1887 = vunpack.c.h.b16 %v1649
      %v1888 = vunpack.c.l.b16 %v1650
      %v1889 = vunpack.c.h.b16 %v1650
      %v1890 = vunpack.c.l.b16 %v1651
      %v1891 = vunpack.c.h.b16 %v1651
      %v1892 = vunpack.c.l.b16 %v1652
      %v1893 = vunpack.c.h.b16 %v1652
      %v1894 = vunpack.c.l.b16 %v1653
      %v1895 = vunpack.c.h.b16 %v1653
      %v1896 = vunpack.c.l.b16 %v1654
      %v1897 = vunpack.c.h.b16 %v1654
      %v1898 = vunpack.c.l.b16 %v1655
      %v1899 = vunpack.c.h.b16 %v1655
      %v1900 = vunpack.c.l.b16 %v1656
      %v1901 = vunpack.c.h.b16 %v1656
      %v1902 = vunpack.c.l.b16 %v1657
      %v1903 = vunpack.c.h.b16 %v1657
      %v1904 = vunpack.c.l.b16 %v1658
      %v1905 = vunpack.c.h.b16 %v1658
      %v1906 = vunpack.c.l.b16 %v1659
      %v1907 = vunpack.c.h.b16 %v1659
      %v1908 = vunpack.c.l.b16 %v1660
      %v1909 = vunpack.c.h.b16 %v1660
      %v1910 = vunpack.c.l.b16 %v1661
      %v1911 = vunpack.c.h.b16 %v1661
      %v1912 = vunpack.c.l.b16 %v1662
      %v1913 = vunpack.c.h.b16 %v1662
      %v1914 = vunpack.c.l.b16 %v1663
      %v1915 = vunpack.c.h.b16 %v1663
      %v1916 = vunpack.c.l.b16 %v1664
      %v1917 = vunpack.c.h.b16 %v1664
      %v1918 = vunpack.c.l.b16 %v1665
      %v1919 = vunpack.c.h.b16 %v1665
      %v1920 = vunpack.c.l.b16 %v1666
      %v1921 = vunpack.c.h.b16 %v1666
      %v1922 = vunpack.c.l.b16 %v1667
      %v1923 = vunpack.c.h.b16 %v1667
      %v1924 = vunpack.c.l.b16 %v1668
      %v1925 = vunpack.c.h.b16 %v1668
      %v1926 = vunpack.c.l.b16 %v1669
      %v1927 = vunpack.c.h.b16 %v1669
      %v1928 = vunpack.c.l.b16 %v1670
      %v1929 = vunpack.c.h.b16 %v1670
      %v1930 = vunpack.c.l.b16 %v1671
      %v1931 = vunpack.c.h.b16 %v1671
      %v1932 = vunpack.c.l.b16 %v1672
      %v1933 = vunpack.c.h.b16 %v1672
      %v1934 = vunpack.c.l.b16 %v1673
      %v1935 = vunpack.c.h.b16 %v1673
      %v1936 = vunpack.c.l.b16 %v1674
      %v1937 = vunpack.c.h.b16 %v1674
      %v1938 = vunpack.c.l.b16 %v1675
      %v1939 = vunpack.c.h.b16 %v1675
      %v1940 = vunpack.c.l.b16 %v1676
      %v1941 = vunpack.c.h.b16 %v1676
      %v1942 = vunpack.c.l.b16 %v1677
      %v1943 = vunpack.c.h.b16 %v1677
      %v1944 = vunpack.c.l.b16 %v1678
      %v1945 = vunpack.c.h.b16 %v1678
      %v1946 = vunpack.c.l.b16 %v1679
      %v1947 = vunpack.c.h.b16 %v1679
      %v1948 = vunpack.c.l.b16 %v1680
      %v1949 = vunpack.c.h.b16 %v1680
      %v1950 = vunpack.c.l.b16 %v1681
      %v1951 = vunpack.c.h.b16 %v1681
      %v1952 = vunpack.c.l.b16 %v1682
      %v1953 = vunpack.c.h.b16 %v1682
      %v1954 = vunpack.c.l.b16 %v1683
      %v1955 = vunpack.c.h.b16 %v1683
      %v1956 = vunpack.c.l.b16 %v1684
      %v1957 = vunpack.c.h.b16 %v1684
      %v1958 = vunpack.c.l.b16 %v1685
      %v1959 = vunpack.c.h.b16 %v1685
      %v1960 = vunpack.c.l.b16 %v1686
      %v1961 = vunpack.c.h.b16 %v1686
      %v1962 = vunpack.c.l.b16 %v1687
      %v1963 = vunpack.c.h.b16 %v1687
      %v1964 = vunpack.c.l.b16 %v1688
      %v1965 = vunpack.c.h.b16 %v1688
      %v1966 = vunpack.c.l.b16 %v1689
      %v1967 = vunpack.c.h.b16 %v1689
      %v1968 = vunpack.c.l.b16 %v1690
      %v1969 = vunpack.c.h.b16 %v1690
      %v1970 = vunpack.c.l.b16 %v1691
      %v1971 = vunpack.c.h.b16 %v1691
      %v1972 = vunpack.c.l.b16 %v1692
      %v1973 = vunpack.c.h.b16 %v1692
      %v1974 = vunpack.c.l.b16 %v1693
      %v1975 = vunpack.c.h.b16 %v1693
      %v1976 = vunpack.c.l.b16 %v1694
      %v1977 = vunpack.c.h.b16 %v1694
      %v1978 = vunpack.c.l.b16 %v1695
      %v1979 = vunpack.c.h.b16 %v1695
      %v1980 = vunpack.c.l.b16 %v1696
      %v1981 = vunpack.c.h.b16 %v1696
      %v1982 = vunpack.c.l.b16 %v1697
      %v1983 = vunpack.c.h.b16 %v1697
      %v1984 = vunpack.c.l.b16 %v1698
      %v1985 = vunpack.c.h.b16 %v1698
      %v1986 = vunpack.c.l.b16 %v1699
      %v1987 = vunpack.c.h.b16 %v1699
      %v1988 = vunpack.c.l.b16 %v1700
      %v1989 = vunpack.c.h.b16 %v1700
      %v1990 = vunpack.c.l.b16 %v1701
      %v1991 = vunpack.c.h.b16 %v1701
      %v1992 = vunpack.c.l.b16 %v1702
      %v1993 = vunpack.c.h.b16 %v1702
      %v1994 = vunpack.c.l.b16 %v1703
      %v1995 = vunpack.c.h.b16 %v1703
      %v1996 = vunpack.c.l.b16 %v1704
      %v1997 = vunpack.c.h.b16 %v1704
      %v1998 = vunpack.c.l.b16 %v1705
      %v1999 = vunpack.c.h.b16 %v1705
      %v2000 = vunpack.c.l.b16 %v1706
      %v2001 = vunpack.c.h.b16 %v1706
      %v2002 = vunpack.c.l.b16 %v1707
      %v2003 = vunpack.c.h.b16 %v1707
      %v2004 = vunpack.c.l.b16 %v1708
      %v2005 = vunpack.c.h.b16 %v1708
      %v2006 = vunpack.c.l.b16 %v1709
      %v2007 = vunpack.c.h.b16 %v1709
      %v2008 = vunpack.c.l.b16 %v1710
      %v2009 = vunpack.c.h.b16 %v1710
      %v2010 = vunpack.c.l.b16 %v1711
      %v2011 = vunpack.c.h.b16 %v1711
      %v2012 = vunpack.c.l.b16 %v1712
      %v2013 = vunpack.c.h.b16 %v1712
      %v2014 = vunpack.c.l.b16 %v1713
      %v2015 = vunpack.c.h.b16 %v1713
      %v2016 = vunpack.c.l.b16 %v1714
      %v2017 = vunpack.c.h.b16 %v1714
      %v2018 = vunpack.c.l.b16 %v1715
      %v2019 = vunpack.c.h.b16 %v1715
      %v2020 = vunpack.c.l.b16 %v1716
      %v2021 = vunpack.c.h.b16 %v1716
      %v2022 = vunpack.c.l.b16 %v1717
      %v2023 = vunpack.c.h.b16 %v1717
      %v2024 = vunpack.c.l.b16 %v1718
      %v2025 = vunpack.c.h.b16 %v1718
      %v2026 = vunpack.c.l.b16 %v1719
      %v2027 = vunpack.c.h.b16 %v1719
      %v2028 = vunpack.c.l.b16 %v1720
      %v2029 = vunpack.c.h.b16 %v1720
      %v2030 = vunpack.c.l.b16 %v1721
      %v2031 = vunpack.c.h.b16 %v1721
      %v2032 = vunpack.c.l.b16 %v1722
      %v2033 = vunpack.c.h.b16 %v1722
      %v2034 = vunpack.c.l.b16 %v1723
      %v2035 = vunpack.c.h.b16 %v1723
      %v2036 = vunpack.c.l.b16 %v1724
      %v2037 = vunpack.c.h.b16 %v1724
      %v2038 = vunpack.c.l.b16 %v1725
      %v2039 = vunpack.c.h.b16 %v1725
      %v2040 = vunpack.c.l.b16 %v1726
      %v2041 = vunpack.c.h.b16 %v1726
      %v2042 = vunpack.c.l.b16 %v1727
      %v2043 = vunpack.c.h.b16 %v1727
      %v2044 = vunpack.c.l.b16 %v1728
      %v2045 = vunpack.c.h.b16 %v1728
      %v2046 = vunpack.c.l.b16 %v1729
      %v2047 = vunpack.c.h.b16 %v1729
      %v2048 = vunpack.c.l.b16 %v1730
      %v2049 = vunpack.c.h.b16 %v1730
      %v2050 = vunpack.c.l.b16 %v1731
      %v2051 = vunpack.c.h.b16 %v1731
      %v2052 = vunpack.c.l.b16 %v1732
      %v2053 = vunpack.c.h.b16 %v1732
      %v2054 = vunpack.c.l.b16 %v1733
      %v2055 = vunpack.c.h.b16 %v1733
      %v2056 = vunpack.c.l.b16 %v1734
      %v2057 = vunpack.c.h.b16 %v1734
      %v2058 = vunpack.c.l.b16 %v1735
      %v2059 = vunpack.c.h.b16 %v1735
      %v2060 = vunpack.c.l.b16 %v1736
      %v2061 = vunpack.c.h.b16 %v1736
      %v2062 = vunpack.c.l.b16 %v1737
      %v2063 = vunpack.c.h.b16 %v1737
      %v2064 = vunpack.c.l.b16 %v1738
      %v2065 = vunpack.c.h.b16 %v1738
      %v2066 = vunpack.c.l.b16 %v1739
      %v2067 = vunpack.c.h.b16 %v1739
      %v2068 = vunpack.c.l.b16 %v1740
      %v2069 = vunpack.c.h.b16 %v1740
      %v2070 = vunpack.c.l.b16 %v1741
      %v2071 = vunpack.c.h.b16 %v1741
      %v2072 = vunpack.c.l.b16 %v1742
      %v2073 = vunpack.c.h.b16 %v1742
      %v2074 = vpack.c.b16 %v1878, %v1874
      %v2075 = vpack.c.b16 %v1879, %v1875
      %v2076 = vpack.c.b16 %v1880, %v1876
      %v2077 = vpack.c.b16 %v1881, %v1877
      %v2078 = vpack.c.b16 %v1886, %v1882
      %v2079 = vpack.c.b16 %v1887, %v1883
      %v2080 = vpack.c.b16 %v1888, %v1884
      %v2081 = vpack.c.b16 %v1889, %v1885
      %v2082 = vpack.c.b16 %v1894, %v1890
      %v2083 = vpack.c.b16 %v1895, %v1891
      %v2084 = vpack.c.b16 %v1896, %v1892
      %v2085 = vpack.c.b16 %v1897, %v1893
      %v2086 = vpack.c.b16 %v1902, %v1898
      %v2087 = vpack.c.b16 %v1903, %v1899
      %v2088 = vpack.c.b16 %v1904, %v1900
      %v2089 = vpack.c.b16 %v1905, %v1901
      %v2090 = vpack.c.b16 %v1910, %v1906
      %v2091 = vpack.c.b16 %v1911, %v1907
      %v2092 = vpack.c.b16 %v1912, %v1908
      %v2093 = vpack.c.b16 %v1913, %v1909
      %v2094 = vpack.c.b16 %v1918, %v1914
      %v2095 = vpack.c.b16 %v1919, %v1915
      %v2096 = vpack.c.b16 %v1920, %v1916
      %v2097 = vpack.c.b16 %v1921, %v1917
      %v2098 = vpack.c.b16 %v1926, %v1922
      %v2099 = vpack.c.b16 %v1927, %v1923
      %v2100 = vpack.c.b16 %v1928, %v1924
      %v2101 = vpack.c.b16 %v1929, %v1925
      %v2102 = vpack.c.b16 %v1934, %v1930
      %v2103 = vpack.c.b16 %v1935, %v1931
      %v2104 = vpack.c.b16 %v1936, %v1932
      %v2105 = vpack.c.b16 %v1937, %v1933
      %v2106 = vpack.c.b16 %v1942, %v1938
      %v2107 = vpack.c.b16 %v1943, %v1939
      %v2108 = vpack.c.b16 %v1944, %v1940
      %v2109 = vpack.c.b16 %v1945, %v1941
      %v2110 = vpack.c.b16 %v1950, %v1946
      %v2111 = vpack.c.b16 %v1951, %v1947
      %v2112 = vpack.c.b16 %v1952, %v1948
      %v2113 = vpack.c.b16 %v1953, %v1949
      %v2114 = vpack.c.b16 %v1958, %v1954
      %v2115 = vpack.c.b16 %v1959, %v1955
      %v2116 = vpack.c.b16 %v1960, %v1956
      %v2117 = vpack.c.b16 %v1961, %v1957
      %v2118 = vpack.c.b16 %v1966, %v1962
      %v2119 = vpack.c.b16 %v1967, %v1963
      %v2120 = vpack.c.b16 %v1968, %v1964
      %v2121 = vpack.c.b16 %v1969, %v1965
      %v2122 = vpack.c.b16 %v1974, %v1970
      %v2123 = vpack.c.b16 %v1975, %v1971
      %v2124 = vpack.c.b16 %v1976, %v1972
      %v2125 = vpack.c.b16 %v1977, %v1973
      %v2126 = vpack.c.b16 %v1982, %v1978
      %v2127 = vpack.c.b16 %v1983, %v1979
      %v2128 = vpack.c.b16 %v1984, %v1980
      %v2129 = vpack.c.b16 %v1985, %v1981
      %v2130 = vpack.c.b16 %v1990, %v1986
      %v2131 = vpack.c.b16 %v1991, %v1987
      %v2132 = vpack.c.b16 %v1992, %v1988
      %v2133 = vpack.c.b16 %v1993, %v1989
      %v2134 = vpack.c.b16 %v1998, %v1994
      %v2135 = vpack.c.b16 %v1999, %v1995
      %v2136 = vpack.c.b16 %v2000, %v1996
      %v2137 = vpack.c.b16 %v2001, %v1997
      %v2138 = vpack.c.b16 %v2006, %v2002
      %v2139 = vpack.c.b16 %v2007, %v2003
      %v2140 = vpack.c.b16 %v2008, %v2004
      %v2141 = vpack.c.b16 %v2009, %v2005
      %v2142 = vpack.c.b16 %v2014, %v2010
      %v2143 = vpack.c.b16 %v2015, %v2011
      %v2144 = vpack.c.b16 %v2016, %v2012
      %v2145 = vpack.c.b16 %v2017, %v2013
      %v2146 = vpack.c.b16 %v2022, %v2018
      %v2147 = vpack.c.b16 %v2023, %v2019
      %v2148 = vpack.c.b16 %v2024, %v2020
      %v2149 = vpack.c.b16 %v2025, %v2021
      %v2150 = vpack.c.b16 %v2030, %v2026
      %v2151 = vpack.c.b16 %v2031, %v2027
      %v2152 = vpack.c.b16 %v2032, %v2028
      %v2153 = vpack.c.b16 %v2033, %v2029
      %v2154 = vpack.c.b16 %v2038, %v2034
      %v2155 = vpack.c.b16 %v2039, %v2035
      %v2156 = vpack.c.b16 %v2040, %v2036
      %v2157 = vpack.c.b16 %v2041, %v2037
      %v2158 = vpack.c.b16 %v2046, %v2042
      %v2159 = vpack.c.b16 %v2047, %v2043
      %v2160 = vpack.c.b16 %v2048, %v2044
      %v2161 = vpack.c.b16 %v2049, %v2045
      %v2162 = vpack.c.b16 %v2054, %v2050
      %v2163 = vpack.c.b16 %v2055, %v2051
      %v2164 = vpack.c.b16 %v2056, %v2052
      %v2165 = vpack.c.b16 %v2057, %v2053
      %v2166 = vpack.c.b16 %v2062, %v2058
      %v2167 = vpack.c.b16 %v2063, %v2059
      %v2168 = vpack.c.b16 %v2064, %v2060
      %v2169 = vpack.c.b16 %v2065, %v2061
      %v2170 = vpack.c.b16 %v2070, %v2066
      %v2171 = vpack.c.b16 %v2071, %v2067
      %v2172 = vpack.c.b16 %v2072, %v2068
      %v2173 = vpack.c.b16 %v2073, %v2069
      %vm2274 = vcmask 130048
      %v2276 = vsel %vm2274, %v1770, 0
      %2278 = vmatprep.subr.bf16.mxu0 %v2103
      %2279 = vmatpush1.bf16.msra.mxu0 %v2102
      %2280 = vmatprep.subr.bf16.mxu0 %v2099
      %2281 = vmatpush1.bf16.msra.mxu0 %v2098
      %2282 = vmatprep.subr.bf16.mxu0 %v2095
      %2283 = vmatpush1.bf16.msra.mxu0 %v2094
      %2284 = vmatprep.subr.bf16.mxu0 %v2091
      %2285 = vmatpush1.bf16.msra.mxu0 %v2090
      %2286 = vmatprep.subr.bf16.mxu0 %v2087
      %2287 = vmatpush1.bf16.msra.mxu0 %v2086
      %2288 = vmatprep.subr.bf16.mxu0 %v2083
      %2289 = vmatpush1.bf16.msra.mxu0 %v2082
      %2290 = vmatprep.subr.bf16.mxu0 %v2079
      %2291 = vmatpush1.bf16.msra.mxu0 %v2078
      %2292 = vmatprep.subr.bf16.mxu0 %v2075
      %2293 = vmatpush1.bf16.msra.mxu0 %v2074
      %2294 = vmatprep.subr.bf16.mxu0 %v2135
      %2295 = vmatpush2.bf16.msra.mxu0 %v2134
      %2296 = vmatprep.subr.bf16.mxu0 %v2131
      %2297 = vmatpush2.bf16.msra.mxu0 %v2130
      %2298 = vmatprep.subr.bf16.mxu0 %v2127
      %2299 = vmatpush2.bf16.msra.mxu0 %v2126
      %2300 = vmatprep.subr.bf16.mxu0 %v2123
      %2301 = vmatpush2.bf16.msra.mxu0 %v2122
      %2302 = vmatprep.subr.bf16.mxu0 %v2119
      %2303 = vmatpush2.bf16.msra.mxu0 %v2118
      %2304 = vmatprep.subr.bf16.mxu0 %v2115
      %2305 = vmatpush2.bf16.msra.mxu0 %v2114
      %2306 = vmatprep.subr.bf16.mxu0 %v2111
      %2307 = vmatpush2.bf16.msra.mxu0 %v2110
      %2308 = vmatprep.subr.bf16.mxu0 %v2107
      %2309 = vmatpush2.bf16.msra.mxu0 %v2106
      %2310 = vmatprep.mubr.bf16.mxu0 %v1768
      %2311 = vmatmul.mubr.bf16.gmra.mxu0 %v1767
      %v2312 = vpop.f32.mrf.mxu0
      %v2313 = vadd.f32 %v1748, %v2312
      %v2314 = vpop.f32.mrf.mxu0
      %v2315 = vadd.f32 %v1748, %v2314
      %v2316 = vpop.f32.mrf.mxu0
      %v2317 = vadd.f32 %v1753, %v2316
      %v2318 = vpop.f32.mrf.mxu0
      %v2319 = vadd.f32 %v1753, %v2318
      %2320 = vdwg.mxu0
      %2321 = vmatprep.subr.bf16.mxu0 %v2167
      %2322 = vmatpush1.bf16.msra.mxu0 %v2166
      %2323 = vmatprep.subr.bf16.mxu0 %v2163
      %2324 = vmatpush1.bf16.msra.mxu0 %v2162
      %2325 = vmatprep.subr.bf16.mxu0 %v2159
      %2326 = vmatpush1.bf16.msra.mxu0 %v2158
      %2327 = vmatprep.subr.bf16.mxu0 %v2155
      %2328 = vmatpush1.bf16.msra.mxu0 %v2154
      %2329 = vmatprep.subr.bf16.mxu0 %v2151
      %2330 = vmatpush1.bf16.msra.mxu0 %v2150
      %2331 = vmatprep.subr.bf16.mxu0 %v2147
      %2332 = vmatpush1.bf16.msra.mxu0 %v2146
      %2333 = vmatprep.subr.bf16.mxu0 %v2143
      %2334 = vmatpush1.bf16.msra.mxu0 %v2142
      %2335 = vmatprep.subr.bf16.mxu0 %v2139
      %2336 = vmatpush1.bf16.msra.mxu0 %v2138
      %2337 = vmatprep.subr.bf16.mxu0 0
      %2338 = vmatpush2.bf16.msra.mxu0 0
      %2339 = vmatprep.subr.bf16.mxu0 0
      %2340 = vmatpush2.bf16.msra.mxu0 0
      %2341 = vmatprep.subr.bf16.mxu0 0
      %2342 = vmatpush2.bf16.msra.mxu0 0
      %2343 = vmatprep.subr.bf16.mxu0 0
      %2344 = vmatpush2.bf16.msra.mxu0 0
      %2345 = vmatprep.subr.bf16.mxu0 0
      %2346 = vmatpush2.bf16.msra.mxu0 0
      %2347 = vmatprep.subr.bf16.mxu0 0
      %2348 = vmatpush2.bf16.msra.mxu0 0
      %2349 = vmatprep.subr.bf16.mxu0 0
      %2350 = vmatpush2.bf16.msra.mxu0 0
      %2351 = vmatprep.subr.bf16.mxu0 %v2171
      %2352 = vmatpush2.bf16.msra.mxu0 %v2170
      %2353 = vmatprep.mubr.bf16.mxu0 %v2276
      %2354 = vmatmul.mubr.bf16.gmra.mxu0 %v1769
      %v2355 = vpop.f32.mrf.mxu0
      %v2356 = vadd.f32 %v2313, %v2355
      %v2357 = vpop.f32.mrf.mxu0
      %v2358 = vadd.f32 %v2315, %v2357
      %v2359 = vpop.f32.mrf.mxu0
      %v2360 = vadd.f32 %v2317, %v2359
      %v2361 = vpop.f32.mrf.mxu0
      %v2362 = vadd.f32 %v2319, %v2361
      %2363 = vdwg.mxu0
      %2364 = vmatprep.subr.bf16.mxu0 %v2105
      %2365 = vmatpush1.bf16.msra.mxu0 %v2104
      %2366 = vmatprep.subr.bf16.mxu0 %v2101
      %2367 = vmatpush1.bf16.msra.mxu0 %v2100
      %2368 = vmatprep.subr.bf16.mxu0 %v2097
      %2369 = vmatpush1.bf16.msra.mxu0 %v2096
      %2370 = vmatprep.subr.bf16.mxu0 %v2093
      %2371 = vmatpush1.bf16.msra.mxu0 %v2092
      %2372 = vmatprep.subr.bf16.mxu0 %v2089
      %2373 = vmatpush1.bf16.msra.mxu0 %v2088
      %2374 = vmatprep.subr.bf16.mxu0 %v2085
      %2375 = vmatpush1.bf16.msra.mxu0 %v2084
      %2376 = vmatprep.subr.bf16.mxu0 %v2081
      %2377 = vmatpush1.bf16.msra.mxu0 %v2080
      %2378 = vmatprep.subr.bf16.mxu0 %v2077
      %2379 = vmatpush1.bf16.msra.mxu0 %v2076
      %2380 = vmatprep.subr.bf16.mxu0 %v2137
      %2381 = vmatpush2.bf16.msra.mxu0 %v2136
      %2382 = vmatprep.subr.bf16.mxu0 %v2133
      %2383 = vmatpush2.bf16.msra.mxu0 %v2132
      %2384 = vmatprep.subr.bf16.mxu0 %v2129
      %2385 = vmatpush2.bf16.msra.mxu0 %v2128
      %2386 = vmatprep.subr.bf16.mxu0 %v2125
      %2387 = vmatpush2.bf16.msra.mxu0 %v2124
      %2388 = vmatprep.subr.bf16.mxu0 %v2121
      %2389 = vmatpush2.bf16.msra.mxu0 %v2120
      %2390 = vmatprep.subr.bf16.mxu0 %v2117
      %2391 = vmatpush2.bf16.msra.mxu0 %v2116
      %2392 = vmatprep.subr.bf16.mxu0 %v2113
      %2393 = vmatpush2.bf16.msra.mxu0 %v2112
      %2394 = vmatprep.subr.bf16.mxu0 %v2109
      %2395 = vmatpush2.bf16.msra.mxu0 %v2108
      %2396 = vmatprep.mubr.bf16.mxu0 %v1768
      %2397 = vmatmul.mubr.bf16.gmra.mxu0 %v1767
      %v2398 = vpop.f32.mrf.mxu0
      %v2399 = vadd.f32 %v1748, %v2398
      %v2400 = vpop.f32.mrf.mxu0
      %v2401 = vadd.f32 %v1748, %v2400
      %v2402 = vpop.f32.mrf.mxu0
      %v2403 = vadd.f32 %v1753, %v2402
      %v2404 = vpop.f32.mrf.mxu0
      %v2405 = vadd.f32 %v1753, %v2404
      %2406 = vdwg.mxu0
      %2407 = vmatprep.subr.bf16.mxu0 %v2169
      %2408 = vmatpush1.bf16.msra.mxu0 %v2168
      %2409 = vmatprep.subr.bf16.mxu0 %v2165
      %2410 = vmatpush1.bf16.msra.mxu0 %v2164
      %2411 = vmatprep.subr.bf16.mxu0 %v2161
      %2412 = vmatpush1.bf16.msra.mxu0 %v2160
      %2413 = vmatprep.subr.bf16.mxu0 %v2157
      %2414 = vmatpush1.bf16.msra.mxu0 %v2156
      %2415 = vmatprep.subr.bf16.mxu0 %v2153
      %2416 = vmatpush1.bf16.msra.mxu0 %v2152
      %2417 = vmatprep.subr.bf16.mxu0 %v2149
      %2418 = vmatpush1.bf16.msra.mxu0 %v2148
      %2419 = vmatprep.subr.bf16.mxu0 %v2145
      %2420 = vmatpush1.bf16.msra.mxu0 %v2144
      %2421 = vmatprep.subr.bf16.mxu0 %v2141
      %2422 = vmatpush1.bf16.msra.mxu0 %v2140
      %2423 = vmatprep.subr.bf16.mxu0 0
      %2424 = vmatpush2.bf16.msra.mxu0 0
      %2425 = vmatprep.subr.bf16.mxu0 0
      %2426 = vmatpush2.bf16.msra.mxu0 0
      %2427 = vmatprep.subr.bf16.mxu0 0
      %2428 = vmatpush2.bf16.msra.mxu0 0
      %2429 = vmatprep.subr.bf16.mxu0 0
      %2430 = vmatpush2.bf16.msra.mxu0 0
      %2431 = vmatprep.subr.bf16.mxu0 0
      %2432 = vmatpush2.bf16.msra.mxu0 0
      %2433 = vmatprep.subr.bf16.mxu0 0
      %2434 = vmatpush2.bf16.msra.mxu0 0
      %2435 = vmatprep.subr.bf16.mxu0 0
      %2436 = vmatpush2.bf16.msra.mxu0 0
      %2437 = vmatprep.subr.bf16.mxu0 %v2173
      %2438 = vmatpush2.bf16.msra.mxu0 %v2172
      %2439 = vmatprep.mubr.bf16.mxu0 %v2276
      %2440 = vmatmul.mubr.bf16.gmra.mxu0 %v1769
      %v2441 = vpop.f32.mrf.mxu0
      %v2442 = vadd.f32 %v2399, %v2441
      %v2443 = vpop.f32.mrf.mxu0
      %v2444 = vadd.f32 %v2401, %v2443
      %v2445 = vpop.f32.mrf.mxu0
      %v2446 = vadd.f32 %v2403, %v2445
      %v2447 = vpop.f32.mrf.mxu0
      %v2448 = vadd.f32 %v2405, %v2447
      %2449 = vdwg.mxu0
      %v2450 = vtanh.pop %v2356
      %v2451 = vtanh.pop %v2358
      %v2452 = vtanh.pop %v2442
      %v2453 = vtanh.pop %v2444
      %v2454 = vtanh.pop %v2360
      %v2455 = vtanh.pop %v2362
      %v2456 = vtanh.pop %v2446
      %v2457 = vtanh.pop %v2448
      %v2458 = vmul.f32 %v2450, %v312
      %v2459 = vmul.f32 %v2451, %v316
      %v2460 = vmul.f32 %v2452, %v320
      %v2461 = vmul.f32 %v2453, %v324
      %v2462 = vmul.f32 %v2454, %v312
      %v2463 = vmul.f32 %v2455, %v316
      %v2464 = vmul.f32 %v2456, %v320
      %v2465 = vmul.f32 %v2457, %v324
      %2466 = vrot.lane.b32.xlu0 %v2458, 21
      %v2467 = vpop.permute.xlu0 %2466
      %2468 = vrot.lane.b32.xlu0 %v2462, 21
      %v2469 = vpop.permute.xlu0 %2468
      %2470 = vrot.lane.b32.xlu0 %v2459, 21
      %v2471 = vpop.permute.xlu0 %2470
      %2472 = vrot.lane.b32.xlu0 %v2463, 21
      %v2473 = vpop.permute.xlu0 %2472
      %2474 = vrot.lane.b32.xlu0 %v2460, 21
      %v2475 = vpop.permute.xlu0 %2474
      %2476 = vrot.lane.b32.xlu0 %v2464, 21
      %v2477 = vpop.permute.xlu0 %2476
      %2478 = vrot.lane.b32.xlu0 %v2461, 21
      %v2479 = vpop.permute.xlu0 %2478
      %2480 = vrot.lane.b32.xlu0 %v2465, 21
      %v2481 = vpop.permute.xlu0 %2480
      %v2482 = vsel %vm673, %v2475, %v2479
      %v2483 = vsel %vm673, %v2477, %v2481
      %v2484 = vsel %vm673, %v2471, %v2475
      %v2485 = vsel %vm673, %v2473, %v2477
      %v2486 = vsel %vm673, %v2467, %v2471
      %v2487 = vsel %vm673, %v2469, %v2473
      %v2488 = vsel %vm673, %v2479, %v2467
      %v2489 = vsel %vm673, %v2481, %v2469
      %v2490 = vpack.c.bf16 %v2489, %v2488
      %v2491 = vpack.c.bf16 %v2487, %v2486
      %v2492 = vpack.c.bf16 %v2485, %v2484
      %v2493 = vpack.c.bf16 %v2483, %v2482
      %v2498 = vunpack.c.l.b16 %v2490
      %v2499 = vunpack.c.l.b16 %v2491
      %v2500 = vunpack.c.l.b16 %v2492
      %v2501 = vunpack.c.l.b16 %v2493
      %v2502 = vunpack.c.h.b16 %v2490
      %v2503 = vunpack.c.h.b16 %v2491
      %v2504 = vunpack.c.h.b16 %v2492
      %v2505 = vunpack.c.h.b16 %v2493
      %v2506 = vpack.c.b16 %v2499, %v2498
      %v2507 = vpack.c.b16 %v2501, %v2500
      %v2508 = vpack.c.b16 %v2503, %v2502
      %v2509 = vpack.c.b16 %v2505, %v2504
      %2514 = vst [vmem:[#allocation2] sm:$0xff] %v2506
      %2515 = vst [vmem:[#allocation2 + $0x8] sm:$0xff] %v2507
      %2516 = vst [vmem:[#allocation2 + $0x10] sm:$0xff] %v2508
      %2517 = vst [vmem:[#allocation2 + $0x18] sm:$0xff] %v2509
      %2518 = vrot.lane.b32.xlu0 %v2458, 20
      %v2519 = vpop.permute.xlu0 %2518
      %2520 = vrot.lane.b32.xlu0 %v2462, 20
      %v2521 = vpop.permute.xlu0 %2520
      %2522 = vrot.lane.b32.xlu0 %v2459, 20
      %v2523 = vpop.permute.xlu0 %2522
      %2524 = vrot.lane.b32.xlu0 %v2463, 20
      %v2525 = vpop.permute.xlu0 %2524
      %2526 = vrot.lane.b32.xlu0 %v2460, 20
      %v2527 = vpop.permute.xlu0 %2526
      %2528 = vrot.lane.b32.xlu0 %v2464, 20
      %v2529 = vpop.permute.xlu0 %2528
      %2530 = vrot.lane.b32.xlu0 %v2461, 20
      %v2531 = vpop.permute.xlu0 %2530
      %2532 = vrot.lane.b32.xlu0 %v2465, 20
      %v2533 = vpop.permute.xlu0 %2532
      %v2534 = vsel %vm726, %v2527, %v2531
      %v2535 = vsel %vm726, %v2529, %v2533
      %v2536 = vsel %vm726, %v2523, %v2527
      %v2537 = vsel %vm726, %v2525, %v2529
      %v2538 = vsel %vm726, %v2519, %v2523
      %v2539 = vsel %vm726, %v2521, %v2525
      %v2540 = vsel %vm726, %v2531, %v2519
      %v2541 = vsel %vm726, %v2533, %v2521
      %v2542 = vpack.c.bf16 %v2541, %v2540
      %v2543 = vpack.c.bf16 %v2539, %v2538
      %v2544 = vpack.c.bf16 %v2537, %v2536
      %v2545 = vpack.c.bf16 %v2535, %v2534
      %v2550 = vunpack.c.l.b16 %v2542
      %v2551 = vunpack.c.l.b16 %v2543
      %v2552 = vunpack.c.l.b16 %v2544
      %v2553 = vunpack.c.l.b16 %v2545
      %v2554 = vunpack.c.h.b16 %v2542
      %v2555 = vunpack.c.h.b16 %v2543
      %v2556 = vunpack.c.h.b16 %v2544
      %v2557 = vunpack.c.h.b16 %v2545
      %v2558 = vpack.c.b16 %v2551, %v2550
      %v2559 = vpack.c.b16 %v2553, %v2552
      %v2560 = vpack.c.b16 %v2555, %v2554
      %v2561 = vpack.c.b16 %v2557, %v2556
      %2566 = vst [vmem:[#allocation2 + $0x20] sm:$0xff] %v2558
      %2567 = vst [vmem:[#allocation2 + $0x28] sm:$0xff] %v2559
      %2568 = vst [vmem:[#allocation2 + $0x30] sm:$0xff] %v2560
      %2569 = vst [vmem:[#allocation2 + $0x38] sm:$0xff] %v2561
      %2570 = vrot.lane.b32.xlu0 %v2458, 19
      %v2571 = vpop.permute.xlu0 %2570
      %2572 = vrot.lane.b32.xlu0 %v2462, 19
      %v2573 = vpop.permute.xlu0 %2572
      %2574 = vrot.lane.b32.xlu0 %v2459, 19
      %v2575 = vpop.permute.xlu0 %2574
      %2576 = vrot.lane.b32.xlu0 %v2463, 19
      %v2577 = vpop.permute.xlu0 %2576
      %2578 = vrot.lane.b32.xlu0 %v2460, 19
      %v2579 = vpop.permute.xlu0 %2578
      %2580 = vrot.lane.b32.xlu0 %v2464, 19
      %v2581 = vpop.permute.xlu0 %2580
      %2582 = vrot.lane.b32.xlu0 %v2461, 19
      %v2583 = vpop.permute.xlu0 %2582
      %2584 = vrot.lane.b32.xlu0 %v2465, 19
      %v2585 = vpop.permute.xlu0 %2584
      %v2586 = vsel %vm779, %v2579, %v2583
      %v2587 = vsel %vm779, %v2581, %v2585
      %v2588 = vsel %vm779, %v2575, %v2579
      %v2589 = vsel %vm779, %v2577, %v2581
      %v2590 = vsel %vm779, %v2571, %v2575
      %v2591 = vsel %vm779, %v2573, %v2577
      %v2592 = vsel %vm779, %v2583, %v2571
      %v2593 = vsel %vm779, %v2585, %v2573
      %v2594 = vpack.c.bf16 %v2593, %v2592
      %v2595 = vpack.c.bf16 %v2591, %v2590
      %v2596 = vpack.c.bf16 %v2589, %v2588
      %v2597 = vpack.c.bf16 %v2587, %v2586
      %v2602 = vunpack.c.l.b16 %v2594
      %v2603 = vunpack.c.l.b16 %v2595
      %v2604 = vunpack.c.l.b16 %v2596
      %v2605 = vunpack.c.l.b16 %v2597
      %v2606 = vunpack.c.h.b16 %v2594
      %v2607 = vunpack.c.h.b16 %v2595
      %v2608 = vunpack.c.h.b16 %v2596
      %v2609 = vunpack.c.h.b16 %v2597
      %v2610 = vpack.c.b16 %v2603, %v2602
      %v2611 = vpack.c.b16 %v2605, %v2604
      %v2612 = vpack.c.b16 %v2607, %v2606
      %v2613 = vpack.c.b16 %v2609, %v2608
      %2618 = vst [vmem:[#allocation2 + $0x40] sm:$0xff] %v2610
      %2619 = vst [vmem:[#allocation2 + $0x48] sm:$0xff] %v2611
      %2620 = vst [vmem:[#allocation2 + $0x50] sm:$0xff] %v2612
      %2621 = vst [vmem:[#allocation2 + $0x58] sm:$0xff] %v2613
      %2622 = vrot.lane.b32.xlu0 %v2458, 1
      %v2623 = vpop.permute.xlu0 %2622
      %2624 = vrot.lane.b32.xlu0 %v2462, 1
      %v2625 = vpop.permute.xlu0 %2624
      %2626 = vrot.lane.b32.xlu0 %v2459, 1
      %v2627 = vpop.permute.xlu0 %2626
      %2628 = vrot.lane.b32.xlu0 %v2463, 1
      %v2629 = vpop.permute.xlu0 %2628
      %2630 = vrot.lane.b32.xlu0 %v2460, 1
      %v2631 = vpop.permute.xlu0 %2630
      %2632 = vrot.lane.b32.xlu0 %v2464, 1
      %v2633 = vpop.permute.xlu0 %2632
      %2634 = vrot.lane.b32.xlu0 %v2461, 1
      %v2635 = vpop.permute.xlu0 %2634
      %2636 = vrot.lane.b32.xlu0 %v2465, 1
      %v2637 = vpop.permute.xlu0 %2636
      %v2638 = vsel %vm938, %v2631, %v2635
      %v2639 = vsel %vm938, %v2633, %v2637
      %v2640 = vsel %vm938, %v2627, %v2631
      %v2641 = vsel %vm938, %v2629, %v2633
      %v2642 = vsel %vm938, %v2623, %v2627
      %v2643 = vsel %vm938, %v2625, %v2629
      %v2644 = vsel %vm938, %v2635, %v2623
      %v2645 = vsel %vm938, %v2637, %v2625
      %v2646 = vpack.c.bf16 %v2645, %v2644
      %v2647 = vpack.c.bf16 %v2643, %v2642
      %v2648 = vpack.c.bf16 %v2641, %v2640
      %v2649 = vpack.c.bf16 %v2639, %v2638
      %v2654 = vunpack.c.l.b16 %v2646
      %v2655 = vunpack.c.l.b16 %v2647
      %v2656 = vunpack.c.l.b16 %v2648
      %v2657 = vunpack.c.l.b16 %v2649
      %v2658 = vunpack.c.h.b16 %v2646
      %v2659 = vunpack.c.h.b16 %v2647
      %v2660 = vunpack.c.h.b16 %v2648
      %v2661 = vunpack.c.h.b16 %v2649
      %v2662 = vpack.c.b16 %v2655, %v2654
      %v2663 = vpack.c.b16 %v2657, %v2656
      %v2664 = vpack.c.b16 %v2659, %v2658
      %v2665 = vpack.c.b16 %v2661, %v2660
      %2670 = vst [vmem:[#allocation2 + $0x60] sm:$0xff] %v2662
      %2671 = vst [vmem:[#allocation2 + $0x68] sm:$0xff] %v2663
      %2672 = vst [vmem:[#allocation2 + $0x70] sm:$0xff] %v2664
      %2673 = vst [vmem:[#allocation2 + $0x78] sm:$0xff] %v2665
      %v2674 = vpack.c.bf16 %v2462, %v2458
      %v2675 = vpack.c.bf16 %v2463, %v2459
      %v2676 = vpack.c.bf16 %v2464, %v2460
      %v2677 = vpack.c.bf16 %v2465, %v2461
      %v2682 = vunpack.c.l.b16 %v2674
      %v2683 = vunpack.c.l.b16 %v2675
      %v2684 = vunpack.c.l.b16 %v2676
      %v2685 = vunpack.c.l.b16 %v2677
      %v2686 = vunpack.c.h.b16 %v2674
      %v2687 = vunpack.c.h.b16 %v2675
      %v2688 = vunpack.c.h.b16 %v2676
      %v2689 = vunpack.c.h.b16 %v2677
      %v2690 = vpack.c.b16 %v2683, %v2682
      %v2691 = vpack.c.b16 %v2685, %v2684
      %v2692 = vpack.c.b16 %v2687, %v2686
      %v2693 = vpack.c.b16 %v2689, %v2688
      %2698 = vst [vmem:[#allocation2 + $0x80] sm:$0xff] %v2690
      %2699 = vst [vmem:[#allocation2 + $0x88] sm:$0xff] %v2691
      %2700 = vst [vmem:[#allocation2 + $0x90] sm:$0xff] %v2692
      %2701 = vst [vmem:[#allocation2 + $0x98] sm:$0xff] %v2693
      %2702 = vrot.lane.b32.xlu0 %v2458, 127
      %v2703 = vpop.permute.xlu0 %2702
      %2704 = vrot.lane.b32.xlu0 %v2462, 127
      %v2705 = vpop.permute.xlu0 %2704
      %2706 = vrot.lane.b32.xlu0 %v2459, 127
      %v2707 = vpop.permute.xlu0 %2706
      %2708 = vrot.lane.b32.xlu0 %v2463, 127
      %v2709 = vpop.permute.xlu0 %2708
      %2710 = vrot.lane.b32.xlu0 %v2460, 127
      %v2711 = vpop.permute.xlu0 %2710
      %2712 = vrot.lane.b32.xlu0 %v2464, 127
      %v2713 = vpop.permute.xlu0 %2712
      %2714 = vrot.lane.b32.xlu0 %v2461, 127
      %v2715 = vpop.permute.xlu0 %2714
      %2716 = vrot.lane.b32.xlu0 %v2465, 127
      %v2717 = vpop.permute.xlu0 %2716
      %v2718 = vsel %vm1019, %v2711, %v2715
      %v2719 = vsel %vm1019, %v2713, %v2717
      %v2720 = vsel %vm1019, %v2707, %v2711
      %v2721 = vsel %vm1019, %v2709, %v2713
      %v2722 = vsel %vm1019, %v2703, %v2707
      %v2723 = vsel %vm1019, %v2705, %v2709
      %v2724 = vsel %vm1019, %v2715, %v2703
      %v2725 = vsel %vm1019, %v2717, %v2705
      %v2726 = vpack.c.bf16 %v2723, %v2722
      %v2727 = vpack.c.bf16 %v2721, %v2720
      %v2728 = vpack.c.bf16 %v2719, %v2718
      %v2729 = vpack.c.bf16 %v2725, %v2724
      %v2734 = vunpack.c.l.b16 %v2726
      %v2735 = vunpack.c.l.b16 %v2727
      %v2736 = vunpack.c.l.b16 %v2728
      %v2737 = vunpack.c.l.b16 %v2729
      %v2738 = vunpack.c.h.b16 %v2726
      %v2739 = vunpack.c.h.b16 %v2727
      %v2740 = vunpack.c.h.b16 %v2728
      %v2741 = vunpack.c.h.b16 %v2729
      %v2742 = vpack.c.b16 %v2735, %v2734
      %v2743 = vpack.c.b16 %v2737, %v2736
      %v2744 = vpack.c.b16 %v2739, %v2738
      %v2745 = vpack.c.b16 %v2741, %v2740
      %2750 = vst [vmem:[#allocation2 + $0xa0] sm:$0xff] %v2742
      %2751 = vst [vmem:[#allocation2 + $0xa8] sm:$0xff] %v2743
      %2752 = vst [vmem:[#allocation2 + $0xb0] sm:$0xff] %v2744
      %2753 = vst [vmem:[#allocation2 + $0xb8] sm:$0xff] %v2745
      %2754 = vrot.lane.b32.xlu0 %v2458, 109
      %v2755 = vpop.permute.xlu0 %2754
      %2756 = vrot.lane.b32.xlu0 %v2462, 109
      %v2757 = vpop.permute.xlu0 %2756
      %2758 = vrot.lane.b32.xlu0 %v2459, 109
      %v2759 = vpop.permute.xlu0 %2758
      %2760 = vrot.lane.b32.xlu0 %v2463, 109
      %v2761 = vpop.permute.xlu0 %2760
      %2762 = vrot.lane.b32.xlu0 %v2460, 109
      %v2763 = vpop.permute.xlu0 %2762
      %2764 = vrot.lane.b32.xlu0 %v2464, 109
      %v2765 = vpop.permute.xlu0 %2764
      %2766 = vrot.lane.b32.xlu0 %v2461, 109
      %v2767 = vpop.permute.xlu0 %2766
      %2768 = vrot.lane.b32.xlu0 %v2465, 109
      %v2769 = vpop.permute.xlu0 %2768
      %v2770 = vsel %vm1178, %v2763, %v2767
      %v2771 = vsel %vm1178, %v2765, %v2769
      %v2772 = vsel %vm1178, %v2759, %v2763
      %v2773 = vsel %vm1178, %v2761, %v2765
      %v2774 = vsel %vm1178, %v2755, %v2759
      %v2775 = vsel %vm1178, %v2757, %v2761
      %v2776 = vsel %vm1178, %v2767, %v2755
      %v2777 = vsel %vm1178, %v2769, %v2757
      %v2778 = vpack.c.bf16 %v2775, %v2774
      %v2779 = vpack.c.bf16 %v2773, %v2772
      %v2780 = vpack.c.bf16 %v2771, %v2770
      %v2781 = vpack.c.bf16 %v2777, %v2776
      %v2786 = vunpack.c.l.b16 %v2778
      %v2787 = vunpack.c.l.b16 %v2779
      %v2788 = vunpack.c.l.b16 %v2780
      %v2789 = vunpack.c.l.b16 %v2781
      %v2790 = vunpack.c.h.b16 %v2778
      %v2791 = vunpack.c.h.b16 %v2779
      %v2792 = vunpack.c.h.b16 %v2780
      %v2793 = vunpack.c.h.b16 %v2781
      %v2794 = vpack.c.b16 %v2787, %v2786
      %v2795 = vpack.c.b16 %v2789, %v2788
      %v2796 = vpack.c.b16 %v2791, %v2790
      %v2797 = vpack.c.b16 %v2793, %v2792
      %2802 = vst [vmem:[#allocation2 + $0xc0] sm:$0xff] %v2794
      %2803 = vst [vmem:[#allocation2 + $0xc8] sm:$0xff] %v2795
      %2804 = vst [vmem:[#allocation2 + $0xd0] sm:$0xff] %v2796
      %2805 = vst [vmem:[#allocation2 + $0xd8] sm:$0xff] %v2797
      %2806 = vrot.lane.b32.xlu0 %v2458, 108
      %v2807 = vpop.permute.xlu0 %2806
      %2808 = vrot.lane.b32.xlu0 %v2462, 108
      %v2809 = vpop.permute.xlu0 %2808
      %2810 = vrot.lane.b32.xlu0 %v2459, 108
      %v2811 = vpop.permute.xlu0 %2810
      %2812 = vrot.lane.b32.xlu0 %v2463, 108
      %v2813 = vpop.permute.xlu0 %2812
      %2814 = vrot.lane.b32.xlu0 %v2460, 108
      %v2815 = vpop.permute.xlu0 %2814
      %2816 = vrot.lane.b32.xlu0 %v2464, 108
      %v2817 = vpop.permute.xlu0 %2816
      %2818 = vrot.lane.b32.xlu0 %v2461, 108
      %v2819 = vpop.permute.xlu0 %2818
      %2820 = vrot.lane.b32.xlu0 %v2465, 108
      %v2821 = vpop.permute.xlu0 %2820
      %v2822 = vsel %vm1231, %v2815, %v2819
      %v2823 = vsel %vm1231, %v2817, %v2821
      %v2824 = vsel %vm1231, %v2811, %v2815
      %v2825 = vsel %vm1231, %v2813, %v2817
      %v2826 = vsel %vm1231, %v2807, %v2811
      %v2827 = vsel %vm1231, %v2809, %v2813
      %v2828 = vsel %vm1231, %v2819, %v2807
      %v2829 = vsel %vm1231, %v2821, %v2809
      %v2830 = vpack.c.bf16 %v2827, %v2826
      %v2831 = vpack.c.bf16 %v2825, %v2824
      %v2832 = vpack.c.bf16 %v2823, %v2822
      %v2833 = vpack.c.bf16 %v2829, %v2828
      %v2838 = vunpack.c.l.b16 %v2830
      %v2839 = vunpack.c.l.b16 %v2831
      %v2840 = vunpack.c.l.b16 %v2832
      %v2841 = vunpack.c.l.b16 %v2833
      %v2842 = vunpack.c.h.b16 %v2830
      %v2843 = vunpack.c.h.b16 %v2831
      %v2844 = vunpack.c.h.b16 %v2832
      %v2845 = vunpack.c.h.b16 %v2833
      %v2846 = vpack.c.b16 %v2839, %v2838
      %v2847 = vpack.c.b16 %v2841, %v2840
      %v2848 = vpack.c.b16 %v2843, %v2842
      %v2849 = vpack.c.b16 %v2845, %v2844
      %2854 = vst [vmem:[#allocation2 + $0xe0] sm:$0xff] %v2846
      %2855 = vst [vmem:[#allocation2 + $0xe8] sm:$0xff] %v2847
      %2856 = vst [vmem:[#allocation2 + $0xf0] sm:$0xff] %v2848
      %2857 = vst [vmem:[#allocation2 + $0xf8] sm:$0xff] %v2849
      %2858 = vrot.lane.b32.xlu0 %v2458, 107
      %v2859 = vpop.permute.xlu0 %2858
      %2860 = vrot.lane.b32.xlu0 %v2462, 107
      %v2861 = vpop.permute.xlu0 %2860
      %2862 = vrot.lane.b32.xlu0 %v2459, 107
      %v2863 = vpop.permute.xlu0 %2862
      %2864 = vrot.lane.b32.xlu0 %v2463, 107
      %v2865 = vpop.permute.xlu0 %2864
      %2866 = vrot.lane.b32.xlu0 %v2460, 107
      %v2867 = vpop.permute.xlu0 %2866
      %2868 = vrot.lane.b32.xlu0 %v2464, 107
      %v2869 = vpop.permute.xlu0 %2868
      %2870 = vrot.lane.b32.xlu0 %v2461, 107
      %v2871 = vpop.permute.xlu0 %2870
      %2872 = vrot.lane.b32.xlu0 %v2465, 107
      %v2873 = vpop.permute.xlu0 %2872
      %v2874 = vsel %vm1284, %v2867, %v2871
      %v2875 = vsel %vm1284, %v2869, %v2873
      %v2876 = vsel %vm1284, %v2863, %v2867
      %v2877 = vsel %vm1284, %v2865, %v2869
      %v2878 = vsel %vm1284, %v2859, %v2863
      %v2879 = vsel %vm1284, %v2861, %v2865
      %v2880 = vsel %vm1284, %v2871, %v2859
      %v2881 = vsel %vm1284, %v2873, %v2861
      %v2882 = vpack.c.bf16 %v2879, %v2878
      %v2883 = vpack.c.bf16 %v2877, %v2876
      %v2884 = vpack.c.bf16 %v2875, %v2874
      %v2885 = vpack.c.bf16 %v2881, %v2880
      %v2890 = vunpack.c.l.b16 %v2882
      %v2891 = vunpack.c.l.b16 %v2883
      %v2892 = vunpack.c.l.b16 %v2884
      %v2893 = vunpack.c.l.b16 %v2885
      %v2894 = vunpack.c.h.b16 %v2882
      %v2895 = vunpack.c.h.b16 %v2883
      %v2896 = vunpack.c.h.b16 %v2884
      %v2897 = vunpack.c.h.b16 %v2885
      %v2898 = vpack.c.b16 %v2891, %v2890
      %v2899 = vpack.c.b16 %v2893, %v2892
      %v2900 = vpack.c.b16 %v2895, %v2894
      %v2901 = vpack.c.b16 %v2897, %v2896
      %2906 = vst [vmem:[#allocation2 + $0x100] sm:$0xff] %v2898
      %2907 = vst [vmem:[#allocation2 + $0x108] sm:$0xff] %v2899
      %2908 = vst [vmem:[#allocation2 + $0x110] sm:$0xff] %v2900
      %2909 = vst [vmem:[#allocation2 + $0x118] sm:$0xff] %v2901
      %v2910 = vld [vmem:[%s4] sm:$0xff]
      %v2911 = vld [vmem:[%s4 + $0x8] sm:$0xff]
      %v2912 = vld [vmem:[#allocation2] sm:$0xff]
      %v2913 = vld [vmem:[#allocation2 + $0x8] sm:$0xff]
      %v2914 = vld [vmem:[#allocation2 + $0x10] sm:$0xff]
      %v2915 = vld [vmem:[#allocation2 + $0x18] sm:$0xff]
      %v2916 = vld [vmem:[#allocation2 + $0x20] sm:$0xff]
      %v2917 = vld [vmem:[#allocation2 + $0x28] sm:$0xff]
      %v2918 = vld [vmem:[#allocation2 + $0x30] sm:$0xff]
      %v2919 = vld [vmem:[#allocation2 + $0x38] sm:$0xff]
      %v2920 = vld [vmem:[#allocation2 + $0x40] sm:$0xff]
      %v2921 = vld [vmem:[#allocation2 + $0x48] sm:$0xff]
      %v2922 = vld [vmem:[#allocation2 + $0x50] sm:$0xff]
      %v2923 = vld [vmem:[#allocation2 + $0x58] sm:$0xff]
      %v2924 = vld [vmem:[#allocation2 + $0x60] sm:$0xff]
      %v2925 = vld [vmem:[#allocation2 + $0x68] sm:$0xff]
      %v2926 = vld [vmem:[#allocation2 + $0x70] sm:$0xff]
      %v2927 = vld [vmem:[#allocation2 + $0x78] sm:$0xff]
      %v2928 = vld [vmem:[#allocation2 + $0x80] sm:$0xff]
      %v2929 = vld [vmem:[#allocation2 + $0x88] sm:$0xff]
      %v2930 = vld [vmem:[#allocation2 + $0x90] sm:$0xff]
      %v2931 = vld [vmem:[#allocation2 + $0x98] sm:$0xff]
      %v2932 = vld [vmem:[#allocation2 + $0xa0] sm:$0xff]
      %v2933 = vld [vmem:[#allocation2 + $0xa8] sm:$0xff]
      %v2934 = vld [vmem:[#allocation2 + $0xb0] sm:$0xff]
      %v2935 = vld [vmem:[#allocation2 + $0xb8] sm:$0xff]
      %v2936 = vld [vmem:[#allocation2 + $0xc0] sm:$0xff]
      %v2937 = vld [vmem:[#allocation2 + $0xc8] sm:$0xff]
      %v2938 = vld [vmem:[#allocation2 + $0xd0] sm:$0xff]
      %v2939 = vld [vmem:[#allocation2 + $0xd8] sm:$0xff]
      %v2940 = vld [vmem:[#allocation2 + $0xe0] sm:$0xff]
      %v2941 = vld [vmem:[#allocation2 + $0xe8] sm:$0xff]
      %v2942 = vld [vmem:[#allocation2 + $0xf0] sm:$0xff]
      %v2943 = vld [vmem:[#allocation2 + $0xf8] sm:$0xff]
      %v2944 = vld [vmem:[#allocation2 + $0x100] sm:$0xff]
      %v2945 = vld [vmem:[#allocation2 + $0x108] sm:$0xff]
      %v2946 = vld [vmem:[#allocation2 + $0x110] sm:$0xff]
      %v2947 = vld [vmem:[#allocation2 + $0x118] sm:$0xff]
      %v2948 = vld [vmem:[%s5] sm:$0xff]
      %v2949 = vld [vmem:[%s5 + $0x8] sm:$0xff]
      %2951 = vset.pattern.permute.xlu0 0
      %2952 = vperm.xlu0 %2951, %v2948
      %v2953 = vpop.permute.xlu0 %2952
      %2956 = vset.pattern.permute.xlu0 0
      %2957 = vperm.xlu0 %2956, %v2949
      %v2958 = vpop.permute.xlu0 %2957
      %v2962 = vunpack.c.l.b16 %v2910
      %v2963 = vunpack.c.h.b16 %v2910
      %v2964 = vunpack.c.l.b16 %v2911
      %v2965 = vunpack.c.h.b16 %v2911
      %v2966 = vpack.c.b16 %v2964, %v2962
      %v2967 = vpack.c.b16 %v2965, %v2963
      %v3005 = vunpack.c.l.b16 %v2912
      %v3006 = vunpack.c.h.b16 %v2912
      %v3007 = vunpack.c.l.b16 %v2913
      %v3008 = vunpack.c.h.b16 %v2913
      %v3009 = vunpack.c.l.b16 %v2914
      %v3010 = vunpack.c.h.b16 %v2914
      %v3011 = vunpack.c.l.b16 %v2915
      %v3012 = vunpack.c.h.b16 %v2915
      %v3013 = vunpack.c.l.b16 %v2916
      %v3014 = vunpack.c.h.b16 %v2916
      %v3015 = vunpack.c.l.b16 %v2917
      %v3016 = vunpack.c.h.b16 %v2917
      %v3017 = vunpack.c.l.b16 %v2918
      %v3018 = vunpack.c.h.b16 %v2918
      %v3019 = vunpack.c.l.b16 %v2919
      %v3020 = vunpack.c.h.b16 %v2919
      %v3021 = vunpack.c.l.b16 %v2920
      %v3022 = vunpack.c.h.b16 %v2920
      %v3023 = vunpack.c.l.b16 %v2921
      %v3024 = vunpack.c.h.b16 %v2921
      %v3025 = vunpack.c.l.b16 %v2922
      %v3026 = vunpack.c.h.b16 %v2922
      %v3027 = vunpack.c.l.b16 %v2923
      %v3028 = vunpack.c.h.b16 %v2923
      %v3029 = vunpack.c.l.b16 %v2924
      %v3030 = vunpack.c.h.b16 %v2924
      %v3031 = vunpack.c.l.b16 %v2925
      %v3032 = vunpack.c.h.b16 %v2925
      %v3033 = vunpack.c.l.b16 %v2926
      %v3034 = vunpack.c.h.b16 %v2926
      %v3035 = vunpack.c.l.b16 %v2927
      %v3036 = vunpack.c.h.b16 %v2927
      %v3037 = vunpack.c.l.b16 %v2928
      %v3038 = vunpack.c.h.b16 %v2928
      %v3039 = vunpack.c.l.b16 %v2929
      %v3040 = vunpack.c.h.b16 %v2929
      %v3041 = vunpack.c.l.b16 %v2930
      %v3042 = vunpack.c.h.b16 %v2930
      %v3043 = vunpack.c.l.b16 %v2931
      %v3044 = vunpack.c.h.b16 %v2931
      %v3045 = vunpack.c.l.b16 %v2932
      %v3046 = vunpack.c.h.b16 %v2932
      %v3047 = vunpack.c.l.b16 %v2933
      %v3048 = vunpack.c.h.b16 %v2933
      %v3049 = vunpack.c.l.b16 %v2934
      %v3050 = vunpack.c.h.b16 %v2934
      %v3051 = vunpack.c.l.b16 %v2935
      %v3052 = vunpack.c.h.b16 %v2935
      %v3053 = vunpack.c.l.b16 %v2936
      %v3054 = vunpack.c.h.b16 %v2936
      %v3055 = vunpack.c.l.b16 %v2937
      %v3056 = vunpack.c.h.b16 %v2937
      %v3057 = vunpack.c.l.b16 %v2938
      %v3058 = vunpack.c.h.b16 %v2938
      %v3059 = vunpack.c.l.b16 %v2939
      %v3060 = vunpack.c.h.b16 %v2939
      %v3061 = vunpack.c.l.b16 %v2940
      %v3062 = vunpack.c.h.b16 %v2940
      %v3063 = vunpack.c.l.b16 %v2941
      %v3064 = vunpack.c.h.b16 %v2941
      %v3065 = vunpack.c.l.b16 %v2942
      %v3066 = vunpack.c.h.b16 %v2942
      %v3067 = vunpack.c.l.b16 %v2943
      %v3068 = vunpack.c.h.b16 %v2943
      %v3069 = vunpack.c.l.b16 %v2944
      %v3070 = vunpack.c.h.b16 %v2944
      %v3071 = vunpack.c.l.b16 %v2945
      %v3072 = vunpack.c.h.b16 %v2945
      %v3073 = vunpack.c.l.b16 %v2946
      %v3074 = vunpack.c.h.b16 %v2946
      %v3075 = vunpack.c.l.b16 %v2947
      %v3076 = vunpack.c.h.b16 %v2947
      %v3077 = vpack.c.b16 %v3009, %v3005
      %v3078 = vpack.c.b16 %v3010, %v3006
      %v3079 = vpack.c.b16 %v3011, %v3007
      %v3080 = vpack.c.b16 %v3012, %v3008
      %v3081 = vpack.c.b16 %v3017, %v3013
      %v3082 = vpack.c.b16 %v3018, %v3014
      %v3083 = vpack.c.b16 %v3019, %v3015
      %v3084 = vpack.c.b16 %v3020, %v3016
      %v3085 = vpack.c.b16 %v3025, %v3021
      %v3086 = vpack.c.b16 %v3026, %v3022
      %v3087 = vpack.c.b16 %v3027, %v3023
      %v3088 = vpack.c.b16 %v3028, %v3024
      %v3089 = vpack.c.b16 %v3033, %v3029
      %v3090 = vpack.c.b16 %v3034, %v3030
      %v3091 = vpack.c.b16 %v3035, %v3031
      %v3092 = vpack.c.b16 %v3036, %v3032
      %v3093 = vpack.c.b16 %v3041, %v3037
      %v3094 = vpack.c.b16 %v3042, %v3038
      %v3095 = vpack.c.b16 %v3043, %v3039
      %v3096 = vpack.c.b16 %v3044, %v3040
      %v3097 = vpack.c.b16 %v3049, %v3045
      %v3098 = vpack.c.b16 %v3050, %v3046
      %v3099 = vpack.c.b16 %v3051, %v3047
      %v3100 = vpack.c.b16 %v3052, %v3048
      %v3101 = vpack.c.b16 %v3057, %v3053
      %v3102 = vpack.c.b16 %v3058, %v3054
      %v3103 = vpack.c.b16 %v3059, %v3055
      %v3104 = vpack.c.b16 %v3060, %v3056
      %v3105 = vpack.c.b16 %v3065, %v3061
      %v3106 = vpack.c.b16 %v3066, %v3062
      %v3107 = vpack.c.b16 %v3067, %v3063
      %v3108 = vpack.c.b16 %v3068, %v3064
      %v3109 = vpack.c.b16 %v3073, %v3069
      %v3110 = vpack.c.b16 %v3074, %v3070
      %v3111 = vpack.c.b16 %v3075, %v3071
      %v3112 = vpack.c.b16 %v3076, %v3072
      %v3150 = vsel %vm2274, %v2967, 0
      %3152 = vmatprep.subr.bf16.mxu0 %v3106
      %3153 = vmatpush1.bf16.msra.mxu0 %v3105
      %3154 = vmatprep.subr.bf16.mxu0 %v3102
      %3155 = vmatpush1.bf16.msra.mxu0 %v3101
      %3156 = vmatprep.subr.bf16.mxu0 %v3098
      %3157 = vmatpush1.bf16.msra.mxu0 %v3097
      %3158 = vmatprep.subr.bf16.mxu0 %v3094
      %3159 = vmatpush1.bf16.msra.mxu0 %v3093
      %3160 = vmatprep.subr.bf16.mxu0 %v3090
      %3161 = vmatpush1.bf16.msra.mxu0 %v3089
      %3162 = vmatprep.subr.bf16.mxu0 %v3086
      %3163 = vmatpush1.bf16.msra.mxu0 %v3085
      %3164 = vmatprep.subr.bf16.mxu0 %v3082
      %3165 = vmatpush1.bf16.msra.mxu0 %v3081
      %3166 = vmatprep.subr.bf16.mxu0 %v3078
      %3167 = vmatpush1.bf16.msra.mxu0 %v3077
      %3168 = vmatprep.subr.bf16.mxu0 0
      %3169 = vmatpush2.bf16.msra.mxu0 0
      %3170 = vmatprep.subr.bf16.mxu0 0
      %3171 = vmatpush2.bf16.msra.mxu0 0
      %3172 = vmatprep.subr.bf16.mxu0 0
      %3173 = vmatpush2.bf16.msra.mxu0 0
      %3174 = vmatprep.subr.bf16.mxu0 0
      %3175 = vmatpush2.bf16.msra.mxu0 0
      %3176 = vmatprep.subr.bf16.mxu0 0
      %3177 = vmatpush2.bf16.msra.mxu0 0
      %3178 = vmatprep.subr.bf16.mxu0 0
      %3179 = vmatpush2.bf16.msra.mxu0 0
      %3180 = vmatprep.subr.bf16.mxu0 0
      %3181 = vmatpush2.bf16.msra.mxu0 0
      %3182 = vmatprep.subr.bf16.mxu0 %v3110
      %3183 = vmatpush2.bf16.msra.mxu0 %v3109
      %3184 = vmatprep.mubr.bf16.mxu0 %v3150
      %3185 = vmatmul.mubr.bf16.gmra.mxu0 %v2966
      %v3186 = vpop.f32.mrf.mxu0
      %v3187 = vadd.f32 %v2953, %v3186
      %v3188 = vpop.f32.mrf.mxu0
      %v3189 = vadd.f32 %v2953, %v3188
      %v3190 = vpop.f32.mrf.mxu0
      %v3191 = vadd.f32 %v2958, %v3190
      %v3192 = vpop.f32.mrf.mxu0
      %v3193 = vadd.f32 %v2958, %v3192
      %3194 = vdwg.mxu0
      %3195 = vmatprep.subr.bf16.mxu0 %v3108
      %3196 = vmatpush1.bf16.msra.mxu0 %v3107
      %3197 = vmatprep.subr.bf16.mxu0 %v3104
      %3198 = vmatpush1.bf16.msra.mxu0 %v3103
      %3199 = vmatprep.subr.bf16.mxu0 %v3100
      %3200 = vmatpush1.bf16.msra.mxu0 %v3099
      %3201 = vmatprep.subr.bf16.mxu0 %v3096
      %3202 = vmatpush1.bf16.msra.mxu0 %v3095
      %3203 = vmatprep.subr.bf16.mxu0 %v3092
      %3204 = vmatpush1.bf16.msra.mxu0 %v3091
      %3205 = vmatprep.subr.bf16.mxu0 %v3088
      %3206 = vmatpush1.bf16.msra.mxu0 %v3087
      %3207 = vmatprep.subr.bf16.mxu0 %v3084
      %3208 = vmatpush1.bf16.msra.mxu0 %v3083
      %3209 = vmatprep.subr.bf16.mxu0 %v3080
      %3210 = vmatpush1.bf16.msra.mxu0 %v3079
      %3211 = vmatprep.subr.bf16.mxu0 0
      %3212 = vmatpush2.bf16.msra.mxu0 0
      %3213 = vmatprep.subr.bf16.mxu0 0
      %3214 = vmatpush2.bf16.msra.mxu0 0
      %3215 = vmatprep.subr.bf16.mxu0 0
      %3216 = vmatpush2.bf16.msra.mxu0 0
      %3217 = vmatprep.subr.bf16.mxu0 0
      %3218 = vmatpush2.bf16.msra.mxu0 0
      %3219 = vmatprep.subr.bf16.mxu0 0
      %3220 = vmatpush2.bf16.msra.mxu0 0
      %3221 = vmatprep.subr.bf16.mxu0 0
      %3222 = vmatpush2.bf16.msra.mxu0 0
      %3223 = vmatprep.subr.bf16.mxu0 0
      %3224 = vmatpush2.bf16.msra.mxu0 0
      %3225 = vmatprep.subr.bf16.mxu0 %v3112
      %3226 = vmatpush2.bf16.msra.mxu0 %v3111
      %3227 = vmatprep.mubr.bf16.mxu0 %v3150
      %3228 = vmatmul.mubr.bf16.gmra.mxu0 %v2966
      %v3229 = vpop.f32.mrf.mxu0
      %v3230 = vadd.f32 %v2953, %v3229
      %v3231 = vpop.f32.mrf.mxu0
      %v3232 = vadd.f32 %v2953, %v3231
      %v3233 = vpop.f32.mrf.mxu0
      %v3234 = vadd.f32 %v2958, %v3233
      %v3235 = vpop.f32.mrf.mxu0
      %v3236 = vadd.f32 %v2958, %v3235
      %3237 = vdwg.mxu0
      %v3238 = vtanh.pop %v3187
      %v3239 = vtanh.pop %v3189
      %v3240 = vtanh.pop %v3230
      %v3241 = vtanh.pop %v3232
      %v3242 = vtanh.pop %v3191
      %v3243 = vtanh.pop %v3193
      %v3244 = vtanh.pop %v3234
      %v3245 = vtanh.pop %v3236
      %v3246 = vmul.f32 %v3238, %v312
      %v3247 = vmul.f32 %v3239, %v316
      %v3248 = vmul.f32 %v3240, %v320
      %v3249 = vmul.f32 %v3241, %v324
      %v3250 = vmul.f32 %v3242, %v312
      %v3251 = vmul.f32 %v3243, %v316
      %v3252 = vmul.f32 %v3244, %v320
      %v3253 = vmul.f32 %v3245, %v324
      %3254 = vrot.lane.b32.xlu0 %v3246, 21
      %v3255 = vpop.permute.xlu0 %3254
      %3256 = vrot.lane.b32.xlu0 %v3250, 21
      %v3257 = vpop.permute.xlu0 %3256
      %3258 = vrot.lane.b32.xlu0 %v3247, 21
      %v3259 = vpop.permute.xlu0 %3258
      %3260 = vrot.lane.b32.xlu0 %v3251, 21
      %v3261 = vpop.permute.xlu0 %3260
      %3262 = vrot.lane.b32.xlu0 %v3248, 21
      %v3263 = vpop.permute.xlu0 %3262
      %3264 = vrot.lane.b32.xlu0 %v3252, 21
      %v3265 = vpop.permute.xlu0 %3264
      %3266 = vrot.lane.b32.xlu0 %v3249, 21
      %v3267 = vpop.permute.xlu0 %3266
      %3268 = vrot.lane.b32.xlu0 %v3253, 21
      %v3269 = vpop.permute.xlu0 %3268
      %v3270 = vsel %vm673, %v3263, %v3267
      %v3271 = vsel %vm673, %v3265, %v3269
      %v3272 = vsel %vm673, %v3259, %v3263
      %v3273 = vsel %vm673, %v3261, %v3265
      %v3274 = vsel %vm673, %v3255, %v3259
      %v3275 = vsel %vm673, %v3257, %v3261
      %v3276 = vsel %vm673, %v3267, %v3255
      %v3277 = vsel %vm673, %v3269, %v3257
      %v3278 = vpack.c.bf16 %v3277, %v3276
      %v3279 = vpack.c.bf16 %v3275, %v3274
      %v3280 = vpack.c.bf16 %v3273, %v3272
      %v3281 = vpack.c.bf16 %v3271, %v3270
      %v3286 = vunpack.c.l.b16 %v3278
      %v3287 = vunpack.c.l.b16 %v3279
      %v3288 = vunpack.c.l.b16 %v3280
      %v3289 = vunpack.c.l.b16 %v3281
      %v3290 = vunpack.c.h.b16 %v3278
      %v3291 = vunpack.c.h.b16 %v3279
      %v3292 = vunpack.c.h.b16 %v3280
      %v3293 = vunpack.c.h.b16 %v3281
      %v3294 = vpack.c.b16 %v3287, %v3286
      %v3295 = vpack.c.b16 %v3289, %v3288
      %v3296 = vpack.c.b16 %v3291, %v3290
      %v3297 = vpack.c.b16 %v3293, %v3292
      %3302 = vst [vmem:[#allocation2] sm:$0xff] %v3294
      %3303 = vst [vmem:[#allocation2 + $0x8] sm:$0xff] %v3295
      %3304 = vst [vmem:[#allocation2 + $0x10] sm:$0xff] %v3296
      %3305 = vst [vmem:[#allocation2 + $0x18] sm:$0xff] %v3297
      %3306 = vrot.lane.b32.xlu0 %v3246, 20
      %v3307 = vpop.permute.xlu0 %3306
      %3308 = vrot.lane.b32.xlu0 %v3250, 20
      %v3309 = vpop.permute.xlu0 %3308
      %3310 = vrot.lane.b32.xlu0 %v3247, 20
      %v3311 = vpop.permute.xlu0 %3310
      %3312 = vrot.lane.b32.xlu0 %v3251, 20
      %v3313 = vpop.permute.xlu0 %3312
      %3314 = vrot.lane.b32.xlu0 %v3248, 20
      %v3315 = vpop.permute.xlu0 %3314
      %3316 = vrot.lane.b32.xlu0 %v3252, 20
      %v3317 = vpop.permute.xlu0 %3316
      %3318 = vrot.lane.b32.xlu0 %v3249, 20
      %v3319 = vpop.permute.xlu0 %3318
      %3320 = vrot.lane.b32.xlu0 %v3253, 20
      %v3321 = vpop.permute.xlu0 %3320
      %v3322 = vsel %vm726, %v3315, %v3319
      %v3323 = vsel %vm726, %v3317, %v3321
      %v3324 = vsel %vm726, %v3311, %v3315
      %v3325 = vsel %vm726, %v3313, %v3317
      %v3326 = vsel %vm726, %v3307, %v3311
      %v3327 = vsel %vm726, %v3309, %v3313
      %v3328 = vsel %vm726, %v3319, %v3307
      %v3329 = vsel %vm726, %v3321, %v3309
      %v3330 = vpack.c.bf16 %v3329, %v3328
      %v3331 = vpack.c.bf16 %v3327, %v3326
      %v3332 = vpack.c.bf16 %v3325, %v3324
      %v3333 = vpack.c.bf16 %v3323, %v3322
      %v3338 = vunpack.c.l.b16 %v3330
      %v3339 = vunpack.c.l.b16 %v3331
      %v3340 = vunpack.c.l.b16 %v3332
      %v3341 = vunpack.c.l.b16 %v3333
      %v3342 = vunpack.c.h.b16 %v3330
      %v3343 = vunpack.c.h.b16 %v3331
      %v3344 = vunpack.c.h.b16 %v3332
      %v3345 = vunpack.c.h.b16 %v3333
      %v3346 = vpack.c.b16 %v3339, %v3338
      %v3347 = vpack.c.b16 %v3341, %v3340
      %v3348 = vpack.c.b16 %v3343, %v3342
      %v3349 = vpack.c.b16 %v3345, %v3344
      %3354 = vst [vmem:[#allocation2 + $0x20] sm:$0xff] %v3346
      %3355 = vst [vmem:[#allocation2 + $0x28] sm:$0xff] %v3347
      %3356 = vst [vmem:[#allocation2 + $0x30] sm:$0xff] %v3348
      %3357 = vst [vmem:[#allocation2 + $0x38] sm:$0xff] %v3349
      %3358 = vrot.lane.b32.xlu0 %v3246, 19
      %v3359 = vpop.permute.xlu0 %3358
      %3360 = vrot.lane.b32.xlu0 %v3250, 19
      %v3361 = vpop.permute.xlu0 %3360
      %3362 = vrot.lane.b32.xlu0 %v3247, 19
      %v3363 = vpop.permute.xlu0 %3362
      %3364 = vrot.lane.b32.xlu0 %v3251, 19
      %v3365 = vpop.permute.xlu0 %3364
      %3366 = vrot.lane.b32.xlu0 %v3248, 19
      %v3367 = vpop.permute.xlu0 %3366
      %3368 = vrot.lane.b32.xlu0 %v3252, 19
      %v3369 = vpop.permute.xlu0 %3368
      %3370 = vrot.lane.b32.xlu0 %v3249, 19
      %v3371 = vpop.permute.xlu0 %3370
      %3372 = vrot.lane.b32.xlu0 %v3253, 19
      %v3373 = vpop.permute.xlu0 %3372
      %v3374 = vsel %vm779, %v3367, %v3371
      %v3375 = vsel %vm779, %v3369, %v3373
      %v3376 = vsel %vm779, %v3363, %v3367
      %v3377 = vsel %vm779, %v3365, %v3369
      %v3378 = vsel %vm779, %v3359, %v3363
      %v3379 = vsel %vm779, %v3361, %v3365
      %v3380 = vsel %vm779, %v3371, %v3359
      %v3381 = vsel %vm779, %v3373, %v3361
      %v3382 = vpack.c.bf16 %v3381, %v3380
      %v3383 = vpack.c.bf16 %v3379, %v3378
      %v3384 = vpack.c.bf16 %v3377, %v3376
      %v3385 = vpack.c.bf16 %v3375, %v3374
      %v3390 = vunpack.c.l.b16 %v3382
      %v3391 = vunpack.c.l.b16 %v3383
      %v3392 = vunpack.c.l.b16 %v3384
      %v3393 = vunpack.c.l.b16 %v3385
      %v3394 = vunpack.c.h.b16 %v3382
      %v3395 = vunpack.c.h.b16 %v3383
      %v3396 = vunpack.c.h.b16 %v3384
      %v3397 = vunpack.c.h.b16 %v3385
      %v3398 = vpack.c.b16 %v3391, %v3390
      %v3399 = vpack.c.b16 %v3393, %v3392
      %v3400 = vpack.c.b16 %v3395, %v3394
      %v3401 = vpack.c.b16 %v3397, %v3396
      %3406 = vst [vmem:[#allocation2 + $0x40] sm:$0xff] %v3398
      %3407 = vst [vmem:[#allocation2 + $0x48] sm:$0xff] %v3399
      %3408 = vst [vmem:[#allocation2 + $0x50] sm:$0xff] %v3400
      %3409 = vst [vmem:[#allocation2 + $0x58] sm:$0xff] %v3401
      %3410 = vrot.lane.b32.xlu0 %v3246, 1
      %v3411 = vpop.permute.xlu0 %3410
      %3412 = vrot.lane.b32.xlu0 %v3250, 1
      %v3413 = vpop.permute.xlu0 %3412
      %3414 = vrot.lane.b32.xlu0 %v3247, 1
      %v3415 = vpop.permute.xlu0 %3414
      %3416 = vrot.lane.b32.xlu0 %v3251, 1
      %v3417 = vpop.permute.xlu0 %3416
      %3418 = vrot.lane.b32.xlu0 %v3248, 1
      %v3419 = vpop.permute.xlu0 %3418
      %3420 = vrot.lane.b32.xlu0 %v3252, 1
      %v3421 = vpop.permute.xlu0 %3420
      %3422 = vrot.lane.b32.xlu0 %v3249, 1
      %v3423 = vpop.permute.xlu0 %3422
      %3424 = vrot.lane.b32.xlu0 %v3253, 1
      %v3425 = vpop.permute.xlu0 %3424
      %v3426 = vsel %vm938, %v3419, %v3423
      %v3427 = vsel %vm938, %v3421, %v3425
      %v3428 = vsel %vm938, %v3415, %v3419
      %v3429 = vsel %vm938, %v3417, %v3421
      %v3430 = vsel %vm938, %v3411, %v3415
      %v3431 = vsel %vm938, %v3413, %v3417
      %v3432 = vsel %vm938, %v3423, %v3411
      %v3433 = vsel %vm938, %v3425, %v3413
      %v3434 = vpack.c.bf16 %v3433, %v3432
      %v3435 = vpack.c.bf16 %v3431, %v3430
      %v3436 = vpack.c.bf16 %v3429, %v3428
      %v3437 = vpack.c.bf16 %v3427, %v3426
      %v3442 = vunpack.c.l.b16 %v3434
      %v3443 = vunpack.c.l.b16 %v3435
      %v3444 = vunpack.c.l.b16 %v3436
      %v3445 = vunpack.c.l.b16 %v3437
      %v3446 = vunpack.c.h.b16 %v3434
      %v3447 = vunpack.c.h.b16 %v3435
      %v3448 = vunpack.c.h.b16 %v3436
      %v3449 = vunpack.c.h.b16 %v3437
      %v3450 = vpack.c.b16 %v3443, %v3442
      %v3451 = vpack.c.b16 %v3445, %v3444
      %v3452 = vpack.c.b16 %v3447, %v3446
      %v3453 = vpack.c.b16 %v3449, %v3448
      %3458 = vst [vmem:[#allocation2 + $0x60] sm:$0xff] %v3450
      %3459 = vst [vmem:[#allocation2 + $0x68] sm:$0xff] %v3451
      %3460 = vst [vmem:[#allocation2 + $0x70] sm:$0xff] %v3452
      %3461 = vst [vmem:[#allocation2 + $0x78] sm:$0xff] %v3453
      %v3462 = vpack.c.bf16 %v3250, %v3246
      %v3463 = vpack.c.bf16 %v3251, %v3247
      %v3464 = vpack.c.bf16 %v3252, %v3248
      %v3465 = vpack.c.bf16 %v3253, %v3249
      %v3470 = vunpack.c.l.b16 %v3462
      %v3471 = vunpack.c.l.b16 %v3463
      %v3472 = vunpack.c.l.b16 %v3464
      %v3473 = vunpack.c.l.b16 %v3465
      %v3474 = vunpack.c.h.b16 %v3462
      %v3475 = vunpack.c.h.b16 %v3463
      %v3476 = vunpack.c.h.b16 %v3464
      %v3477 = vunpack.c.h.b16 %v3465
      %v3478 = vpack.c.b16 %v3471, %v3470
      %v3479 = vpack.c.b16 %v3473, %v3472
      %v3480 = vpack.c.b16 %v3475, %v3474
      %v3481 = vpack.c.b16 %v3477, %v3476
      %3486 = vst [vmem:[#allocation2 + $0x80] sm:$0xff] %v3478
      %3487 = vst [vmem:[#allocation2 + $0x88] sm:$0xff] %v3479
      %3488 = vst [vmem:[#allocation2 + $0x90] sm:$0xff] %v3480
      %3489 = vst [vmem:[#allocation2 + $0x98] sm:$0xff] %v3481
      %3490 = vrot.lane.b32.xlu0 %v3246, 127
      %v3491 = vpop.permute.xlu0 %3490
      %3492 = vrot.lane.b32.xlu0 %v3250, 127
      %v3493 = vpop.permute.xlu0 %3492
      %3494 = vrot.lane.b32.xlu0 %v3247, 127
      %v3495 = vpop.permute.xlu0 %3494
      %3496 = vrot.lane.b32.xlu0 %v3251, 127
      %v3497 = vpop.permute.xlu0 %3496
      %3498 = vrot.lane.b32.xlu0 %v3248, 127
      %v3499 = vpop.permute.xlu0 %3498
      %3500 = vrot.lane.b32.xlu0 %v3252, 127
      %v3501 = vpop.permute.xlu0 %3500
      %3502 = vrot.lane.b32.xlu0 %v3249, 127
      %v3503 = vpop.permute.xlu0 %3502
      %3504 = vrot.lane.b32.xlu0 %v3253, 127
      %v3505 = vpop.permute.xlu0 %3504
      %v3506 = vsel %vm1019, %v3499, %v3503
      %v3507 = vsel %vm1019, %v3501, %v3505
      %v3508 = vsel %vm1019, %v3495, %v3499
      %v3509 = vsel %vm1019, %v3497, %v3501
      %v3510 = vsel %vm1019, %v3491, %v3495
      %v3511 = vsel %vm1019, %v3493, %v3497
      %v3512 = vsel %vm1019, %v3503, %v3491
      %v3513 = vsel %vm1019, %v3505, %v3493
      %v3514 = vpack.c.bf16 %v3511, %v3510
      %v3515 = vpack.c.bf16 %v3509, %v3508
      %v3516 = vpack.c.bf16 %v3507, %v3506
      %v3517 = vpack.c.bf16 %v3513, %v3512
      %v3522 = vunpack.c.l.b16 %v3514
      %v3523 = vunpack.c.l.b16 %v3515
      %v3524 = vunpack.c.l.b16 %v3516
      %v3525 = vunpack.c.l.b16 %v3517
      %v3526 = vunpack.c.h.b16 %v3514
      %v3527 = vunpack.c.h.b16 %v3515
      %v3528 = vunpack.c.h.b16 %v3516
      %v3529 = vunpack.c.h.b16 %v3517
      %v3530 = vpack.c.b16 %v3523, %v3522
      %v3531 = vpack.c.b16 %v3525, %v3524
      %v3532 = vpack.c.b16 %v3527, %v3526
      %v3533 = vpack.c.b16 %v3529, %v3528
      %3538 = vst [vmem:[#allocation2 + $0xa0] sm:$0xff] %v3530
      %3539 = vst [vmem:[#allocation2 + $0xa8] sm:$0xff] %v3531
      %3540 = vst [vmem:[#allocation2 + $0xb0] sm:$0xff] %v3532
      %3541 = vst [vmem:[#allocation2 + $0xb8] sm:$0xff] %v3533
      %3542 = vrot.lane.b32.xlu0 %v3246, 109
      %v3543 = vpop.permute.xlu0 %3542
      %3544 = vrot.lane.b32.xlu0 %v3250, 109
      %v3545 = vpop.permute.xlu0 %3544
      %3546 = vrot.lane.b32.xlu0 %v3247, 109
      %v3547 = vpop.permute.xlu0 %3546
      %3548 = vrot.lane.b32.xlu0 %v3251, 109
      %v3549 = vpop.permute.xlu0 %3548
      %3550 = vrot.lane.b32.xlu0 %v3248, 109
      %v3551 = vpop.permute.xlu0 %3550
      %3552 = vrot.lane.b32.xlu0 %v3252, 109
      %v3553 = vpop.permute.xlu0 %3552
      %3554 = vrot.lane.b32.xlu0 %v3249, 109
      %v3555 = vpop.permute.xlu0 %3554
      %3556 = vrot.lane.b32.xlu0 %v3253, 109
      %v3557 = vpop.permute.xlu0 %3556
      %v3558 = vsel %vm1178, %v3551, %v3555
      %v3559 = vsel %vm1178, %v3553, %v3557
      %v3560 = vsel %vm1178, %v3547, %v3551
      %v3561 = vsel %vm1178, %v3549, %v3553
      %v3562 = vsel %vm1178, %v3543, %v3547
      %v3563 = vsel %vm1178, %v3545, %v3549
      %v3564 = vsel %vm1178, %v3555, %v3543
      %v3565 = vsel %vm1178, %v3557, %v3545
      %v3566 = vpack.c.bf16 %v3563, %v3562
      %v3567 = vpack.c.bf16 %v3561, %v3560
      %v3568 = vpack.c.bf16 %v3559, %v3558
      %v3569 = vpack.c.bf16 %v3565, %v3564
      %v3574 = vunpack.c.l.b16 %v3566
      %v3575 = vunpack.c.l.b16 %v3567
      %v3576 = vunpack.c.l.b16 %v3568
      %v3577 = vunpack.c.l.b16 %v3569
      %v3578 = vunpack.c.h.b16 %v3566
      %v3579 = vunpack.c.h.b16 %v3567
      %v3580 = vunpack.c.h.b16 %v3568
      %v3581 = vunpack.c.h.b16 %v3569
      %v3582 = vpack.c.b16 %v3575, %v3574
      %v3583 = vpack.c.b16 %v3577, %v3576
      %v3584 = vpack.c.b16 %v3579, %v3578
      %v3585 = vpack.c.b16 %v3581, %v3580
      %3590 = vst [vmem:[#allocation2 + $0xc0] sm:$0xff] %v3582
      %3591 = vst [vmem:[#allocation2 + $0xc8] sm:$0xff] %v3583
      %3592 = vst [vmem:[#allocation2 + $0xd0] sm:$0xff] %v3584
      %3593 = vst [vmem:[#allocation2 + $0xd8] sm:$0xff] %v3585
      %3594 = vrot.lane.b32.xlu0 %v3246, 108
      %v3595 = vpop.permute.xlu0 %3594
      %3596 = vrot.lane.b32.xlu0 %v3250, 108
      %v3597 = vpop.permute.xlu0 %3596
      %3598 = vrot.lane.b32.xlu0 %v3247, 108
      %v3599 = vpop.permute.xlu0 %3598
      %3600 = vrot.lane.b32.xlu0 %v3251, 108
      %v3601 = vpop.permute.xlu0 %3600
      %3602 = vrot.lane.b32.xlu0 %v3248, 108
      %v3603 = vpop.permute.xlu0 %3602
      %3604 = vrot.lane.b32.xlu0 %v3252, 108
      %v3605 = vpop.permute.xlu0 %3604
      %3606 = vrot.lane.b32.xlu0 %v3249, 108
      %v3607 = vpop.permute.xlu0 %3606
      %3608 = vrot.lane.b32.xlu0 %v3253, 108
      %v3609 = vpop.permute.xlu0 %3608
      %v3610 = vsel %vm1231, %v3603, %v3607
      %v3611 = vsel %vm1231, %v3605, %v3609
      %v3612 = vsel %vm1231, %v3599, %v3603
      %v3613 = vsel %vm1231, %v3601, %v3605
      %v3614 = vsel %vm1231, %v3595, %v3599
      %v3615 = vsel %vm1231, %v3597, %v3601
      %v3616 = vsel %vm1231, %v3607, %v3595
      %v3617 = vsel %vm1231, %v3609, %v3597
      %v3618 = vpack.c.bf16 %v3615, %v3614
      %v3619 = vpack.c.bf16 %v3613, %v3612
      %v3620 = vpack.c.bf16 %v3611, %v3610
      %v3621 = vpack.c.bf16 %v3617, %v3616
      %v3626 = vunpack.c.l.b16 %v3618
      %v3627 = vunpack.c.l.b16 %v3619
      %v3628 = vunpack.c.l.b16 %v3620
      %v3629 = vunpack.c.l.b16 %v3621
      %v3630 = vunpack.c.h.b16 %v3618
      %v3631 = vunpack.c.h.b16 %v3619
      %v3632 = vunpack.c.h.b16 %v3620
      %v3633 = vunpack.c.h.b16 %v3621
      %v3634 = vpack.c.b16 %v3627, %v3626
      %v3635 = vpack.c.b16 %v3629, %v3628
      %v3636 = vpack.c.b16 %v3631, %v3630
      %v3637 = vpack.c.b16 %v3633, %v3632
      %3642 = vst [vmem:[#allocation2 + $0xe0] sm:$0xff] %v3634
      %3643 = vst [vmem:[#allocation2 + $0xe8] sm:$0xff] %v3635
      %3644 = vst [vmem:[#allocation2 + $0xf0] sm:$0xff] %v3636
      %3645 = vst [vmem:[#allocation2 + $0xf8] sm:$0xff] %v3637
      %3646 = vrot.lane.b32.xlu0 %v3246, 107
      %v3647 = vpop.permute.xlu0 %3646
      %3648 = vrot.lane.b32.xlu0 %v3250, 107
      %v3649 = vpop.permute.xlu0 %3648
      %3650 = vrot.lane.b32.xlu0 %v3247, 107
      %v3651 = vpop.permute.xlu0 %3650
      %3652 = vrot.lane.b32.xlu0 %v3251, 107
      %v3653 = vpop.permute.xlu0 %3652
      %3654 = vrot.lane.b32.xlu0 %v3248, 107
      %v3655 = vpop.permute.xlu0 %3654
      %3656 = vrot.lane.b32.xlu0 %v3252, 107
      %v3657 = vpop.permute.xlu0 %3656
      %3658 = vrot.lane.b32.xlu0 %v3249, 107
      %v3659 = vpop.permute.xlu0 %3658
      %3660 = vrot.lane.b32.xlu0 %v3253, 107
      %v3661 = vpop.permute.xlu0 %3660
      %v3662 = vsel %vm1284, %v3655, %v3659
      %v3663 = vsel %vm1284, %v3657, %v3661
      %v3664 = vsel %vm1284, %v3651, %v3655
      %v3665 = vsel %vm1284, %v3653, %v3657
      %v3666 = vsel %vm1284, %v3647, %v3651
      %v3667 = vsel %vm1284, %v3649, %v3653
      %v3668 = vsel %vm1284, %v3659, %v3647
      %v3669 = vsel %vm1284, %v3661, %v3649
      %v3670 = vpack.c.bf16 %v3667, %v3666
      %v3671 = vpack.c.bf16 %v3665, %v3664
      %v3672 = vpack.c.bf16 %v3663, %v3662
      %v3673 = vpack.c.bf16 %v3669, %v3668
      %v3678 = vunpack.c.l.b16 %v3670
      %v3679 = vunpack.c.l.b16 %v3671
      %v3680 = vunpack.c.l.b16 %v3672
      %v3681 = vunpack.c.l.b16 %v3673
      %v3682 = vunpack.c.h.b16 %v3670
      %v3683 = vunpack.c.h.b16 %v3671
      %v3684 = vunpack.c.h.b16 %v3672
      %v3685 = vunpack.c.h.b16 %v3673
      %v3686 = vpack.c.b16 %v3679, %v3678
      %v3687 = vpack.c.b16 %v3681, %v3680
      %v3688 = vpack.c.b16 %v3683, %v3682
      %v3689 = vpack.c.b16 %v3685, %v3684
      %3694 = vst [vmem:[#allocation2 + $0x100] sm:$0xff] %v3686
      %3695 = vst [vmem:[#allocation2 + $0x108] sm:$0xff] %v3687
      %3696 = vst [vmem:[#allocation2 + $0x110] sm:$0xff] %v3688
      %3697 = vst [vmem:[#allocation2 + $0x118] sm:$0xff] %v3689
      %v3698 = vld [vmem:[%s6] sm:$0xff]
      %v3699 = vld [vmem:[#allocation2] sm:$0xff]
      %v3700 = vld [vmem:[#allocation2 + $0x8] sm:$0xff]
      %v3701 = vld [vmem:[#allocation2 + $0x10] sm:$0xff]
      %v3702 = vld [vmem:[#allocation2 + $0x18] sm:$0xff]
      %v3703 = vld [vmem:[#allocation2 + $0x20] sm:$0xff]
      %v3704 = vld [vmem:[#allocation2 + $0x28] sm:$0xff]
      %v3705 = vld [vmem:[#allocation2 + $0x30] sm:$0xff]
      %v3706 = vld [vmem:[#allocation2 + $0x38] sm:$0xff]
      %v3707 = vld [vmem:[#allocation2 + $0x40] sm:$0xff]
      %v3708 = vld [vmem:[#allocation2 + $0x48] sm:$0xff]
      %v3709 = vld [vmem:[#allocation2 + $0x50] sm:$0xff]
      %v3710 = vld [vmem:[#allocation2 + $0x58] sm:$0xff]
      %v3711 = vld [vmem:[#allocation2 + $0x60] sm:$0xff]
      %v3712 = vld [vmem:[#allocation2 + $0x68] sm:$0xff]
      %v3713 = vld [vmem:[#allocation2 + $0x70] sm:$0xff]
      %v3714 = vld [vmem:[#allocation2 + $0x78] sm:$0xff]
      %v3715 = vld [vmem:[#allocation2 + $0x80] sm:$0xff]
      %v3716 = vld [vmem:[#allocation2 + $0x88] sm:$0xff]
      %v3717 = vld [vmem:[#allocation2 + $0x90] sm:$0xff]
      %v3718 = vld [vmem:[#allocation2 + $0x98] sm:$0xff]
      %v3719 = vld [vmem:[#allocation2 + $0xa0] sm:$0xff]
      %v3720 = vld [vmem:[#allocation2 + $0xa8] sm:$0xff]
      %v3721 = vld [vmem:[#allocation2 + $0xb0] sm:$0xff]
      %v3722 = vld [vmem:[#allocation2 + $0xb8] sm:$0xff]
      %v3723 = vld [vmem:[#allocation2 + $0xc0] sm:$0xff]
      %v3724 = vld [vmem:[#allocation2 + $0xc8] sm:$0xff]
      %v3725 = vld [vmem:[#allocation2 + $0xd0] sm:$0xff]
      %v3726 = vld [vmem:[#allocation2 + $0xd8] sm:$0xff]
      %v3727 = vld [vmem:[#allocation2 + $0xe0] sm:$0xff]
      %v3728 = vld [vmem:[#allocation2 + $0xe8] sm:$0xff]
      %v3729 = vld [vmem:[#allocation2 + $0xf0] sm:$0xff]
      %v3730 = vld [vmem:[#allocation2 + $0xf8] sm:$0xff]
      %v3731 = vld [vmem:[#allocation2 + $0x100] sm:$0xff]
      %v3732 = vld [vmem:[#allocation2 + $0x108] sm:$0xff]
      %v3733 = vld [vmem:[#allocation2 + $0x110] sm:$0xff]
      %v3734 = vld [vmem:[#allocation2 + $0x118] sm:$0xff]
      %v3735 = vld [vmem:[%s7] sm:$0xff]
      %3737 = vset.pattern.permute.xlu0 0
      %3738 = vperm.xlu0 %3737, %v3735
      %v3739 = vpop.permute.xlu0 %3738
      %v3742 = vunpack.c.l.b16 %v3698
      %v3743 = vunpack.c.h.b16 %v3698
      %v3744 = vpack.c.b16 %v3742, %v3742
      %v3745 = vpack.c.b16 %v3743, %v3743
      %v3783 = vunpack.c.l.b16 %v3699
      %v3784 = vunpack.c.h.b16 %v3699
      %v3785 = vunpack.c.l.b16 %v3700
      %v3786 = vunpack.c.h.b16 %v3700
      %v3787 = vunpack.c.l.b16 %v3701
      %v3788 = vunpack.c.h.b16 %v3701
      %v3789 = vunpack.c.l.b16 %v3702
      %v3790 = vunpack.c.h.b16 %v3702
      %v3791 = vunpack.c.l.b16 %v3703
      %v3792 = vunpack.c.h.b16 %v3703
      %v3793 = vunpack.c.l.b16 %v3704
      %v3794 = vunpack.c.h.b16 %v3704
      %v3795 = vunpack.c.l.b16 %v3705
      %v3796 = vunpack.c.h.b16 %v3705
      %v3797 = vunpack.c.l.b16 %v3706
      %v3798 = vunpack.c.h.b16 %v3706
      %v3799 = vunpack.c.l.b16 %v3707
      %v3800 = vunpack.c.h.b16 %v3707
      %v3801 = vunpack.c.l.b16 %v3708
      %v3802 = vunpack.c.h.b16 %v3708
      %v3803 = vunpack.c.l.b16 %v3709
      %v3804 = vunpack.c.h.b16 %v3709
      %v3805 = vunpack.c.l.b16 %v3710
      %v3806 = vunpack.c.h.b16 %v3710
      %v3807 = vunpack.c.l.b16 %v3711
      %v3808 = vunpack.c.h.b16 %v3711
      %v3809 = vunpack.c.l.b16 %v3712
      %v3810 = vunpack.c.h.b16 %v3712
      %v3811 = vunpack.c.l.b16 %v3713
      %v3812 = vunpack.c.h.b16 %v3713
      %v3813 = vunpack.c.l.b16 %v3714
      %v3814 = vunpack.c.h.b16 %v3714
      %v3815 = vunpack.c.l.b16 %v3715
      %v3816 = vunpack.c.h.b16 %v3715
      %v3817 = vunpack.c.l.b16 %v3716
      %v3818 = vunpack.c.h.b16 %v3716
      %v3819 = vunpack.c.l.b16 %v3717
      %v3820 = vunpack.c.h.b16 %v3717
      %v3821 = vunpack.c.l.b16 %v3718
      %v3822 = vunpack.c.h.b16 %v3718
      %v3823 = vunpack.c.l.b16 %v3719
      %v3824 = vunpack.c.h.b16 %v3719
      %v3825 = vunpack.c.l.b16 %v3720
      %v3826 = vunpack.c.h.b16 %v3720
      %v3827 = vunpack.c.l.b16 %v3721
      %v3828 = vunpack.c.h.b16 %v3721
      %v3829 = vunpack.c.l.b16 %v3722
      %v3830 = vunpack.c.h.b16 %v3722
      %v3831 = vunpack.c.l.b16 %v3723
      %v3832 = vunpack.c.h.b16 %v3723
      %v3833 = vunpack.c.l.b16 %v3724
      %v3834 = vunpack.c.h.b16 %v3724
      %v3835 = vunpack.c.l.b16 %v3725
      %v3836 = vunpack.c.h.b16 %v3725
      %v3837 = vunpack.c.l.b16 %v3726
      %v3838 = vunpack.c.h.b16 %v3726
      %v3839 = vunpack.c.l.b16 %v3727
      %v3840 = vunpack.c.h.b16 %v3727
      %v3841 = vunpack.c.l.b16 %v3728
      %v3842 = vunpack.c.h.b16 %v3728
      %v3843 = vunpack.c.l.b16 %v3729
      %v3844 = vunpack.c.h.b16 %v3729
      %v3845 = vunpack.c.l.b16 %v3730
      %v3846 = vunpack.c.h.b16 %v3730
      %v3847 = vunpack.c.l.b16 %v3731
      %v3848 = vunpack.c.h.b16 %v3731
      %v3849 = vunpack.c.l.b16 %v3732
      %v3850 = vunpack.c.h.b16 %v3732
      %v3851 = vunpack.c.l.b16 %v3733
      %v3852 = vunpack.c.h.b16 %v3733
      %v3853 = vunpack.c.l.b16 %v3734
      %v3854 = vunpack.c.h.b16 %v3734
      %v3855 = vpack.c.b16 %v3787, %v3783
      %v3856 = vpack.c.b16 %v3788, %v3784
      %v3857 = vpack.c.b16 %v3789, %v3785
      %v3858 = vpack.c.b16 %v3790, %v3786
      %v3859 = vpack.c.b16 %v3795, %v3791
      %v3860 = vpack.c.b16 %v3796, %v3792
      %v3861 = vpack.c.b16 %v3797, %v3793
      %v3862 = vpack.c.b16 %v3798, %v3794
      %v3863 = vpack.c.b16 %v3803, %v3799
      %v3864 = vpack.c.b16 %v3804, %v3800
      %v3865 = vpack.c.b16 %v3805, %v3801
      %v3866 = vpack.c.b16 %v3806, %v3802
      %v3867 = vpack.c.b16 %v3811, %v3807
      %v3868 = vpack.c.b16 %v3812, %v3808
      %v3869 = vpack.c.b16 %v3813, %v3809
      %v3870 = vpack.c.b16 %v3814, %v3810
      %v3871 = vpack.c.b16 %v3819, %v3815
      %v3872 = vpack.c.b16 %v3820, %v3816
      %v3873 = vpack.c.b16 %v3821, %v3817
      %v3874 = vpack.c.b16 %v3822, %v3818
      %v3875 = vpack.c.b16 %v3827, %v3823
      %v3876 = vpack.c.b16 %v3828, %v3824
      %v3877 = vpack.c.b16 %v3829, %v3825
      %v3878 = vpack.c.b16 %v3830, %v3826
      %v3879 = vpack.c.b16 %v3835, %v3831
      %v3880 = vpack.c.b16 %v3836, %v3832
      %v3881 = vpack.c.b16 %v3837, %v3833
      %v3882 = vpack.c.b16 %v3838, %v3834
      %v3883 = vpack.c.b16 %v3843, %v3839
      %v3884 = vpack.c.b16 %v3844, %v3840
      %v3885 = vpack.c.b16 %v3845, %v3841
      %v3886 = vpack.c.b16 %v3846, %v3842
      %v3887 = vpack.c.b16 %v3851, %v3847
      %v3888 = vpack.c.b16 %v3852, %v3848
      %v3889 = vpack.c.b16 %v3853, %v3849
      %v3890 = vpack.c.b16 %v3854, %v3850
      %v3928 = vsel %vm2274, %v3745, 0
      %3930 = vmatprep.subr.bf16.mxu0 %v3884
      %3931 = vmatpush1.bf16.msra.mxu0 %v3883
      %3932 = vmatprep.subr.bf16.mxu0 %v3880
      %3933 = vmatpush1.bf16.msra.mxu0 %v3879
      %3934 = vmatprep.subr.bf16.mxu0 %v3876
      %3935 = vmatpush1.bf16.msra.mxu0 %v3875
      %3936 = vmatprep.subr.bf16.mxu0 %v3872
      %3937 = vmatpush1.bf16.msra.mxu0 %v3871
      %3938 = vmatprep.subr.bf16.mxu0 %v3868
      %3939 = vmatpush1.bf16.msra.mxu0 %v3867
      %3940 = vmatprep.subr.bf16.mxu0 %v3864
      %3941 = vmatpush1.bf16.msra.mxu0 %v3863
      %3942 = vmatprep.subr.bf16.mxu0 %v3860
      %3943 = vmatpush1.bf16.msra.mxu0 %v3859
      %3944 = vmatprep.subr.bf16.mxu0 %v3856
      %3945 = vmatpush1.bf16.msra.mxu0 %v3855
      %3946 = vmatprep.subr.bf16.mxu0 0
      %3947 = vmatpush2.bf16.msra.mxu0 0
      %3948 = vmatprep.subr.bf16.mxu0 0
      %3949 = vmatpush2.bf16.msra.mxu0 0
      %3950 = vmatprep.subr.bf16.mxu0 0
      %3951 = vmatpush2.bf16.msra.mxu0 0
      %3952 = vmatprep.subr.bf16.mxu0 0
      %3953 = vmatpush2.bf16.msra.mxu0 0
      %3954 = vmatprep.subr.bf16.mxu0 0
      %3955 = vmatpush2.bf16.msra.mxu0 0
      %3956 = vmatprep.subr.bf16.mxu0 0
      %3957 = vmatpush2.bf16.msra.mxu0 0
      %3958 = vmatprep.subr.bf16.mxu0 0
      %3959 = vmatpush2.bf16.msra.mxu0 0
      %3960 = vmatprep.subr.bf16.mxu0 %v3888
      %3961 = vmatpush2.bf16.msra.mxu0 %v3887
      %3962 = vmatprep.mubr.bf16.mxu0 %v3928
      %3963 = vmatmul.mubr.bf16.gmra.mxu0 %v3744
      %v3964 = vpop.f32.mrf.mxu0
      %v3965 = vadd.f32 %v3739, %v3964
      %v3966 = vpop.f32.mrf.mxu0
      %v3967 = vadd.f32 %v3739, %v3966
      %v3968 = vpop.f32.mrf.mxu0
      %v3969 = vpop.f32.mrf.mxu0
      %3970 = vdwg.mxu0
      %3971 = vmatprep.subr.bf16.mxu0 %v3886
      %3972 = vmatpush1.bf16.msra.mxu0 %v3885
      %3973 = vmatprep.subr.bf16.mxu0 %v3882
      %3974 = vmatpush1.bf16.msra.mxu0 %v3881
      %3975 = vmatprep.subr.bf16.mxu0 %v3878
      %3976 = vmatpush1.bf16.msra.mxu0 %v3877
      %3977 = vmatprep.subr.bf16.mxu0 %v3874
      %3978 = vmatpush1.bf16.msra.mxu0 %v3873
      %3979 = vmatprep.subr.bf16.mxu0 %v3870
      %3980 = vmatpush1.bf16.msra.mxu0 %v3869
      %3981 = vmatprep.subr.bf16.mxu0 %v3866
      %3982 = vmatpush1.bf16.msra.mxu0 %v3865
      %3983 = vmatprep.subr.bf16.mxu0 %v3862
      %3984 = vmatpush1.bf16.msra.mxu0 %v3861
      %3985 = vmatprep.subr.bf16.mxu0 %v3858
      %3986 = vmatpush1.bf16.msra.mxu0 %v3857
      %3987 = vmatprep.subr.bf16.mxu0 0
      %3988 = vmatpush2.bf16.msra.mxu0 0
      %3989 = vmatprep.subr.bf16.mxu0 0
      %3990 = vmatpush2.bf16.msra.mxu0 0
      %3991 = vmatprep.subr.bf16.mxu0 0
      %3992 = vmatpush2.bf16.msra.mxu0 0
      %3993 = vmatprep.subr.bf16.mxu0 0
      %3994 = vmatpush2.bf16.msra.mxu0 0
      %3995 = vmatprep.subr.bf16.mxu0 0
      %3996 = vmatpush2.bf16.msra.mxu0 0
      %3997 = vmatprep.subr.bf16.mxu0 0
      %3998 = vmatpush2.bf16.msra.mxu0 0
      %3999 = vmatprep.subr.bf16.mxu0 0
      %4000 = vmatpush2.bf16.msra.mxu0 0
      %4001 = vmatprep.subr.bf16.mxu0 %v3890
      %4002 = vmatpush2.bf16.msra.mxu0 %v3889
      %4003 = vmatprep.mubr.bf16.mxu0 %v3928
      %4004 = vmatmul.mubr.bf16.gmra.mxu0 %v3744
      %v4005 = vpop.f32.mrf.mxu0
      %v4006 = vadd.f32 %v3739, %v4005
      %v4007 = vpop.f32.mrf.mxu0
      %v4008 = vadd.f32 %v3739, %v4007
      %v4009 = vpop.f32.mrf.mxu0
      %v4010 = vpop.f32.mrf.mxu0
      %4011 = vdwg.mxu0
      %v4012 = vmax.f32 %v3965, 0.0
      %v4013 = vmax.f32 %v3967, 0.0
      %v4014 = vmax.f32 %v4006, 0.0
      %v4015 = vmax.f32 %v4008, 0.0
      %v4016 = vmin.f32 %v4012, 1.0
      %v4017 = vmin.f32 %v4013, 1.0
      %v4018 = vmin.f32 %v4014, 1.0
      %v4019 = vmin.f32 %v4015, 1.0
      %4020 = vst [vmem:[%s305] sm:$0xff] %v4016
      %4021 = vst [vmem:[%s305 + $0x8] sm:$0xff] %v4017
      %4022 = vst [vmem:[%s305 + $0x10] sm:$0xff] %v4018
      %4023 = vst [vmem:[%s305 + $0x18] sm:$0xff] %v4019
      %p4024 = scmp.lt.s32.totalorder %s19, 1
      %s4025 = scalar_select %p4024, %s19, 1
      %s4026 = smul.addr %s4025, 4
      %s4027 = smul.addr %s4026, 8
      %s4028 = scalar_lea.vmem %s8, %s4027
      // Predicated region
      $region53: #{espcn_forward.1} parent=51 // pred_check
        %p4029 = pneg %p210
      $region54: #{espcn_forward.1} parent=51 // pred_check_branch
        %4031 = sbr.rel (%p4029) target = $region56
      $region55: #{espcn_forward.1} parent=51 // pred_region
        _
      $region56: #{espcn_forward.1} parent=51 // pred_fallthru
        _
    $region52: #{espcn_forward.1} parent=5 // pred_fallthru
      _
    %p4032 = scmp.le.s32.totalorder 2, %s14
    // Predicated region
    $region57: #{espcn_forward.1} parent=5 // pred_check
      %p4033 = pneg %p4032
    $region58: #{espcn_forward.1} parent=5 // pred_check_branch
      %4035 = sbr.rel (%p4033) target = $region60
    $region59: #{espcn_forward.1} parent=5 // pred_region
      %s4036 = ssub.s32 %s14, 2
      // Predicated region
      $region61: #{espcn_forward.1} parent=59 // pred_check
        %p4037 = pneg %p216
      $region62: #{espcn_forward.1} parent=59 // pred_check_branch
        %4039 = sbr.rel (%p4037) target = $region64
      $region63: #{espcn_forward.1} parent=59 // pred_region
        %p4040 = scmp.lt.s32.totalorder %s20, 1
        %s4041 = scalar_select %p4040, %s20, 1
        %s4042 = smul.addr %s4041, 4
        %s4043 = smul.addr %s4042, 8
        %s4044 = scalar_lea.vmem %s8, %s4043
      $region64: #{espcn_forward.1} parent=59 // pred_fallthru
        _
    $region60: #{espcn_forward.1} parent=5 // pred_fallthru
      _
  $region6: #{espcn_forward.1} parent=0 // loop_footer
    %s18 = sadd.s32 1, %s14
  $region7: #{espcn_forward.1} parent=0 // loop_footer_branch
    %13 = sbr.rel target = $region3
  $region8: #{espcn_forward.1} parent=0 // loop_exit
    _

</llo_original>
